<compile_context>
chip_gen: v5e
topology: v5e:2x2
jax: 0.10.0
libtpu: 0.0.40
codegen_flags: <defaults>
</compile_context>

<pallas_src>
import functools

import jax
import jax.numpy as jnp
from jax import lax
from jax.experimental import pallas as pl
from jax.experimental.pallas import tpu as pltpu


_VMEM_LIMIT = 32 * 1024 * 1024   # explicit scoped-VMEM limit (v5e default is only 16 MiB)
_MAX_TILE_ROWS = 512             # row tile; comfortably inside VMEM on v5e/v6e/v7x


def _row_tiling(n_rows, max_tile=_MAX_TILE_ROWS):
    """Pick (n_par, n_seq, tile_rows) with n_par * n_seq * tile_rows == n_rows.

    tile_rows is a multiple of 16 (bf16 sublane packing) when possible; n_par=2
    lets the "parallel" grid axis split the row chunks across the two TensorCores
    of a v7x chip (no effect on single-TC v5e/v6e)."""
    tile = None
    for t in range(16, min(max_tile, n_rows) + 1, 16):
        if n_rows % t == 0:
            tile = t
    if tile is None:                       # tiny / oddly-sized N: one whole-array block
        return 1, 1, n_rows
    n_tiles = n_rows // tile
    if n_tiles % 2 == 0:
        return 2, n_tiles // 2, tile
    return 1, n_tiles, tile


# ---------------------------------------------------------------------------
# Kernel A: candidate statistics.  Per row tile:
#   h   = sigmoid(X @ W_random + b_random)        (never written to HBM)
#   eth += e^T h        [m, R]    (e stored transposed: et is [m, N])
#   hh  += sum(h*h, 0)  [1, R]
# ---------------------------------------------------------------------------
def _candidate_stats_kernel(x_ref, et_ref, w_ref, b_ref, eth_ref, hh_ref):
    z = jnp.dot(x_ref[...], w_ref[...], preferred_element_type=jnp.float32) + b_ref[...]
    h = 0.5 * jnp.tanh(0.5 * z) + 0.5                 # expit via one EUP tanh
    h_bf = h.astype(jnp.bfloat16)
    eth = jnp.dot(et_ref[...], h_bf, preferred_element_type=jnp.float32)   # [m, R]
    hh = jnp.sum(h * h, axis=0, keepdims=True)                             # [1, R]

    @pl.when(pl.program_id(1) == 0)                   # first tile of this row chunk
    def _():
        eth_ref[...] = jnp.zeros_like(eth_ref)
        hh_ref[...] = jnp.zeros_like(hh_ref)

    eth_ref[...] += eth[None]
    hh_ref[...] += hh[None]


def candidate_stats(x_bf, et_bf, w_rand_bf, b_rand):
    n, d = x_bf.shape
    m = et_bf.shape[0]
    r = w_rand_bf.shape[1]
    n_par, n_seq, tile = _row_tiling(n)

    flops = 2 * n * d * r + 2 * n * m * r + 6 * n * r
    bytes_accessed = (n * d + n * m + d * r) * 2 + r * 4 + n_par * (m + 1) * r * 4

    eth_p, hh_p = pl.pallas_call(
        _candidate_stats_kernel,
        grid=(n_par, n_seq),
        in_specs=[
            pl.BlockSpec((tile, d), lambda p, t: (p * n_seq + t, 0)),
            pl.BlockSpec((m, tile), lambda p, t: (0, p * n_seq + t)),
            pl.BlockSpec((d, r), lambda p, t: (0, 0)),
            pl.BlockSpec((1, r), lambda p, t: (0, 0)),
        ],
        out_specs=(
            pl.BlockSpec((1, m, r), lambda p, t: (p, 0, 0)),
            pl.BlockSpec((1, 1, r), lambda p, t: (p, 0, 0)),
        ),
        out_shape=(
            jax.ShapeDtypeStruct((n_par, m, r), jnp.float32),
            jax.ShapeDtypeStruct((n_par, 1, r), jnp.float32),
        ),
        compiler_params=pltpu.CompilerParams(
            dimension_semantics=("parallel", "arbitrary"),
            vmem_limit_bytes=_VMEM_LIMIT),
        cost_estimate=pl.CostEstimate(flops=flops, transcendentals=n * r,
                                      bytes_accessed=bytes_accessed),
    )(x_bf, et_bf, w_rand_bf, b_rand)
    return eth_p.sum(axis=0), hh_p.sum(axis=0)        # [m, R], [1, R]


# ---------------------------------------------------------------------------
# Kernel B: recompute only the winning column and its incremental Gram pieces.
#   h_k     = sigmoid(X @ w_best + b_best)            [N, 1]
#   g_cross = H^T h_k   (rows >= k of Ht are 0)       [Kmax]
#   g_diag  = h_k^T h_k                               scalar
#   p_row   = h_k^T Y                                 [m]
# H and Y are stored transposed (Ht: [Kmax, N], Yt: [m, N]) so every product is
# a canonical MXU matmul with h_k as the rhs vector.
# ---------------------------------------------------------------------------
def _winner_stats_kernel(x_ref, ht_ref, yt_ref, w_ref, b_ref,
                         hcol_ref, g_ref, dd_ref, p_ref):
    z = jnp.dot(x_ref[...], w_ref[...], preferred_element_type=jnp.float32) + b_ref[...]
    hk = 0.5 * jnp.tanh(0.5 * z) + 0.5                                # [tile, 1] f32
    hk_bf = hk.astype(jnp.bfloat16)
    hcol_ref[...] = hk_bf
    g = jnp.dot(ht_ref[...], hk_bf, preferred_element_type=jnp.float32)   # [Kmax, 1]
    p = jnp.dot(yt_ref[...], hk_bf, preferred_element_type=jnp.float32)   # [m, 1]
    dd = jnp.sum(hk * hk, axis=0, keepdims=True)                          # [1, 1]

    @pl.when(pl.program_id(1) == 0)
    def _():
        g_ref[...] = jnp.zeros_like(g_ref)
        dd_ref[...] = jnp.zeros_like(dd_ref)
        p_ref[...] = jnp.zeros_like(p_ref)

    g_ref[...] += g[None]
    dd_ref[...] += dd[None]
    p_ref[...] += p[None]


def winner_stats(x_bf, ht_bf, yt_bf, w_best_bf, b_best):
    n, d = x_bf.shape
    kmax = ht_bf.shape[0]
    m = yt_bf.shape[0]
    n_par, n_seq, tile = _row_tiling(n)

    hcol, g_p, dd_p, p_p = pl.pallas_call(
        _winner_stats_kernel,
        grid=(n_par, n_seq),
        in_specs=[
            pl.BlockSpec((tile, d), lambda p, t: (p * n_seq + t, 0)),
            pl.BlockSpec((kmax, tile), lambda p, t: (0, p * n_seq + t)),
            pl.BlockSpec((m, tile), lambda p, t: (0, p * n_seq + t)),
            pl.BlockSpec((d, 1), lambda p, t: (0, 0)),
            pl.BlockSpec((1, 1), lambda p, t: (0, 0)),
        ],
        out_specs=(
            pl.BlockSpec((tile, 1), lambda p, t: (p * n_seq + t, 0)),
            pl.BlockSpec((1, kmax, 1), lambda p, t: (p, 0, 0)),
            pl.BlockSpec((1, 1, 1), lambda p, t: (p, 0, 0)),
            pl.BlockSpec((1, m, 1), lambda p, t: (p, 0, 0)),
        ),
        out_shape=(
            jax.ShapeDtypeStruct((n, 1), jnp.bfloat16),
            jax.ShapeDtypeStruct((n_par, kmax, 1), jnp.float32),
            jax.ShapeDtypeStruct((n_par, 1, 1), jnp.float32),
            jax.ShapeDtypeStruct((n_par, m, 1), jnp.float32),
        ),
        compiler_params=pltpu.CompilerParams(
            dimension_semantics=("parallel", "arbitrary"),
            vmem_limit_bytes=_VMEM_LIMIT),
    )(x_bf, ht_bf, yt_bf, w_best_bf, b_best)
    return hcol, g_p.sum(axis=(0, 2)), dd_p.sum(), p_p.sum(axis=(0, 2))


# ---------------------------------------------------------------------------
# Kernel C: residual  e^T = Y^T - beta^T * H^T   (beta zero-padded past row k,
# Ht's unused rows are zero, so the padded GEMM equals torch's H[:, :k+1] @ beta).
# Output [m, tile] blocks are fully lane-dense.
# ---------------------------------------------------------------------------
def _residual_kernel(ht_ref, yt_ref, beta_ref, et_ref):
    yhat_t = lax.dot_general(beta_ref[...].astype(jnp.bfloat16), ht_ref[...],
                             (((0,), (0,)), ((), ())),
                             preferred_element_type=jnp.float32)      # [m, tile]
    et_ref[...] = (yt_ref[...] - yhat_t).astype(jnp.bfloat16)


def residual(ht_bf, yt_f32, beta):
    kmax, n = ht_bf.shape
    m = yt_f32.shape[0]
    n_par, n_seq, tile = _row_tiling(n)
    n_tiles = n_par * n_seq
    return pl.pallas_call(
        _residual_kernel,
        grid=(n_tiles,),
        in_specs=[
            pl.BlockSpec((kmax, tile), lambda i: (0, i)),
            pl.BlockSpec((m, tile), lambda i: (0, i)),
            pl.BlockSpec((kmax, m), lambda i: (0, 0)),
        ],
        out_specs=pl.BlockSpec((m, tile), lambda i: (0, i)),
        out_shape=jax.ShapeDtypeStruct((m, n), jnp.bfloat16),
        compiler_params=pltpu.CompilerParams(
            dimension_semantics=("parallel",),
            vmem_limit_bytes=_VMEM_LIMIT),
    )(ht_bf, yt_f32, beta)


# ---------------------------------------------------------------------------
# SCN training loop: one jit, lax.fori_loop over neurons, three Pallas kernels
# per iteration plus tiny O(Kmax^2) JAX glue (RNG, argmax, bordered Gram update,
# small SPD solve).
# ---------------------------------------------------------------------------
@functools.partial(jax.jit, static_argnames=("lambdas", "max_neurons", "reconfig_number"))
def scn_train(x, y, *, lambdas, max_neurons, reconfig_number, key):
    n, d = x.shape
    m = y.shape[1]
    n_lam = len(lambdas)
    r = n_lam * reconfig_number
    kmax = max_neurons
    lam = jnp.asarray(lambdas, jnp.float32)

    x_bf = x.astype(jnp.bfloat16)
    yt_f32 = y.T                              # [m, N]
    yt_bf = yt_f32.astype(jnp.bfloat16)

    state = dict(
        Ht=jnp.zeros((kmax, n), jnp.bfloat16),   # hidden outputs (transposed); rows > k stay 0
        W=jnp.zeros((d, kmax), jnp.float32),
        b=jnp.zeros((kmax,), jnp.float32),
        G=jnp.eye(kmax, dtype=jnp.float32),      # padded Gram (identity on unused diagonal)
        P=jnp.zeros((kmax, m), jnp.float32),     # padded H^T Y
        beta=jnp.zeros((kmax, m), jnp.float32),
        et=yt_bf,                                # residual (transposed), e = Y initially
    )

    def step(k, st):
        # --- random candidate pool (same hstack-by-lambda ordering as torch) ---
        kkey = jax.random.fold_in(key, k)
        k_w, k_b = jax.random.split(kkey)
        u_w = 2.0 * jax.random.uniform(k_w, (d, n_lam, reconfig_number), jnp.float32) - 1.0
        u_b = 2.0 * jax.random.uniform(k_b, (1, n_lam, reconfig_number), jnp.float32) - 1.0
        w_rand = (u_w * lam[None, :, None]).reshape(d, r)
        b_rand = (u_b * lam[None, :, None]).reshape(1, r)
        w_rand_bf = w_rand.astype(jnp.bfloat16)

        # --- candidate scoring (Kernel A): the [N, R] activations never hit HBM ---
        eth, hh = candidate_stats(x_bf, st["et"], w_rand_bf, b_rand)
        v_mean = jnp.mean(eth * eth, axis=0) / (hh[0] + 1e-12)   # eps guards 0-denominator
        best = jnp.argmax(v_mean)

        w_best_bf = lax.dynamic_slice_in_dim(w_rand_bf, best, 1, axis=1)   # [d, 1]
        b_best = lax.dynamic_slice_in_dim(b_rand, best, 1, axis=1)         # [1, 1]

        # --- winning column + incremental Gram pieces (Kernel B) ---
        hcol, g_cross, g_diag, p_row = winner_stats(x_bf, st["Ht"], yt_bf, w_best_bf, b_best)
        ht_new = lax.dynamic_update_slice(st["Ht"], hcol.reshape(1, n), (k, 0))

        # Bordered (incremental) Gram / projection update; no full H^T H recompute.
        ek = jax.nn.one_hot(k, kmax, dtype=jnp.float32)
        g_diag = g_diag * (1.0 + 1e-6)           # tiny relative ridge for f32 conditioning
        g_new = (st["G"] + jnp.outer(ek, g_cross) + jnp.outer(g_cross, ek)
                 + jnp.outer(ek, ek) * (g_diag - 1.0))
        p_new = st["P"] + jnp.outer(ek, p_row)
        # Small (Kmax x Kmax) SPD system: solve, never an explicit inverse.
        beta = jnp.linalg.solve(g_new, p_new)

        # --- residual e^T = Y^T - beta^T * H^T (Kernel C) ---
        et_new = residual(ht_new, yt_f32, beta)
        # TODO(synk): reference prints (k, rmse) each iteration; omitted inside the fused loop.

        w_out = lax.dynamic_update_slice(
            st["W"], lax.dynamic_slice_in_dim(w_rand, best, 1, axis=1), (0, k))
        b_out = lax.dynamic_update_slice(
            st["b"], lax.dynamic_slice_in_dim(b_rand[0], best, 1, axis=0), (k,))

        return dict(Ht=ht_new, W=w_out, b=b_out, G=g_new, P=p_new, beta=beta, et=et_new)

    state = lax.fori_loop(0, max_neurons, step, state)
    return state["W"], state["b"], state["beta"]


if __name__ == "__main__":
    root = jax.random.PRNGKey(0)
    kx, ky, kt = jax.random.split(root, 3)

    # Small synthetic stand-in for the MNIST-style inputs of the reference module.
    n, d, m = 1024, 16, 8
    lambdas = (0.5, 1.0)
    max_neurons = 6
    reconfig_number = 128            # R = 2 * 128 = 256 candidates/sweep -> fills 2x256 MXU

    x = jax.random.normal(kx, (n, d), jnp.float32)
    labels = jax.random.randint(ky, (n,), 0, m)
    y = jax.nn.one_hot(labels, m, dtype=jnp.float32)     # Tt (targets)

    w, b, beta = scn_train(x, y, lambdas=lambdas, max_neurons=max_neurons,
                           reconfig_number=reconfig_number, key=kt)
    jax.block_until_ready((w, b, beta))

    assert w.shape == (d, max_neurons)
    assert b.shape == (max_neurons,)
    assert beta.shape == (max_neurons, m)
    assert bool(jnp.all(jnp.isfinite(w)))
    assert bool(jnp.all(jnp.isfinite(beta)))
    print("KERNEL_OK")
</pallas_src>

<mosaic_0001>
module attributes {stable_mosaic.version = 11 : i64} {
  func.func @_candidate_stats_kernel(%arg0: i32, %arg1: i32, %arg2: memref<512x16xbf16, #tpu.memory_space<vmem>>, %arg3: memref<8x512xbf16, #tpu.memory_space<vmem>>, %arg4: memref<16x256xbf16, #tpu.memory_space<vmem>>, %arg5: memref<1x256xf32, #tpu.memory_space<vmem>>, %arg6: memref<1x8x256xf32, #tpu.memory_space<vmem>>, %arg7: memref<1x1x256xf32, #tpu.memory_space<vmem>>) attributes {dimension_semantics = [#tpu.dimension_semantics<parallel>, #tpu.dimension_semantics<arbitrary>], iteration_bounds = array<i64: 2, 1>, scalar_prefetch = 0 : i64, scratch_operands = 0 : i64, tpu.core_type = #tpu.core_type<tc>, window_params = [{transform_indices = @transform_0, window_bounds = array<i64: 512, 16>}, {transform_indices = @transform_1, window_bounds = array<i64: 8, 512>}, {pipeline_mode = #tpu.pipeline_mode<synchronous>, transform_indices = @transform_2, window_bounds = array<i64: 16, 256>}, {pipeline_mode = #tpu.pipeline_mode<synchronous>, transform_indices = @transform_3, window_bounds = array<i64: 1, 256>}, {transform_indices = @transform_4, window_bounds = array<i64: 1, 8, 256>}, {transform_indices = @transform_5, window_bounds = array<i64: 1, 1, 256>}]} {
    %c0 = arith.constant 0 : index
    %c0_0 = arith.constant 0 : index
    %0 = vector.load %arg2[%c0, %c0_0] : memref<512x16xbf16, #tpu.memory_space<vmem>>, vector<512x16xbf16>
    %c0_1 = arith.constant 0 : index
    %c0_2 = arith.constant 0 : index
    %1 = vector.load %arg4[%c0_1, %c0_2] : memref<16x256xbf16, #tpu.memory_space<vmem>>, vector<16x256xbf16>
    %cst = arith.constant dense<0.000000e+00> : vector<512x256xf32>
    %2 = tpu.matmul %0, %1, %cst {dimension_numbers = #tpu.dot_dimension_numbers<[1], [0], [0], [1], [0, 0, 1, 1], [], []>} : vector<512x16xbf16>, vector<16x256xbf16>, vector<512x256xf32> -> vector<512x256xf32>
    %c0_3 = arith.constant 0 : index
    %c0_4 = arith.constant 0 : index
    %3 = vector.load %arg5[%c0_3, %c0_4] : memref<1x256xf32, #tpu.memory_space<vmem>>, vector<1x256xf32>
    %4 = vector.broadcast %3 : vector<1x256xf32> to vector<512x256xf32>
    %5 = arith.addf %2, %4 : vector<512x256xf32>
    %cst_5 = arith.constant 5.000000e-01 : f32
    %6 = vector.broadcast %cst_5 : f32 to vector<512x256xf32>
    %7 = arith.mulf %6, %5 : vector<512x256xf32>
    %8 = math.tanh %7 : vector<512x256xf32>
    %cst_6 = arith.constant 5.000000e-01 : f32
    %9 = vector.broadcast %cst_6 : f32 to vector<512x256xf32>
    %10 = arith.mulf %9, %8 : vector<512x256xf32>
    %cst_7 = arith.constant 5.000000e-01 : f32
    %11 = vector.broadcast %cst_7 : f32 to vector<512x256xf32>
    %12 = arith.addf %10, %11 : vector<512x256xf32>
    %13 = arith.truncf %12 : vector<512x256xf32> to vector<512x256xbf16>
    %c0_8 = arith.constant 0 : index
    %c0_9 = arith.constant 0 : index
    %14 = vector.load %arg3[%c0_8, %c0_9] : memref<8x512xbf16, #tpu.memory_space<vmem>>, vector<8x512xbf16>
    %cst_10 = arith.constant dense<0.000000e+00> : vector<8x256xf32>
    %15 = tpu.matmul %14, %13, %cst_10 {dimension_numbers = #tpu.dot_dimension_numbers<[1], [0], [0], [1], [0, 0, 1, 1], [], []>} : vector<8x512xbf16>, vector<512x256xbf16>, vector<8x256xf32> -> vector<8x256xf32>
    %16 = arith.mulf %12, %12 : vector<512x256xf32>
    %cst_11 = arith.constant dense<0.000000e+00> : vector<256xf32>
    %17 = vector.multi_reduction <add>, %16, %cst_11 [0] : vector<512x256xf32> to vector<256xf32>
    %18 = vector.shape_cast %17 : vector<256xf32> to vector<1x256xf32>
    %c0_i32 = arith.constant 0 : i32
    %19 = arith.cmpi eq, %arg1, %c0_i32 : i32
    %20 = arith.extui %19 : i1 to i32
    %c0_i32_12 = arith.constant 0 : i32
    %21 = arith.cmpi ne, %20, %c0_i32_12 : i32
    scf.if %21 {
      %cst_25 = arith.constant 0.000000e+00 : f32
      %30 = vector.broadcast %cst_25 : f32 to vector<1x8x256xf32>
      %c0_26 = arith.constant 0 : index
      %c0_27 = arith.constant 0 : index
      %c0_28 = arith.constant 0 : index
      %31 = vector.load %arg6[%c0_26, %c0_27, %c0_28] : memref<1x8x256xf32, #tpu.memory_space<vmem>>, vector<1x8x256xf32>
      tpu.vector_store %arg6[%c0_26, %c0_27, %c0_28], %30 {strides = array<i32>} : memref<1x8x256xf32, #tpu.memory_space<vmem>>, vector<1x8x256xf32>,
      %cst_29 = arith.constant 0.000000e+00 : f32
      %32 = vector.broadcast %cst_29 : f32 to vector<1x1x256xf32>
      %c0_30 = arith.constant 0 : index
      %c0_31 = arith.constant 0 : index
      %c0_32 = arith.constant 0 : index
      %33 = vector.load %arg7[%c0_30, %c0_31, %c0_32] : memref<1x1x256xf32, #tpu.memory_space<vmem>>, vector<1x1x256xf32>
      tpu.vector_store %arg7[%c0_30, %c0_31, %c0_32], %32 {strides = array<i32>} : memref<1x1x256xf32, #tpu.memory_space<vmem>>, vector<1x1x256xf32>,
    } else {
    }
    %c0_13 = arith.constant 0 : index
    %c0_14 = arith.constant 0 : index
    %c0_15 = arith.constant 0 : index
    %22 = vector.load %arg6[%c0_13, %c0_14, %c0_15] : memref<1x8x256xf32, #tpu.memory_space<vmem>>, vector<1x8x256xf32>
    %23 = vector.shape_cast %15 : vector<8x256xf32> to vector<1x8x256xf32>
    %24 = arith.addf %22, %23 : vector<1x8x256xf32>
    %c0_16 = arith.constant 0 : index
    %c0_17 = arith.constant 0 : index
    %c0_18 = arith.constant 0 : index
    %25 = vector.load %arg6[%c0_16, %c0_17, %c0_18] : memref<1x8x256xf32, #tpu.memory_space<vmem>>, vector<1x8x256xf32>
    tpu.vector_store %arg6[%c0_16, %c0_17, %c0_18], %24 {strides = array<i32>} : memref<1x8x256xf32, #tpu.memory_space<vmem>>, vector<1x8x256xf32>,
    %c0_19 = arith.constant 0 : index
    %c0_20 = arith.constant 0 : index
    %c0_21 = arith.constant 0 : index
    %26 = vector.load %arg7[%c0_19, %c0_20, %c0_21] : memref<1x1x256xf32, #tpu.memory_space<vmem>>, vector<1x1x256xf32>
    %27 = vector.shape_cast %18 : vector<1x256xf32> to vector<1x1x256xf32>
    %28 = arith.addf %26, %27 : vector<1x1x256xf32>
    %c0_22 = arith.constant 0 : index
    %c0_23 = arith.constant 0 : index
    %c0_24 = arith.constant 0 : index
    %29 = vector.load %arg7[%c0_22, %c0_23, %c0_24] : memref<1x1x256xf32, #tpu.memory_space<vmem>>, vector<1x1x256xf32>
    tpu.vector_store %arg7[%c0_22, %c0_23, %c0_24], %28 {strides = array<i32>} : memref<1x1x256xf32, #tpu.memory_space<vmem>>, vector<1x1x256xf32>,
    return
  }
  func.func @transform_0(%arg0: i32, %arg1: i32) -> (i32, i32) {
    %c1_i32 = arith.constant 1 : i32
    %0 = arith.muli %arg0, %c1_i32 : i32
    %1 = arith.addi %0, %arg1 : i32
    %c0_i32 = arith.constant 0 : i32
    %c0_i32_0 = arith.constant 0 : i32
    return %1, %c0_i32 : i32, i32
  }
  func.func @transform_1(%arg0: i32, %arg1: i32) -> (i32, i32) {
    %c1_i32 = arith.constant 1 : i32
    %0 = arith.muli %arg0, %c1_i32 : i32
    %1 = arith.addi %0, %arg1 : i32
    %c0_i32 = arith.constant 0 : i32
    %c0_i32_0 = arith.constant 0 : i32
    return %c0_i32, %1 : i32, i32
  }
  func.func @transform_2(%arg0: i32, %arg1: i32) -> (i32, i32) {
    %c0_i32 = arith.constant 0 : i32
    %c0_i32_0 = arith.constant 0 : i32
    %c0_i32_1 = arith.constant 0 : i32
    return %c0_i32, %c0_i32_0 : i32, i32
  }
  func.func @transform_3(%arg0: i32, %arg1: i32) -> (i32, i32) {
    %c0_i32 = arith.constant 0 : i32
    %c0_i32_0 = arith.constant 0 : i32
    %c0_i32_1 = arith.constant 0 : i32
    return %c0_i32, %c0_i32_0 : i32, i32
  }
  func.func @transform_4(%arg0: i32, %arg1: i32) -> (i32, i32, i32) {
    %c0_i32 = arith.constant 0 : i32
    %c0_i32_0 = arith.constant 0 : i32
    %c0_i32_1 = arith.constant 0 : i32
    return %arg0, %c0_i32, %c0_i32_0 : i32, i32, i32
  }
  func.func @transform_5(%arg0: i32, %arg1: i32) -> (i32, i32, i32) {
    %c0_i32 = arith.constant 0 : i32
    %c0_i32_0 = arith.constant 0 : i32
    %c0_i32_1 = arith.constant 0 : i32
    return %arg0, %c0_i32, %c0_i32_0 : i32, i32, i32
  }
}

module attributes {stable_mosaic.version = 11 : i64} {
  func.func @_winner_stats_kernel(%arg0: i32, %arg1: i32, %arg2: memref<512x16xbf16, #tpu.memory_space<vmem>>, %arg3: memref<6x512xbf16, #tpu.memory_space<vmem>>, %arg4: memref<8x512xbf16, #tpu.memory_space<vmem>>, %arg5: memref<16x1xbf16, #tpu.memory_space<vmem>>, %arg6: memref<1x1xf32, #tpu.memory_space<vmem>>, %arg7: memref<512x1xbf16, #tpu.memory_space<vmem>>, %arg8: memref<1x6x1xf32, #tpu.memory_space<vmem>>, %arg9: memref<1x1x1xf32, #tpu.memory_space<vmem>>, %arg10: memref<1x8x1xf32, #tpu.memory_space<vmem>>) attributes {dimension_semantics = [#tpu.dimension_semantics<parallel>, #tpu.dimension_semantics<arbitrary>], iteration_bounds = array<i64: 2, 1>, scalar_prefetch = 0 : i64, scratch_operands = 0 : i64, tpu.core_type = #tpu.core_type<tc>, window_params = [{transform_indices = @transform_0, window_bounds = array<i64: 512, 16>}, {transform_indices = @transform_1, window_bounds = array<i64: 6, 512>}, {transform_indices = @transform_2, window_bounds = array<i64: 8, 512>}, {pipeline_mode = #tpu.pipeline_mode<synchronous>, transform_indices = @transform_3, window_bounds = array<i64: 16, 1>}, {pipeline_mode = #tpu.pipeline_mode<synchronous>, transform_indices = @transform_4, window_bounds = array<i64: 1, 1>}, {transform_indices = @transform_5, window_bounds = array<i64: 512, 1>}, {transform_indices = @transform_6, window_bounds = array<i64: 1, 6, 1>}, {transform_indices = @transform_7, window_bounds = array<i64: 1, 1, 1>}, {transform_indices = @transform_8, window_bounds = array<i64: 1, 8, 1>}]} {
    %c0 = arith.constant 0 : index
    %c0_0 = arith.constant 0 : index
    %0 = vector.load %arg2[%c0, %c0_0] : memref<512x16xbf16, #tpu.memory_space<vmem>>, vector<512x16xbf16>
    %c0_1 = arith.constant 0 : index
    %c0_2 = arith.constant 0 : index
    %1 = vector.load %arg5[%c0_1, %c0_2] : memref<16x1xbf16, #tpu.memory_space<vmem>>, vector<16x1xbf16>
    %cst = arith.constant dense<0.000000e+00> : vector<512x1xf32>
    %2 = tpu.matmul %0, %1, %cst {dimension_numbers = #tpu.dot_dimension_numbers<[1], [0], [0], [1], [0, 0, 1, 1], [], []>} : vector<512x16xbf16>, vector<16x1xbf16>, vector<512x1xf32> -> vector<512x1xf32>
    %c0_3 = arith.constant 0 : index
    %c0_4 = arith.constant 0 : index
    %3 = vector.load %arg6[%c0_3, %c0_4] : memref<1x1xf32, #tpu.memory_space<vmem>>, vector<1x1xf32>
    %4 = vector.broadcast %3 : vector<1x1xf32> to vector<512x1xf32>
    %5 = arith.addf %2, %4 : vector<512x1xf32>
    %cst_5 = arith.constant 5.000000e-01 : f32
    %6 = vector.broadcast %cst_5 : f32 to vector<512x1xf32>
    %7 = arith.mulf %6, %5 : vector<512x1xf32>
    %8 = math.tanh %7 : vector<512x1xf32>
    %cst_6 = arith.constant 5.000000e-01 : f32
    %9 = vector.broadcast %cst_6 : f32 to vector<512x1xf32>
    %10 = arith.mulf %9, %8 : vector<512x1xf32>
    %cst_7 = arith.constant 5.000000e-01 : f32
    %11 = vector.broadcast %cst_7 : f32 to vector<512x1xf32>
    %12 = arith.addf %10, %11 : vector<512x1xf32>
    %13 = arith.truncf %12 : vector<512x1xf32> to vector<512x1xbf16>
    %c0_8 = arith.constant 0 : index
    %c0_9 = arith.constant 0 : index
    %14 = vector.load %arg7[%c0_8, %c0_9] : memref<512x1xbf16, #tpu.memory_space<vmem>>, vector<512x1xbf16>
    tpu.vector_store %arg7[%c0_8, %c0_9], %13 {strides = array<i32>} : memref<512x1xbf16, #tpu.memory_space<vmem>>, vector<512x1xbf16>,
    %c0_10 = arith.constant 0 : index
    %c0_11 = arith.constant 0 : index
    %15 = vector.load %arg3[%c0_10, %c0_11] : memref<6x512xbf16, #tpu.memory_space<vmem>>, vector<6x512xbf16>
    %cst_12 = arith.constant dense<0.000000e+00> : vector<6x1xf32>
    %16 = tpu.matmul %15, %13, %cst_12 {dimension_numbers = #tpu.dot_dimension_numbers<[1], [0], [0], [1], [0, 0, 1, 1], [], []>} : vector<6x512xbf16>, vector<512x1xbf16>, vector<6x1xf32> -> vector<6x1xf32>
    %c0_13 = arith.constant 0 : index
    %c0_14 = arith.constant 0 : index
    %17 = vector.load %arg4[%c0_13, %c0_14] : memref<8x512xbf16, #tpu.memory_space<vmem>>, vector<8x512xbf16>
    %cst_15 = arith.constant dense<0.000000e+00> : vector<8x1xf32>
    %18 = tpu.matmul %17, %13, %cst_15 {dimension_numbers = #tpu.dot_dimension_numbers<[1], [0], [0], [1], [0, 0, 1, 1], [], []>} : vector<8x512xbf16>, vector<512x1xbf16>, vector<8x1xf32> -> vector<8x1xf32>
    %19 = arith.mulf %12, %12 : vector<512x1xf32>
    %cst_16 = arith.constant dense<0.000000e+00> : vector<1xf32>
    %20 = vector.multi_reduction <add>, %19, %cst_16 [0] : vector<512x1xf32> to vector<1xf32>
    %21 = vector.shape_cast %20 : vector<1xf32> to vector<1x1xf32>
    %c0_i32 = arith.constant 0 : i32
    %22 = arith.cmpi eq, %arg1, %c0_i32 : i32
    %23 = arith.extui %22 : i1 to i32
    %c0_i32_17 = arith.constant 0 : i32
    %24 = arith.cmpi ne, %23, %c0_i32_17 : i32
    scf.if %24 {
      %cst_36 = arith.constant 0.000000e+00 : f32
      %37 = vector.broadcast %cst_36 : f32 to vector<1x6x1xf32>
      %c0_37 = arith.constant 0 : index
      %c0_38 = arith.constant 0 : index
      %c0_39 = arith.constant 0 : index
      %38 = vector.load %arg8[%c0_37, %c0_38, %c0_39] : memref<1x6x1xf32, #tpu.memory_space<vmem>>, vector<1x6x1xf32>
      tpu.vector_store %arg8[%c0_37, %c0_38, %c0_39], %37 {strides = array<i32>} : memref<1x6x1xf32, #tpu.memory_space<vmem>>, vector<1x6x1xf32>,
      %cst_40 = arith.constant 0.000000e+00 : f32
      %39 = vector.broadcast %cst_40 : f32 to vector<1x1x1xf32>
      %c0_41 = arith.constant 0 : index
      %c0_42 = arith.constant 0 : index
      %c0_43 = arith.constant 0 : index
      %40 = vector.load %arg9[%c0_41, %c0_42, %c0_43] : memref<1x1x1xf32, #tpu.memory_space<vmem>>, vector<1x1x1xf32>
      tpu.vector_store %arg9[%c0_41, %c0_42, %c0_43], %39 {strides = array<i32>} : memref<1x1x1xf32, #tpu.memory_space<vmem>>, vector<1x1x1xf32>,
      %cst_44 = arith.constant 0.000000e+00 : f32
      %41 = vector.broadcast %cst_44 : f32 to vector<1x8x1xf32>
      %c0_45 = arith.constant 0 : index
      %c0_46 = arith.constant 0 : index
      %c0_47 = arith.constant 0 : index
      %42 = vector.load %arg10[%c0_45, %c0_46, %c0_47] : memref<1x8x1xf32, #tpu.memory_space<vmem>>, vector<1x8x1xf32>
      tpu.vector_store %arg10[%c0_45, %c0_46, %c0_47], %41 {strides = array<i32>} : memref<1x8x1xf32, #tpu.memory_space<vmem>>, vector<1x8x1xf32>,
    } else {
    }
    %c0_18 = arith.constant 0 : index
    %c0_19 = arith.constant 0 : index
    %c0_20 = arith.constant 0 : index
    %25 = vector.load %arg8[%c0_18, %c0_19, %c0_20] : memref<1x6x1xf32, #tpu.memory_space<vmem>>, vector<1x6x1xf32>
    %26 = vector.shape_cast %16 : vector<6x1xf32> to vector<1x6x1xf32>
    %27 = arith.addf %25, %26 : vector<1x6x1xf32>
    %c0_21 = arith.constant 0 : index
    %c0_22 = arith.constant 0 : index
    %c0_23 = arith.constant 0 : index
    %28 = vector.load %arg8[%c0_21, %c0_22, %c0_23] : memref<1x6x1xf32, #tpu.memory_space<vmem>>, vector<1x6x1xf32>
    tpu.vector_store %arg8[%c0_21, %c0_22, %c0_23], %27 {strides = array<i32>} : memref<1x6x1xf32, #tpu.memory_space<vmem>>, vector<1x6x1xf32>,
    %c0_24 = arith.constant 0 : index
    %c0_25 = arith.constant 0 : index
    %c0_26 = arith.constant 0 : index
    %29 = vector.load %arg9[%c0_24, %c0_25, %c0_26] : memref<1x1x1xf32, #tpu.memory_space<vmem>>, vector<1x1x1xf32>
    %30 = vector.shape_cast %21 : vector<1x1xf32> to vector<1x1x1xf32>
    %31 = arith.addf %29, %30 : vector<1x1x1xf32>
    %c0_27 = arith.constant 0 : index
    %c0_28 = arith.constant 0 : index
    %c0_29 = arith.constant 0 : index
    %32 = vector.load %arg9[%c0_27, %c0_28, %c0_29] : memref<1x1x1xf32, #tpu.memory_space<vmem>>, vector<1x1x1xf32>
    tpu.vector_store %arg9[%c0_27, %c0_28, %c0_29], %31 {strides = array<i32>} : memref<1x1x1xf32, #tpu.memory_space<vmem>>, vector<1x1x1xf32>,
    %c0_30 = arith.constant 0 : index
    %c0_31 = arith.constant 0 : index
    %c0_32 = arith.constant 0 : index
    %33 = vector.load %arg10[%c0_30, %c0_31, %c0_32] : memref<1x8x1xf32, #tpu.memory_space<vmem>>, vector<1x8x1xf32>
    %34 = vector.shape_cast %18 : vector<8x1xf32> to vector<1x8x1xf32>
    %35 = arith.addf %33, %34 : vector<1x8x1xf32>
    %c0_33 = arith.constant 0 : index
    %c0_34 = arith.constant 0 : index
    %c0_35 = arith.constant 0 : index
    %36 = vector.load %arg10[%c0_33, %c0_34, %c0_35] : memref<1x8x1xf32, #tpu.memory_space<vmem>>, vector<1x8x1xf32>
    tpu.vector_store %arg10[%c0_33, %c0_34, %c0_35], %35 {strides = array<i32>} : memref<1x8x1xf32, #tpu.memory_space<vmem>>, vector<1x8x1xf32>,
    return
  }
  func.func @transform_0(%arg0: i32, %arg1: i32) -> (i32, i32) {
    %c1_i32 = arith.constant 1 : i32
    %0 = arith.muli %arg0, %c1_i32 : i32
    %1 = arith.addi %0, %arg1 : i32
    %c0_i32 = arith.constant 0 : i32
    %c0_i32_0 = arith.constant 0 : i32
    return %1, %c0_i32 : i32, i32
  }
  func.func @transform_1(%arg0: i32, %arg1: i32) -> (i32, i32) {
    %c1_i32 = arith.constant 1 : i32
    %0 = arith.muli %arg0, %c1_i32 : i32
    %1 = arith.addi %0, %arg1 : i32
    %c0_i32 = arith.constant 0 : i32
    %c0_i32_0 = arith.constant 0 : i32
    return %c0_i32, %1 : i32, i32
  }
  func.func @transform_2(%arg0: i32, %arg1: i32) -> (i32, i32) {
    %c1_i32 = arith.constant 1 : i32
    %0 = arith.muli %arg0, %c1_i32 : i32
    %1 = arith.addi %0, %arg1 : i32
    %c0_i32 = arith.constant 0 : i32
    %c0_i32_0 = arith.constant 0 : i32
    return %c0_i32, %1 : i32, i32
  }
  func.func @transform_3(%arg0: i32, %arg1: i32) -> (i32, i32) {
    %c0_i32 = arith.constant 0 : i32
    %c0_i32_0 = arith.constant 0 : i32
    %c0_i32_1 = arith.constant 0 : i32
    return %c0_i32, %c0_i32_0 : i32, i32
  }
  func.func @transform_4(%arg0: i32, %arg1: i32) -> (i32, i32) {
    %c0_i32 = arith.constant 0 : i32
    %c0_i32_0 = arith.constant 0 : i32
    %c0_i32_1 = arith.constant 0 : i32
    return %c0_i32, %c0_i32_0 : i32, i32
  }
  func.func @transform_5(%arg0: i32, %arg1: i32) -> (i32, i32) {
    %c1_i32 = arith.constant 1 : i32
    %0 = arith.muli %arg0, %c1_i32 : i32
    %1 = arith.addi %0, %arg1 : i32
    %c0_i32 = arith.constant 0 : i32
    %c0_i32_0 = arith.constant 0 : i32
    return %1, %c0_i32 : i32, i32
  }
  func.func @transform_6(%arg0: i32, %arg1: i32) -> (i32, i32, i32) {
    %c0_i32 = arith.constant 0 : i32
    %c0_i32_0 = arith.constant 0 : i32
    %c0_i32_1 = arith.constant 0 : i32
    return %arg0, %c0_i32, %c0_i32_0 : i32, i32, i32
  }
  func.func @transform_7(%arg0: i32, %arg1: i32) -> (i32, i32, i32) {
    %c0_i32 = arith.constant 0 : i32
    %c0_i32_0 = arith.constant 0 : i32
    %c0_i32_1 = arith.constant 0 : i32
    return %arg0, %c0_i32, %c0_i32_0 : i32, i32, i32
  }
  func.func @transform_8(%arg0: i32, %arg1: i32) -> (i32, i32, i32) {
    %c0_i32 = arith.constant 0 : i32
    %c0_i32_0 = arith.constant 0 : i32
    %c0_i32_1 = arith.constant 0 : i32
    return %arg0, %c0_i32, %c0_i32_0 : i32, i32, i32
  }
}

module attributes {stable_mosaic.version = 11 : i64} {
  func.func @_residual_kernel(%arg0: i32, %arg1: memref<6x512xbf16, #tpu.memory_space<vmem>>, %arg2: memref<8x512xf32, #tpu.memory_space<vmem>>, %arg3: memref<6x8xf32, #tpu.memory_space<vmem>>, %arg4: memref<8x512xbf16, #tpu.memory_space<vmem>>) attributes {dimension_semantics = [#tpu.dimension_semantics<parallel>], iteration_bounds = array<i64: 2>, scalar_prefetch = 0 : i64, scratch_operands = 0 : i64, tpu.core_type = #tpu.core_type<tc>, window_params = [{transform_indices = @transform_0, window_bounds = array<i64: 6, 512>}, {transform_indices = @transform_1, window_bounds = array<i64: 8, 512>}, {pipeline_mode = #tpu.pipeline_mode<synchronous>, transform_indices = @transform_2, window_bounds = array<i64: 6, 8>}, {transform_indices = @transform_3, window_bounds = array<i64: 8, 512>}]} {
    %c0 = arith.constant 0 : index
    %c0_0 = arith.constant 0 : index
    %0 = vector.load %arg3[%c0, %c0_0] : memref<6x8xf32, #tpu.memory_space<vmem>>, vector<6x8xf32>
    %1 = arith.truncf %0 : vector<6x8xf32> to vector<6x8xbf16>
    %c0_1 = arith.constant 0 : index
    %c0_2 = arith.constant 0 : index
    %2 = vector.load %arg1[%c0_1, %c0_2] : memref<6x512xbf16, #tpu.memory_space<vmem>>, vector<6x512xbf16>
    %cst = arith.constant dense<0.000000e+00> : vector<8x512xf32>
    %3 = tpu.matmul %1, %2, %cst {dimension_numbers = #tpu.dot_dimension_numbers<[0], [0], [1], [1], [0, 1, 1, 1], [], []>} : vector<6x8xbf16>, vector<6x512xbf16>, vector<8x512xf32> -> vector<8x512xf32>
    %c0_3 = arith.constant 0 : index
    %c0_4 = arith.constant 0 : index
    %4 = vector.load %arg2[%c0_3, %c0_4] : memref<8x512xf32, #tpu.memory_space<vmem>>, vector<8x512xf32>
    %5 = arith.subf %4, %3 : vector<8x512xf32>
    %6 = arith.truncf %5 : vector<8x512xf32> to vector<8x512xbf16>
    %c0_5 = arith.constant 0 : index
    %c0_6 = arith.constant 0 : index
    %7 = vector.load %arg4[%c0_5, %c0_6] : memref<8x512xbf16, #tpu.memory_space<vmem>>, vector<8x512xbf16>
    tpu.vector_store %arg4[%c0_5, %c0_6], %6 {strides = array<i32>} : memref<8x512xbf16, #tpu.memory_space<vmem>>, vector<8x512xbf16>,
    return
  }
  func.func @transform_0(%arg0: i32) -> (i32, i32) {
    %c0_i32 = arith.constant 0 : i32
    %c0_i32_0 = arith.constant 0 : i32
    return %c0_i32, %arg0 : i32, i32
  }
  func.func @transform_1(%arg0: i32) -> (i32, i32) {
    %c0_i32 = arith.constant 0 : i32
    %c0_i32_0 = arith.constant 0 : i32
    return %c0_i32, %arg0 : i32, i32
  }
  func.func @transform_2(%arg0: i32) -> (i32, i32) {
    %c0_i32 = arith.constant 0 : i32
    %c0_i32_0 = arith.constant 0 : i32
    %c0_i32_1 = arith.constant 0 : i32
    return %c0_i32, %c0_i32_0 : i32, i32
  }
  func.func @transform_3(%arg0: i32) -> (i32, i32) {
    %c0_i32 = arith.constant 0 : i32
    %c0_i32_0 = arith.constant 0 : i32
    return %c0_i32, %arg0 : i32, i32
  }
}

</mosaic_0001>

<llo_original>
// kernel: custom-call.36
$region0: #{custom-call.36}
  %s0 = inlined_call_operand.vmem [shape: f32[6], index: 0, kind: output, shape index: {}]

// kernel: custom-call.37
$region0: #{custom-call.37}
  %s0 = inlined_call_operand.hbm [shape: f32[6,8], index: 0, kind: output, shape index: {}]

// kernel: custom-call.35
$region0: #{custom-call.35}
  %s0 = inlined_call_operand.hbm [shape: f32[16,6], index: 0, kind: output, shape index: {}]

// kernel: custom-call.27
$region0: #{custom-call.27}
  %s0 = inlined_call_operand.vmem [shape: f32[6,8], index: 0, kind: output, shape index: {}]

// kernel: custom-call.45
$region0: #{custom-call.45}
  %s0 = inlined_call_operand.vmem [shape: f32[6,6], index: 0, kind: input, shape index: {}]
  %s1 = inlined_call_operand.vmem [shape: f32[6,6], index: 1, kind: output, shape index: {0}]
  %s2 = inlined_call_operand.hbm [shape: s32[6], index: 2, kind: output, shape index: {1}]
  %s3 = inlined_call_operand.vmem [shape: s32[6], index: 3, kind: output, shape index: {2}]
  %4 = xla_tuple %s1, %s2, %s3
  $region1: #{custom-call.45} parent=0
    #allocation0 [shape = 'u8[4096]{0}', space=vmem, size = 0x1000, scoped, tag = 'operand span for operand 0']
    #allocation1 [shape = 'u8[4096]{0}', space=vmem, size = 0x1000, scoped, tag = 'operand span for operand 1']
    #allocation2 [shape = 'u8[4096]{0}', space=vmem, size = 0x1000, scoped, tag = 'operand span for operand 2']
    #allocation3 [shape = 'u8[512]{0}', space=vmem, size = 0x400, scoped, tag = 'packed  for operand 2']
    #allocation4 [shape = 's32[1]{0}', space=sflag, size = 0x4, scoped, tag = 'scoped memory for custom-call.45']
    #allocation5 [shape = 'u8[4096]{0}', space=vmem, size = 0x1000, scoped, tag = 'operand span for operand 3']
    #allocation6 [shape = 'u8[512]{0}', space=vmem, size = 0x400, scoped, tag = 'packed  for operand 3']
    #allocation7 [shape = 's32[6,128]{1,0}', space=vmem, size = 0x1000, scoped, tag = 'scratch for permutations']
    %5 = vsyncpa [#allocation4], 0
    // Predicated region
    $region2: #{custom-call.45} parent=1 // pred_check
      _
    $region3: #{custom-call.45} parent=1 // pred_check_branch
      %7 = sbr.rel (0) target = $region5
    $region4: #{custom-call.45} parent=1 // pred_region
      %p9 = scmp.gt.s32.totalorder 1, 0
      // Predicated region
      $region6: #{custom-call.45} parent=4 // pred_check
        %p10 = pneg %p9
      $region7: #{custom-call.45} parent=4 // pred_check_branch
        %12 = sbr.rel (%p10) target = $region9
      $region8: #{custom-call.45} parent=4 // pred_region
        %s13 = ssub.s32 1, 1
        %s14 = smul.u32 %s13, 8
        %s15 = scalar_lea.vmem %s0, %s14
        %v16 = vld [vmem:[%s0] sm:$0xff]
        // While loop
        $region10: #{custom-call.45} parent=8 // loop_pre_header
          _
        $region11: #{custom-call.45} parent=8 // loop_header
          %s17 = sphi %s0, %s39
          %s18 = sphi [#allocation0], %s40
          %v19 = vphi %v16, %v41
          %s20 = ssub.s32 %s15, 64
          %p21 = scmp.gt.s32.totalorder %s17, %s20
        $region12: #{custom-call.45} parent=8 // loop_header_branch
          %23 = sbr.rel (%p21) target = $region16
        $region13: #{custom-call.45} parent=8 // loop_body
          %24 = vst [vmem:[%s18] sm:$0xff] %v19
          %v25 = vld [vmem:[%s17 + $0x8] sm:$0xff]
          %26 = vst [vmem:[%s18 + $0x8] sm:$0xff] %v25
          %v27 = vld [vmem:[%s17 + $0x10] sm:$0xff]
          %28 = vst [vmem:[%s18 + $0x10] sm:$0xff] %v27
          %v29 = vld [vmem:[%s17 + $0x18] sm:$0xff]
          %30 = vst [vmem:[%s18 + $0x18] sm:$0xff] %v29
          %v31 = vld [vmem:[%s17 + $0x20] sm:$0xff]
          %32 = vst [vmem:[%s18 + $0x20] sm:$0xff] %v31
          %v33 = vld [vmem:[%s17 + $0x28] sm:$0xff]
          %34 = vst [vmem:[%s18 + $0x28] sm:$0xff] %v33
          %v35 = vld [vmem:[%s17 + $0x30] sm:$0xff]
          %36 = vst [vmem:[%s18 + $0x30] sm:$0xff] %v35
          %v37 = vld [vmem:[%s17 + $0x38] sm:$0xff]
          %38 = vst [vmem:[%s18 + $0x38] sm:$0xff] %v37
        $region14: #{custom-call.45} parent=8 // loop_footer
          %s39 = scalar_lea.vmem %s17, 64
          %s40 = scalar_lea.vmem %s18, 64
          %v41 = vld [vmem:[%s17 + $0x40] sm:$0xff]
        $region15: #{custom-call.45} parent=8 // loop_footer_branch
          %42 = sbr.rel target = $region11
        $region16: #{custom-call.45} parent=8 // loop_exit
          _
        // While loop
        $region17: #{custom-call.45} parent=8 // loop_pre_header
          _
        $region18: #{custom-call.45} parent=8 // loop_header
          %s43 = sphi %s17, %s51
          %s44 = sphi %s18, %s52
          %v45 = vphi %v19, %v45
          %p46 = scmp.gt.s32.totalorder %s43, %s15
        $region19: #{custom-call.45} parent=8 // loop_header_branch
          %48 = sbr.rel (%p46) target = $region23
        $region20: #{custom-call.45} parent=8 // loop_body
          %v49 = vld [vmem:[%s43] sm:$0xff]
          %50 = vst [vmem:[%s44] sm:$0xff] %v49
        $region21: #{custom-call.45} parent=8 // loop_footer
          %s51 = scalar_lea.vmem %s43, 8
          %s52 = scalar_lea.vmem %s44, 8
        $region22: #{custom-call.45} parent=8 // loop_footer_branch
          %53 = sbr.rel target = $region18
        $region23: #{custom-call.45} parent=8 // loop_exit
          _
      $region9: #{custom-call.45} parent=4 // pred_fallthru
        _
      %s55 = ssub.s32 1, 1
      %s56 = smul.u32 1, 8
      %s57 = scalar_lea.vmem [#allocation0], %s56
      %s58 = smul.u32 1, 8
      %s59 = scalar_lea.vmem %s0, %s58
      %v60 = vld [vmem:[%s59] sm:%s55]
      %61 = vst [vmem:[%s57] sm:%s55] %v60
    $region5: #{custom-call.45} parent=1 // pred_fallthru
      _
    %v62 = vld [vmem:[#allocation0] sm:$0xff]
    %63 = vst [vmem:[#allocation1] sm:$0xff] %v62
    %64 = vst [vmem:[#allocation2] sm:$0x1] 0
    %v65 = vlaneseq
    %v66 = vshrl.u32 %v65, 7
    %v67 = vmov %v66
    %69 = vst [vmem:[#allocation7] sm:$0xff] %v67
    loop: start=0, step=1, limit=6
    $region25: #{custom-call.45} parent=1 // loop_pre_header
      _
    $region26: #{custom-call.45} parent=1 // loop_header
      %s71 = sphi 0, %s75
      %p72 = scmp.ge.s32.totalorder %s71, 6
    $region27: #{custom-call.45} parent=1 // loop_header_branch
      %74 = sbr.rel (%p72) target = $region31
    $region28: #{custom-call.45} parent=1 // loop_body
      %v76 = vstv %s71
      %v77 = vlaneseq
      %v78 = vshrl.u32 %v77, 7
      %v79 = vmov %v78
      %v80 = vld [vmem:[#allocation1] sm:$0xff]
      %v81 = vand.u32 2147483647, %v80
      %v83 = vstv %s71
      %vm84 = vcmp.ge.s32.totalorder %v79, %v83
      %vm85 = vcmp.lt.s32.totalorder %v79, 6
      %vm86 = vmand %vm84, %vm85
      %vm87 = vcmp.lt.f32.partialorder -inf, %v81
      %vm88 = vmand %vm86, %vm87
      %v89 = vsel %vm88, %v79, %v76
      %v90 = vsel %vm88, %v81, -inf
      %v91 = vrot.slane %v90, 1
      %v92 = vrot.slane %v89, 1
      %vm93 = vcmp.ge.f32.partialorder %v91, %v90
      %v94 = vsel %vm93, %v91, %v90
      %v95 = vsel %vm93, %v92, %v89
      %v96 = vrot.slane %v91, 1
      %v97 = vrot.slane %v92, 1
      %vm98 = vcmp.ge.f32.partialorder %v96, %v94
      %v99 = vsel %vm98, %v96, %v94
      %v100 = vsel %vm98, %v97, %v95
      %v101 = vrot.slane %v96, 1
      %v102 = vrot.slane %v97, 1
      %vm103 = vcmp.ge.f32.partialorder %v101, %v99
      %v104 = vsel %vm103, %v101, %v99
      %v105 = vsel %vm103, %v102, %v100
      %v106 = vrot.slane %v101, 1
      %v107 = vrot.slane %v102, 1
      %vm108 = vcmp.ge.f32.partialorder %v106, %v104
      %v109 = vsel %vm108, %v106, %v104
      %v110 = vsel %vm108, %v107, %v105
      %v111 = vrot.slane %v106, 1
      %v112 = vrot.slane %v107, 1
      %vm113 = vcmp.ge.f32.partialorder %v111, %v109
      %v114 = vsel %vm113, %v111, %v109
      %v115 = vsel %vm113, %v112, %v110
      %v116 = vrot.slane %v111, 1
      %v117 = vrot.slane %v112, 1
      %vm118 = vcmp.ge.f32.partialorder %v116, %v114
      %v119 = vsel %vm118, %v116, %v114
      %v120 = vsel %vm118, %v117, %v115
      %v121 = vrot.slane %v116, 1
      %v122 = vrot.slane %v117, 1
      %vm123 = vcmp.ge.f32.partialorder %v121, %v119
      %v124 = vsel %vm123, %v121, %v119
      %v125 = vsel %vm123, %v122, %v120
      %s126 = ssub.s32 128, %s71
      %127 = vrot.lane.b32.xlu0 %v125, %s126
      %v128 = vpop.permute.xlu0 %127
      %s129 = vtos %v128
      %v130 = vstv %s71
      %v131 = vlaneseq
      %v132 = vand.u32 %v131, 127
      %vm133 = vcmp.eq.s32.totalorder %v132, %v130
      %v134 = vstv %s129
      %v135 = vld [vmem:[#allocation2] ss:$0 sm:$0xff]
      %v136 = vsel %vm133, %v134, %v135
      %137 = vst [vmem:[#allocation2] sm:$0x1] %v136
      %s138 = scalar_lea.vmem [#allocation1], %s71
      %s139 = scalar_lea.vmem [#allocation1], %s129
      %v140 = vld [vmem:[%s138] ss:$0 sm:$0xff]
      %v141 = vld [vmem:[%s139] ss:$0 sm:$0xff]
      %142 = vst [vmem:[%s139] sm:$0x1] %v140
      %143 = vst [vmem:[%s138] sm:$0x1] %v141
      %s144 = scalar_lea.vmem [#allocation7], %s71
      %s145 = scalar_lea.vmem [#allocation7], %s129
      %v146 = vld [vmem:[%s144] ss:$0 sm:$0xff]
      %v147 = vld [vmem:[%s145] ss:$0 sm:$0xff]
      %148 = vst [vmem:[%s145] sm:$0x1] %v146
      %149 = vst [vmem:[%s144] sm:$0x1] %v147
      %vm150 = vcmp.ne.f32.partialorder %v141, 0.0
      %vm151 = vmand %vm133, %vm150
      %v152 = vsel %vm151, %v141, 1.0
      %v153 = vlaneseq
      %v154 = vand.u32 %v153, 127
      %v155 = vstv %s71
      %vm156 = vcmp.gt.s32.totalorder %v154, %v155
      %v157 = vsel %vm156, %v141, 0.0
      %v158 = vlaneseq
      %v159 = vshrl.u32 %v158, 7
      %v160 = vmov %v159
      %v161 = vld [vmem:[#allocation1] sm:$0xff]
      %v163 = vstv %s71
      %vm164 = vcmp.gt.s32.totalorder %v160, %v163
      %v165 = vsel %vm164, %v152, 1.0
      %v166 = vrcp.pop %v165
      %v167 = vmul.f32 %v165, %v166
      %v168 = vsub.f32 1.0, %v167
      %v169 = vmul.f32 %v166, %v168
      %v170 = vadd.f32 %v166, %v169
      %vm171 = vweird.f32 %v165
      %vm172 = vweird.f32 %v166
      %vm173 = vmor %vm171, %vm172
      %v174 = vsel %vm173, %v166, %v170
      %v175 = vand.u32 2147483647, %v165
      %vm176 = vcmp.eq.f32.partialorder %v175, 8.507059e+37
      %v177 = vand.u32 %v165, 2147483648
      %v178 = vor.u32 1.1754944e-38, %v177
      %v179 = vsel %vm176, %v178, %v174
      %v180 = vmul.f32 %v161, %v179
      %vm181 = vmand %vm164, %vm133
      %v182 = vsel %vm181, %v180, 0.0
      %183 = vadd.xlane.f32.xlu0 %v182
      %v184 = vpop.xlane.xlu0 %183
      %v185 = vmul.f32 %v184, %v157
      %v186 = vsub.f32 %v180, %v185
      %187 = vst [vmem:[#allocation1] sm:$0xff] %v186
    $region29: #{custom-call.45} parent=1 // loop_footer
      %s75 = sadd.s32 1, %s71
    $region30: #{custom-call.45} parent=1 // loop_footer_branch
      %70 = sbr.rel target = $region26
    $region31: #{custom-call.45} parent=1 // loop_exit
      _
    %v188 = vld [vmem:[#allocation7] sm:$0xff]
    %s189 = scalar_lea.vmem [#allocation7], 8
    %s190 = scalar_lea.vmem [#allocation7], 16
    %s191 = scalar_lea.vmem [#allocation7], 24
    %s192 = scalar_lea.vmem [#allocation7], 32
    %s193 = scalar_lea.vmem [#allocation7], 40
    %s194 = scalar_lea.vmem [#allocation7], 48
    %s195 = scalar_lea.vmem [#allocation7], 56
    %s196 = scalar_lea.vmem [#allocation7], 64
    %s197 = scalar_lea.vmem [#allocation7], 72
    %s198 = scalar_lea.vmem [#allocation7], 80
    %s199 = scalar_lea.vmem [#allocation7], 88
    %s200 = scalar_lea.vmem [#allocation7], 96
    %s201 = scalar_lea.vmem [#allocation7], 104
    %s202 = scalar_lea.vmem [#allocation7], 112
    %s203 = scalar_lea.vmem [#allocation7], 120
    %204 = vxpose.xlu0.b32.start [1/16] %v188, 128
    %205 = vxpose.xlu0.b32.cont [2/16] 0, 128
    %206 = vxpose.xlu0.b32.cont [3/16] 0, 128
    %207 = vxpose.xlu0.b32.cont [4/16] 0, 128
    %208 = vxpose.xlu0.b32.cont [5/16] 0, 128
    %209 = vxpose.xlu0.b32.cont [6/16] 0, 128
    %210 = vxpose.xlu0.b32.cont [7/16] 0, 128
    %211 = vxpose.xlu0.b32.cont [8/16] 0, 128
    %212 = vxpose.xlu0.b32.cont [9/16] 0, 128
    %213 = vxpose.xlu0.b32.cont [10/16] 0, 128
    %214 = vxpose.xlu0.b32.cont [11/16] 0, 128
    %215 = vxpose.xlu0.b32.cont [12/16] 0, 128
    %216 = vxpose.xlu0.b32.cont [13/16] 0, 128
    %217 = vxpose.xlu0.b32.cont [14/16] 0, 128
    %218 = vxpose.xlu0.b32.cont [15/16] 0, 128
    %219 = vxpose.xlu0.b32.end [16/16] 0, 128
    %v220 = vpop.trf.xlu0
    %v221 = vpop.trf.xlu0
    %v222 = vpop.trf.xlu0
    %v223 = vpop.trf.xlu0
    %v224 = vpop.trf.xlu0
    %v225 = vpop.trf.xlu0
    %v226 = vpop.trf.xlu0
    %v227 = vpop.trf.xlu0
    %v228 = vpop.trf.xlu0
    %v229 = vpop.trf.xlu0
    %v230 = vpop.trf.xlu0
    %v231 = vpop.trf.xlu0
    %v232 = vpop.trf.xlu0
    %v233 = vpop.trf.xlu0
    %v234 = vpop.trf.xlu0
    %v235 = vpop.trf.xlu0
    %236 = vst [vmem:[#allocation5] sm:$0x1] %v220
    %s238 = ssub.s32 2, 1
    %v239 = vld [vmem:[#allocation2] sm:%s238]
    %s241 = ssub.s32 2, 1
    %242 = vst [vmem:[#allocation3] sm:%s241] %v239
    %s244 = ssub.s32 2, 1
    %v245 = vld [vmem:[#allocation5] sm:%s244]
    %s247 = ssub.s32 2, 1
    %248 = vst [vmem:[#allocation6] sm:%s247] %v245
    // Predicated region
    $region32: #{custom-call.45} parent=1 // pred_check
      _
    $region33: #{custom-call.45} parent=1 // pred_check_branch
      %250 = sbr.rel (0) target = $region35
    $region34: #{custom-call.45} parent=1 // pred_region
      %p252 = scmp.gt.s32.totalorder 1, 0
      // Predicated region
      $region36: #{custom-call.45} parent=34 // pred_check
        %p253 = pneg %p252
      $region37: #{custom-call.45} parent=34 // pred_check_branch
        %255 = sbr.rel (%p253) target = $region39
      $region38: #{custom-call.45} parent=34 // pred_region
        %s256 = ssub.s32 1, 1
        %s257 = smul.u32 %s256, 8
        %s258 = scalar_lea.vmem [#allocation1], %s257
        %v259 = vld [vmem:[#allocation1] sm:$0xff]
        // While loop
        $region40: #{custom-call.45} parent=38 // loop_pre_header
          _
        $region41: #{custom-call.45} parent=38 // loop_header
          %s260 = sphi [#allocation1], %s282
          %s261 = sphi %s1, %s283
          %v262 = vphi %v259, %v284
          %s263 = ssub.s32 %s258, 64
          %p264 = scmp.gt.s32.totalorder %s260, %s263
        $region42: #{custom-call.45} parent=38 // loop_header_branch
          %266 = sbr.rel (%p264) target = $region46
        $region43: #{custom-call.45} parent=38 // loop_body
          %267 = vst [vmem:[%s261] sm:$0xff] %v262
          %v268 = vld [vmem:[%s260 + $0x8] sm:$0xff]
          %269 = vst [vmem:[%s261 + $0x8] sm:$0xff] %v268
          %v270 = vld [vmem:[%s260 + $0x10] sm:$0xff]
          %271 = vst [vmem:[%s261 + $0x10] sm:$0xff] %v270
          %v272 = vld [vmem:[%s260 + $0x18] sm:$0xff]
          %273 = vst [vmem:[%s261 + $0x18] sm:$0xff] %v272
          %v274 = vld [vmem:[%s260 + $0x20] sm:$0xff]
          %275 = vst [vmem:[%s261 + $0x20] sm:$0xff] %v274
          %v276 = vld [vmem:[%s260 + $0x28] sm:$0xff]
          %277 = vst [vmem:[%s261 + $0x28] sm:$0xff] %v276
          %v278 = vld [vmem:[%s260 + $0x30] sm:$0xff]
          %279 = vst [vmem:[%s261 + $0x30] sm:$0xff] %v278
          %v280 = vld [vmem:[%s260 + $0x38] sm:$0xff]
          %281 = vst [vmem:[%s261 + $0x38] sm:$0xff] %v280
        $region44: #{custom-call.45} parent=38 // loop_footer
          %s282 = scalar_lea.vmem %s260, 64
          %s283 = scalar_lea.vmem %s261, 64
          %v284 = vld [vmem:[%s260 + $0x40] sm:$0xff]
        $region45: #{custom-call.45} parent=38 // loop_footer_branch
          %285 = sbr.rel target = $region41
        $region46: #{custom-call.45} parent=38 // loop_exit
          _
        // While loop
        $region47: #{custom-call.45} parent=38 // loop_pre_header
          _
        $region48: #{custom-call.45} parent=38 // loop_header
          %s286 = sphi %s260, %s294
          %s287 = sphi %s261, %s295
          %v288 = vphi %v262, %v288
          %p289 = scmp.gt.s32.totalorder %s286, %s258
        $region49: #{custom-call.45} parent=38 // loop_header_branch
          %291 = sbr.rel (%p289) target = $region53
        $region50: #{custom-call.45} parent=38 // loop_body
          %v292 = vld [vmem:[%s286] sm:$0xff]
          %293 = vst [vmem:[%s287] sm:$0xff] %v292
        $region51: #{custom-call.45} parent=38 // loop_footer
          %s294 = scalar_lea.vmem %s286, 8
          %s295 = scalar_lea.vmem %s287, 8
        $region52: #{custom-call.45} parent=38 // loop_footer_branch
          %296 = sbr.rel target = $region48
        $region53: #{custom-call.45} parent=38 // loop_exit
          _
      $region39: #{custom-call.45} parent=34 // pred_fallthru
        _
      %s298 = ssub.s32 1, 1
      %s299 = smul.u32 1, 8
      %s300 = scalar_lea.vmem %s1, %s299
      %s301 = smul.u32 1, 8
      %s302 = scalar_lea.vmem [#allocation1], %s301
      %v303 = vld [vmem:[%s302] sm:%s298]
      %304 = vst [vmem:[%s300] sm:%s298] %v303
    $region35: #{custom-call.45} parent=1 // pred_fallthru
      _
    // Predicated region
    $region54: #{custom-call.45} parent=1 // pred_check
      _
    $region55: #{custom-call.45} parent=1 // pred_check_branch
      %306 = sbr.rel (0) target = $region57
    $region56: #{custom-call.45} parent=1 // pred_region
      %308 = vsyncadd [#allocation4], 0
      %s310 = sshll.u32 [#allocation3], 4
      %s311 = int_to_ptr.vmem [resolvable:$true] %s310
      %s312 = sshll.u32 %s2, 4
      %s313 = int_to_ptr.hbm [resolvable:$true] %s312
      %315 = dma.vmem_to_hbm [thread:$0]  %s311, 16, %s313, [#allocation4]
    $region57: #{custom-call.45} parent=1 // pred_fallthru
      _
    // Predicated region
    $region58: #{custom-call.45} parent=1 // pred_check
      _
    $region59: #{custom-call.45} parent=1 // pred_check_branch
      %317 = sbr.rel (0) target = $region61
    $region60: #{custom-call.45} parent=1 // pred_region
      // Predicated region
      $region62: #{custom-call.45} parent=60 // pred_check
        _
      $region63: #{custom-call.45} parent=60 // pred_check_branch
        %319 = sbr.rel (0) target = $region65
      $region64: #{custom-call.45} parent=60 // pred_region
        %p321 = scmp.gt.s32.totalorder 0, 0
        // Predicated region
        $region66: #{custom-call.45} parent=64 // pred_check
          %p322 = pneg %p321
        $region67: #{custom-call.45} parent=64 // pred_check_branch
          %324 = sbr.rel (%p322) target = $region69
        $region68: #{custom-call.45} parent=64 // pred_region
          %s325 = ssub.s32 0, 1
          %s326 = smul.u32 %s325, 8
          %s327 = scalar_lea.vmem [#allocation6], %s326
          %v328 = vld [vmem:[#allocation6] sm:$0xff]
          // While loop
          $region70: #{custom-call.45} parent=68 // loop_pre_header
            _
          $region71: #{custom-call.45} parent=68 // loop_header
            %s329 = sphi [#allocation6], %s351
            %s330 = sphi %s3, %s352
            %v331 = vphi %v328, %v353
            %s332 = ssub.s32 %s327, 64
            %p333 = scmp.gt.s32.totalorder %s329, %s332
          $region72: #{custom-call.45} parent=68 // loop_header_branch
            %335 = sbr.rel (%p333) target = $region76
          $region73: #{custom-call.45} parent=68 // loop_body
            %336 = vst [vmem:[%s330] sm:$0xff] %v331
            %v337 = vld [vmem:[%s329 + $0x8] sm:$0xff]
            %338 = vst [vmem:[%s330 + $0x8] sm:$0xff] %v337
            %v339 = vld [vmem:[%s329 + $0x10] sm:$0xff]
            %340 = vst [vmem:[%s330 + $0x10] sm:$0xff] %v339
            %v341 = vld [vmem:[%s329 + $0x18] sm:$0xff]
            %342 = vst [vmem:[%s330 + $0x18] sm:$0xff] %v341
            %v343 = vld [vmem:[%s329 + $0x20] sm:$0xff]
            %344 = vst [vmem:[%s330 + $0x20] sm:$0xff] %v343
            %v345 = vld [vmem:[%s329 + $0x28] sm:$0xff]
            %346 = vst [vmem:[%s330 + $0x28] sm:$0xff] %v345
            %v347 = vld [vmem:[%s329 + $0x30] sm:$0xff]
            %348 = vst [vmem:[%s330 + $0x30] sm:$0xff] %v347
            %v349 = vld [vmem:[%s329 + $0x38] sm:$0xff]
            %350 = vst [vmem:[%s330 + $0x38] sm:$0xff] %v349
          $region74: #{custom-call.45} parent=68 // loop_footer
            %s351 = scalar_lea.vmem %s329, 64
            %s352 = scalar_lea.vmem %s330, 64
            %v353 = vld [vmem:[%s329 + $0x40] sm:$0xff]
          $region75: #{custom-call.45} parent=68 // loop_footer_branch
            %354 = sbr.rel target = $region71
          $region76: #{custom-call.45} parent=68 // loop_exit
            _
          // While loop
          $region77: #{custom-call.45} parent=68 // loop_pre_header
            _
          $region78: #{custom-call.45} parent=68 // loop_header
            %s355 = sphi %s329, %s363
            %s356 = sphi %s330, %s364
            %v357 = vphi %v331, %v357
            %p358 = scmp.gt.s32.totalorder %s355, %s327
          $region79: #{custom-call.45} parent=68 // loop_header_branch
            %360 = sbr.rel (%p358) target = $region83
          $region80: #{custom-call.45} parent=68 // loop_body
            %v361 = vld [vmem:[%s355] sm:$0xff]
            %362 = vst [vmem:[%s356] sm:$0xff] %v361
          $region81: #{custom-call.45} parent=68 // loop_footer
            %s363 = scalar_lea.vmem %s355, 8
            %s364 = scalar_lea.vmem %s356, 8
          $region82: #{custom-call.45} parent=68 // loop_footer_branch
            %365 = sbr.rel target = $region78
          $region83: #{custom-call.45} parent=68 // loop_exit
            _
        $region69: #{custom-call.45} parent=64 // pred_fallthru
          _
        %s367 = ssub.s32 2, 1
        %s368 = smul.u32 0, 8
        %s369 = scalar_lea.vmem %s3, %s368
        %s370 = smul.u32 0, 8
        %s371 = scalar_lea.vmem [#allocation6], %s370
        %v372 = vld [vmem:[%s371] sm:%s367]
        %373 = vst [vmem:[%s369] sm:%s367] %v372
      $region65: #{custom-call.45} parent=60 // pred_fallthru
        _
    $region61: #{custom-call.45} parent=1 // pred_fallthru
      _
    // Predicated region
    $region84: #{custom-call.45} parent=1 // pred_check
      _
    $region85: #{custom-call.45} parent=1 // pred_check_branch
      %375 = sbr.rel (0) target = $region87
    $region86: #{custom-call.45} parent=1 // pred_region
      %377 = dma.done [#allocation4], 16
    $region87: #{custom-call.45} parent=1 // pred_fallthru
      _
    // Predicated region
    $region88: #{custom-call.45} parent=1 // pred_check
      _
    $region89: #{custom-call.45} parent=1 // pred_check_branch
      %379 = sbr.rel (0) target = $region91
    $region90: #{custom-call.45} parent=1 // pred_region
      _
    $region91: #{custom-call.45} parent=1 // pred_fallthru
      _
    %380 = vsyncpa [#allocation4], 1

// kernel: custom-call.46
$region0: #{custom-call.46}
  %s0 = inlined_call_operand.vmem [shape: f32[1,6,6], index: 0, kind: input, shape index: {}]
  %s1 = inlined_call_operand.vmem [shape: f32[1,6,6], index: 1, kind: output, shape index: {}]
  $region1: #{custom-call.46} parent=0
    #allocation0 [shape = 'u8[4096]{0}', space=vmem, size = 0x1000, scoped, tag = 'operand span for operand 0']
    #allocation1 [shape = 'u8[4096]{0}', space=vmem, size = 0x1000, scoped, tag = 'operand span for operand 1']
    #allocation2 [shape = 'f32[6,6]{1,0}', space=vmem, size = 0x1000, scoped, tag = 'rescaled input a']
    // Predicated region
    $region2: #{custom-call.46} parent=1 // pred_check
      _
    $region3: #{custom-call.46} parent=1 // pred_check_branch
      %3 = sbr.rel (0) target = $region5
    $region4: #{custom-call.46} parent=1 // pred_region
      // Predicated region
      $region6: #{custom-call.46} parent=4 // pred_check
        _
      $region7: #{custom-call.46} parent=4 // pred_check_branch
        %5 = sbr.rel (0) target = $region9
      $region8: #{custom-call.46} parent=4 // pred_region
        // Predicated region
        $region21: #{custom-call.46} parent=8 // pred_check
          _
        $region22: #{custom-call.46} parent=8 // pred_check_branch
          %21 = sbr.rel (0) target = $region24
        $region23: #{custom-call.46} parent=8 // pred_region
          loop: start=0, step=1, limit=1
          $region25: #{custom-call.46} parent=23 // loop_pre_header
            _
          $region26: #{custom-call.46} parent=23 // loop_header
            %s23 = sphi 0, %s27
            %p24 = scmp.ge.s32.totalorder %s23, 1
            %s28 = sphi %s0, %s0
            %s29 = sphi [#allocation0], [#allocation0]
          $region27: #{custom-call.46} parent=23 // loop_header_branch
            %26 = sbr.rel (%p24) target = $region31
          $region28: #{custom-call.46} parent=23 // loop_body
            %v30 = vld [vmem:[%s28] sm:$0xff]
            %31 = vst [vmem:[%s29] sm:$0xff] %v30
          $region29: #{custom-call.46} parent=23 // loop_footer
            %s27 = sadd.s32 1, %s23
          $region30: #{custom-call.46} parent=23 // loop_footer_branch
            %22 = sbr.rel target = $region26
          $region31: #{custom-call.46} parent=23 // loop_exit
            _
        $region24: #{custom-call.46} parent=8 // pred_fallthru
          _
        // Predicated region
        $region32: #{custom-call.46} parent=8 // pred_check
          _
        $region33: #{custom-call.46} parent=8 // pred_check_branch
          %33 = sbr.rel target = $region35
        $region34: #{custom-call.46} parent=8 // pred_region
          _
        $region35: #{custom-call.46} parent=8 // pred_fallthru
          _
      $region9: #{custom-call.46} parent=4 // pred_fallthru
        _
      // Predicated region
      $region10: #{custom-call.46} parent=4 // pred_check
        _
      $region11: #{custom-call.46} parent=4 // pred_check_branch
        %7 = sbr.rel target = $region13
      $region12: #{custom-call.46} parent=4 // pred_region
        %s9 = ssub.s32 256, 1
        loop: start=0, step=1, limit=1
        $region14: #{custom-call.46} parent=12 // loop_pre_header
          _
        $region15: #{custom-call.46} parent=12 // loop_header
          %s11 = sphi 0, %s15
          %p12 = scmp.ge.s32.totalorder %s11, 1
          %s16 = sphi %s0, %s0
          %s17 = sphi [#allocation0], [#allocation0]
        $region16: #{custom-call.46} parent=12 // loop_header_branch
          %14 = sbr.rel (%p12) target = $region20
        $region17: #{custom-call.46} parent=12 // loop_body
          %v18 = vld [vmem:[%s16] sm:%s9]
          %19 = vst [vmem:[%s17] sm:%s9] %v18
        $region18: #{custom-call.46} parent=12 // loop_footer
          %s15 = sadd.s32 1, %s11
        $region19: #{custom-call.46} parent=12 // loop_footer_branch
          %10 = sbr.rel target = $region15
        $region20: #{custom-call.46} parent=12 // loop_exit
          _
      $region13: #{custom-call.46} parent=4 // pred_fallthru
        _
    $region5: #{custom-call.46} parent=1 // pred_fallthru
      _
    %34 = vnop
    %v35 = vlaneseq
    %v36 = vand.u32 %v35, 127
    %vm37 = vcmp.lt.s32.totalorder %v36, 6
    %v38 = vlaneseq
    %v39 = vshrl.u32 %v38, 7
    %vm41 = vcmp.eq.s32.totalorder %v39, %v36
    %v42 = vld [vmem:[#allocation0] sm:$0xff]
    %v43 = vsel %vm41, %v42, 0.0
    %44 = vadd.xlane.f32.xlu0 %v43
    %v45 = vpop.xlane.xlu0 %44
    %vm46 = vcmp.ge.s32.totalorder %v39, %v36
    %vm47 = vmand %vm46, %vm37
    %v48 = vsel %vm47, %v42, 0.0
    %v49 = vrcp.pop %v45
    %v50 = vmul.f32 %v45, %v49
    %v51 = vsub.f32 1.0, %v50
    %v52 = vmul.f32 %v49, %v51
    %v53 = vadd.f32 %v49, %v52
    %vm54 = vweird.f32 %v45
    %vm55 = vweird.f32 %v49
    %vm56 = vmor %vm54, %vm55
    %v57 = vsel %vm56, %v49, %v53
    %v58 = vand.u32 2147483647, %v45
    %vm59 = vcmp.eq.f32.partialorder %v58, 8.507059e+37
    %v60 = vand.u32 %v45, 2147483648
    %v61 = vor.u32 1.1754944e-38, %v60
    %v62 = vsel %vm59, %v61, %v57
    %v63 = vmul.f32 %v48, %v62
    %64 = vst [vmem:[#allocation2] sm:$0xff] %v63
    %v65 = vlaneseq
    %v66 = vand.u32 %v65, 127
    %v67 = vlaneseq
    %v68 = vshrl.u32 %v67, 7
    %vm70 = vcmp.eq.s32.totalorder %v66, %v68
    %v71 = vlaneseq
    %v72 = vand.u32 %v71, 127
    %vm73 = vcmp.eq.s32.totalorder %v72, 0
    %v74 = vsel %vm73, 1.0, -1.0
    %v75 = vsel %vm70, %v74, 0.0
    %s76 = scalar_lea.vmem [#allocation2], 1
    %v77 = vld [vmem:[%s76] ss:$0 sm:$0xff]
    %v78 = vxor.u32 %v77, 2147483648
    %v79 = vlaneseq
    %v80 = vand.u32 %v79, 127
    %vm81 = vcmp.eq.s32.totalorder %v80, 1
    %v82 = vmul.f32 %v78, %v75
    %83 = vadd.xlane.f32.xlu0 %v82
    %v84 = vpop.xlane.xlu0 %83
    %v85 = vsel %vm81, %v84, %v75
    %s86 = scalar_lea.vmem [#allocation2], 2
    %v87 = vld [vmem:[%s86] ss:$0 sm:$0xff]
    %v88 = vxor.u32 %v87, 2147483648
    %v89 = vlaneseq
    %v90 = vand.u32 %v89, 127
    %vm91 = vcmp.eq.s32.totalorder %v90, 2
    %v92 = vmul.f32 %v88, %v85
    %93 = vadd.xlane.f32.xlu0 %v92
    %v94 = vpop.xlane.xlu0 %93
    %v95 = vsel %vm91, %v94, %v85
    %s96 = scalar_lea.vmem [#allocation2], 3
    %v97 = vld [vmem:[%s96] ss:$0 sm:$0xff]
    %v98 = vxor.u32 %v97, 2147483648
    %v99 = vlaneseq
    %v100 = vand.u32 %v99, 127
    %vm101 = vcmp.eq.s32.totalorder %v100, 3
    %v102 = vmul.f32 %v98, %v95
    %103 = vadd.xlane.f32.xlu0 %v102
    %v104 = vpop.xlane.xlu0 %103
    %v105 = vsel %vm101, %v104, %v95
    %s106 = scalar_lea.vmem [#allocation2], 4
    %v107 = vld [vmem:[%s106] ss:$0 sm:$0xff]
    %v108 = vxor.u32 %v107, 2147483648
    %v109 = vlaneseq
    %v110 = vand.u32 %v109, 127
    %vm111 = vcmp.eq.s32.totalorder %v110, 4
    %v112 = vmul.f32 %v108, %v105
    %113 = vadd.xlane.f32.xlu0 %v112
    %v114 = vpop.xlane.xlu0 %113
    %v115 = vsel %vm111, %v114, %v105
    %s116 = scalar_lea.vmem [#allocation2], 5
    %v117 = vld [vmem:[%s116] ss:$0 sm:$0xff]
    %v118 = vxor.u32 %v117, 2147483648
    %v119 = vlaneseq
    %v120 = vand.u32 %v119, 127
    %vm121 = vcmp.eq.s32.totalorder %v120, 5
    %v122 = vmul.f32 %v118, %v115
    %123 = vadd.xlane.f32.xlu0 %v122
    %v124 = vpop.xlane.xlu0 %123
    %v125 = vsel %vm121, %v124, %v115
    %v126 = vrcp.pop %v45
    %v127 = vmul.f32 %v45, %v126
    %v128 = vsub.f32 1.0, %v127
    %v129 = vmul.f32 %v126, %v128
    %v130 = vadd.f32 %v126, %v129
    %vm131 = vweird.f32 %v45
    %vm132 = vweird.f32 %v126
    %vm133 = vmor %vm131, %vm132
    %v134 = vsel %vm133, %v126, %v130
    %v135 = vand.u32 2147483647, %v45
    %vm136 = vcmp.eq.f32.partialorder %v135, 8.507059e+37
    %v137 = vand.u32 %v45, 2147483648
    %v138 = vor.u32 1.1754944e-38, %v137
    %v139 = vsel %vm136, %v138, %v134
    %v140 = vmul.f32 %v125, %v139
    %vm141 = vweird.f32 %v45
    %v142 = vsel %vm141, %v125, %v140
    %143 = vst [vmem:[#allocation1] sm:$0xff] %v142
    // Predicated region
    $region36: #{custom-call.46} parent=1 // pred_check
      _
    $region37: #{custom-call.46} parent=1 // pred_check_branch
      %145 = sbr.rel (0) target = $region39
    $region38: #{custom-call.46} parent=1 // pred_region
      // Predicated region
      $region40: #{custom-call.46} parent=38 // pred_check
        _
      $region41: #{custom-call.46} parent=38 // pred_check_branch
        %147 = sbr.rel (0) target = $region43
      $region42: #{custom-call.46} parent=38 // pred_region
        // Predicated region
        $region55: #{custom-call.46} parent=42 // pred_check
          _
        $region56: #{custom-call.46} parent=42 // pred_check_branch
          %163 = sbr.rel (0) target = $region58
        $region57: #{custom-call.46} parent=42 // pred_region
          loop: start=0, step=1, limit=1
          $region59: #{custom-call.46} parent=57 // loop_pre_header
            _
          $region60: #{custom-call.46} parent=57 // loop_header
            %s165 = sphi 0, %s169
            %p166 = scmp.ge.s32.totalorder %s165, 1
            %s170 = sphi [#allocation1], [#allocation1]
            %s171 = sphi %s1, %s1
          $region61: #{custom-call.46} parent=57 // loop_header_branch
            %168 = sbr.rel (%p166) target = $region65
          $region62: #{custom-call.46} parent=57 // loop_body
            %v172 = vld [vmem:[%s170] sm:$0xff]
            %173 = vst [vmem:[%s171] sm:$0xff] %v172
          $region63: #{custom-call.46} parent=57 // loop_footer
            %s169 = sadd.s32 1, %s165
          $region64: #{custom-call.46} parent=57 // loop_footer_branch
            %164 = sbr.rel target = $region60
          $region65: #{custom-call.46} parent=57 // loop_exit
            _
        $region58: #{custom-call.46} parent=42 // pred_fallthru
          _
        // Predicated region
        $region66: #{custom-call.46} parent=42 // pred_check
          _
        $region67: #{custom-call.46} parent=42 // pred_check_branch
          %175 = sbr.rel target = $region69
        $region68: #{custom-call.46} parent=42 // pred_region
          _
        $region69: #{custom-call.46} parent=42 // pred_fallthru
          _
      $region43: #{custom-call.46} parent=38 // pred_fallthru
        _
      // Predicated region
      $region44: #{custom-call.46} parent=38 // pred_check
        _
      $region45: #{custom-call.46} parent=38 // pred_check_branch
        %149 = sbr.rel target = $region47
      $region46: #{custom-call.46} parent=38 // pred_region
        %s151 = ssub.s32 256, 1
        loop: start=0, step=1, limit=1
        $region48: #{custom-call.46} parent=46 // loop_pre_header
          _
        $region49: #{custom-call.46} parent=46 // loop_header
          %s153 = sphi 0, %s157
          %p154 = scmp.ge.s32.totalorder %s153, 1
          %s158 = sphi [#allocation1], [#allocation1]
          %s159 = sphi %s1, %s1
        $region50: #{custom-call.46} parent=46 // loop_header_branch
          %156 = sbr.rel (%p154) target = $region54
        $region51: #{custom-call.46} parent=46 // loop_body
          %v160 = vld [vmem:[%s158] sm:%s151]
          %161 = vst [vmem:[%s159] sm:%s151] %v160
        $region52: #{custom-call.46} parent=46 // loop_footer
          %s157 = sadd.s32 1, %s153
        $region53: #{custom-call.46} parent=46 // loop_footer_branch
          %152 = sbr.rel target = $region49
        $region54: #{custom-call.46} parent=46 // loop_exit
          _
      $region47: #{custom-call.46} parent=38 // pred_fallthru
        _
    $region39: #{custom-call.46} parent=1 // pred_fallthru
      _
    %176 = vnop

// kernel: custom-call.47
$region0: #{custom-call.47}
  %s0 = inlined_call_operand.vmem [shape: f32[1,6,6], index: 0, kind: input, shape index: {}]
  %s1 = inlined_call_operand.vmem [shape: f32[1,6,6], index: 1, kind: output, shape index: {}]
  $region1: #{custom-call.47} parent=0
    #allocation0 [shape = 'u8[4096]{0}', space=vmem, size = 0x1000, scoped, tag = 'operand span for operand 0']
    #allocation1 [shape = 'u8[4096]{0}', space=vmem, size = 0x1000, scoped, tag = 'operand span for operand 1']
    #allocation2 [shape = 'f32[6,6]{1,0}', space=vmem, size = 0x1000, scoped, tag = 'rescaled input a']
    // Predicated region
    $region2: #{custom-call.47} parent=1 // pred_check
      _
    $region3: #{custom-call.47} parent=1 // pred_check_branch
      %3 = sbr.rel (0) target = $region5
    $region4: #{custom-call.47} parent=1 // pred_region
      // Predicated region
      $region6: #{custom-call.47} parent=4 // pred_check
        _
      $region7: #{custom-call.47} parent=4 // pred_check_branch
        %5 = sbr.rel (0) target = $region9
      $region8: #{custom-call.47} parent=4 // pred_region
        // Predicated region
        $region21: #{custom-call.47} parent=8 // pred_check
          _
        $region22: #{custom-call.47} parent=8 // pred_check_branch
          %21 = sbr.rel (0) target = $region24
        $region23: #{custom-call.47} parent=8 // pred_region
          loop: start=0, step=1, limit=1
          $region25: #{custom-call.47} parent=23 // loop_pre_header
            _
          $region26: #{custom-call.47} parent=23 // loop_header
            %s23 = sphi 0, %s27
            %p24 = scmp.ge.s32.totalorder %s23, 1
            %s28 = sphi %s0, %s0
            %s29 = sphi [#allocation0], [#allocation0]
          $region27: #{custom-call.47} parent=23 // loop_header_branch
            %26 = sbr.rel (%p24) target = $region31
          $region28: #{custom-call.47} parent=23 // loop_body
            %v30 = vld [vmem:[%s28] sm:$0xff]
            %31 = vst [vmem:[%s29] sm:$0xff] %v30
          $region29: #{custom-call.47} parent=23 // loop_footer
            %s27 = sadd.s32 1, %s23
          $region30: #{custom-call.47} parent=23 // loop_footer_branch
            %22 = sbr.rel target = $region26
          $region31: #{custom-call.47} parent=23 // loop_exit
            _
        $region24: #{custom-call.47} parent=8 // pred_fallthru
          _
        // Predicated region
        $region32: #{custom-call.47} parent=8 // pred_check
          _
        $region33: #{custom-call.47} parent=8 // pred_check_branch
          %33 = sbr.rel target = $region35
        $region34: #{custom-call.47} parent=8 // pred_region
          _
        $region35: #{custom-call.47} parent=8 // pred_fallthru
          _
      $region9: #{custom-call.47} parent=4 // pred_fallthru
        _
      // Predicated region
      $region10: #{custom-call.47} parent=4 // pred_check
        _
      $region11: #{custom-call.47} parent=4 // pred_check_branch
        %7 = sbr.rel target = $region13
      $region12: #{custom-call.47} parent=4 // pred_region
        %s9 = ssub.s32 256, 1
        loop: start=0, step=1, limit=1
        $region14: #{custom-call.47} parent=12 // loop_pre_header
          _
        $region15: #{custom-call.47} parent=12 // loop_header
          %s11 = sphi 0, %s15
          %p12 = scmp.ge.s32.totalorder %s11, 1
          %s16 = sphi %s0, %s0
          %s17 = sphi [#allocation0], [#allocation0]
        $region16: #{custom-call.47} parent=12 // loop_header_branch
          %14 = sbr.rel (%p12) target = $region20
        $region17: #{custom-call.47} parent=12 // loop_body
          %v18 = vld [vmem:[%s16] sm:%s9]
          %19 = vst [vmem:[%s17] sm:%s9] %v18
        $region18: #{custom-call.47} parent=12 // loop_footer
          %s15 = sadd.s32 1, %s11
        $region19: #{custom-call.47} parent=12 // loop_footer_branch
          %10 = sbr.rel target = $region15
        $region20: #{custom-call.47} parent=12 // loop_exit
          _
      $region13: #{custom-call.47} parent=4 // pred_fallthru
        _
    $region5: #{custom-call.47} parent=1 // pred_fallthru
      _
    %34 = vnop
    %v35 = vlaneseq
    %v36 = vand.u32 %v35, 127
    %vm37 = vcmp.lt.s32.totalorder %v36, 6
    %v38 = vlaneseq
    %v39 = vshrl.u32 %v38, 7
    %vm41 = vcmp.eq.s32.totalorder %v39, %v36
    %v42 = vld [vmem:[#allocation0] sm:$0xff]
    %v43 = vsel %vm41, %v42, 0.0
    %44 = vadd.xlane.f32.xlu0 %v43
    %v45 = vpop.xlane.xlu0 %44
    %vm46 = vcmp.le.s32.totalorder %v39, %v36
    %vm47 = vmand %vm46, %vm37
    %v48 = vsel %vm47, %v42, 0.0
    %v49 = vrcp.pop %v45
    %v50 = vmul.f32 %v45, %v49
    %v51 = vsub.f32 1.0, %v50
    %v52 = vmul.f32 %v49, %v51
    %v53 = vadd.f32 %v49, %v52
    %vm54 = vweird.f32 %v45
    %vm55 = vweird.f32 %v49
    %vm56 = vmor %vm54, %vm55
    %v57 = vsel %vm56, %v49, %v53
    %v58 = vand.u32 2147483647, %v45
    %vm59 = vcmp.eq.f32.partialorder %v58, 8.507059e+37
    %v60 = vand.u32 %v45, 2147483648
    %v61 = vor.u32 1.1754944e-38, %v60
    %v62 = vsel %vm59, %v61, %v57
    %v63 = vmul.f32 %v48, %v62
    %64 = vst [vmem:[#allocation2] sm:$0xff] %v63
    %v65 = vlaneseq
    %v66 = vand.u32 %v65, 127
    %v67 = vlaneseq
    %v68 = vshrl.u32 %v67, 7
    %vm70 = vcmp.eq.s32.totalorder %v66, %v68
    %v71 = vlaneseq
    %v72 = vand.u32 %v71, 127
    %vm73 = vcmp.eq.s32.totalorder %v72, 5
    %v74 = vsel %vm73, 1.0, -1.0
    %v75 = vsel %vm70, %v74, 0.0
    %s76 = scalar_lea.vmem [#allocation2], 4
    %v77 = vld [vmem:[%s76] ss:$0 sm:$0xff]
    %v78 = vxor.u32 %v77, 2147483648
    %v79 = vlaneseq
    %v80 = vand.u32 %v79, 127
    %vm81 = vcmp.eq.s32.totalorder %v80, 4
    %v82 = vmul.f32 %v78, %v75
    %83 = vadd.xlane.f32.xlu0 %v82
    %v84 = vpop.xlane.xlu0 %83
    %v85 = vsel %vm81, %v84, %v75
    %s86 = scalar_lea.vmem [#allocation2], 3
    %v87 = vld [vmem:[%s86] ss:$0 sm:$0xff]
    %v88 = vxor.u32 %v87, 2147483648
    %v89 = vlaneseq
    %v90 = vand.u32 %v89, 127
    %vm91 = vcmp.eq.s32.totalorder %v90, 3
    %v92 = vmul.f32 %v88, %v85
    %93 = vadd.xlane.f32.xlu0 %v92
    %v94 = vpop.xlane.xlu0 %93
    %v95 = vsel %vm91, %v94, %v85
    %s96 = scalar_lea.vmem [#allocation2], 2
    %v97 = vld [vmem:[%s96] ss:$0 sm:$0xff]
    %v98 = vxor.u32 %v97, 2147483648
    %v99 = vlaneseq
    %v100 = vand.u32 %v99, 127
    %vm101 = vcmp.eq.s32.totalorder %v100, 2
    %v102 = vmul.f32 %v98, %v95
    %103 = vadd.xlane.f32.xlu0 %v102
    %v104 = vpop.xlane.xlu0 %103
    %v105 = vsel %vm101, %v104, %v95
    %s106 = scalar_lea.vmem [#allocation2], 1
    %v107 = vld [vmem:[%s106] ss:$0 sm:$0xff]
    %v108 = vxor.u32 %v107, 2147483648
    %v109 = vlaneseq
    %v110 = vand.u32 %v109, 127
    %vm111 = vcmp.eq.s32.totalorder %v110, 1
    %v112 = vmul.f32 %v108, %v105
    %113 = vadd.xlane.f32.xlu0 %v112
    %v114 = vpop.xlane.xlu0 %113
    %v115 = vsel %vm111, %v114, %v105
    %v116 = vld [vmem:[#allocation2] ss:$0 sm:$0xff]
    %v117 = vxor.u32 %v116, 2147483648
    %v118 = vlaneseq
    %v119 = vand.u32 %v118, 127
    %vm120 = vcmp.eq.s32.totalorder %v119, 0
    %v121 = vmul.f32 %v117, %v115
    %122 = vadd.xlane.f32.xlu0 %v121
    %v123 = vpop.xlane.xlu0 %122
    %v124 = vsel %vm120, %v123, %v115
    %v125 = vrcp.pop %v45
    %v126 = vmul.f32 %v45, %v125
    %v127 = vsub.f32 1.0, %v126
    %v128 = vmul.f32 %v125, %v127
    %v129 = vadd.f32 %v125, %v128
    %vm130 = vweird.f32 %v45
    %vm131 = vweird.f32 %v125
    %vm132 = vmor %vm130, %vm131
    %v133 = vsel %vm132, %v125, %v129
    %v134 = vand.u32 2147483647, %v45
    %vm135 = vcmp.eq.f32.partialorder %v134, 8.507059e+37
    %v136 = vand.u32 %v45, 2147483648
    %v137 = vor.u32 1.1754944e-38, %v136
    %v138 = vsel %vm135, %v137, %v133
    %v139 = vmul.f32 %v124, %v138
    %vm140 = vweird.f32 %v45
    %v141 = vsel %vm140, %v124, %v139
    %142 = vst [vmem:[#allocation1] sm:$0xff] %v141
    // Predicated region
    $region36: #{custom-call.47} parent=1 // pred_check
      _
    $region37: #{custom-call.47} parent=1 // pred_check_branch
      %144 = sbr.rel (0) target = $region39
    $region38: #{custom-call.47} parent=1 // pred_region
      // Predicated region
      $region40: #{custom-call.47} parent=38 // pred_check
        _
      $region41: #{custom-call.47} parent=38 // pred_check_branch
        %146 = sbr.rel (0) target = $region43
      $region42: #{custom-call.47} parent=38 // pred_region
        // Predicated region
        $region55: #{custom-call.47} parent=42 // pred_check
          _
        $region56: #{custom-call.47} parent=42 // pred_check_branch
          %162 = sbr.rel (0) target = $region58
        $region57: #{custom-call.47} parent=42 // pred_region
          loop: start=0, step=1, limit=1
          $region59: #{custom-call.47} parent=57 // loop_pre_header
            _
          $region60: #{custom-call.47} parent=57 // loop_header
            %s164 = sphi 0, %s168
            %p165 = scmp.ge.s32.totalorder %s164, 1
            %s169 = sphi [#allocation1], [#allocation1]
            %s170 = sphi %s1, %s1
          $region61: #{custom-call.47} parent=57 // loop_header_branch
            %167 = sbr.rel (%p165) target = $region65
          $region62: #{custom-call.47} parent=57 // loop_body
            %v171 = vld [vmem:[%s169] sm:$0xff]
            %172 = vst [vmem:[%s170] sm:$0xff] %v171
          $region63: #{custom-call.47} parent=57 // loop_footer
            %s168 = sadd.s32 1, %s164
          $region64: #{custom-call.47} parent=57 // loop_footer_branch
            %163 = sbr.rel target = $region60
          $region65: #{custom-call.47} parent=57 // loop_exit
            _
        $region58: #{custom-call.47} parent=42 // pred_fallthru
          _
        // Predicated region
        $region66: #{custom-call.47} parent=42 // pred_check
          _
        $region67: #{custom-call.47} parent=42 // pred_check_branch
          %174 = sbr.rel target = $region69
        $region68: #{custom-call.47} parent=42 // pred_region
          _
        $region69: #{custom-call.47} parent=42 // pred_fallthru
          _
      $region43: #{custom-call.47} parent=38 // pred_fallthru
        _
      // Predicated region
      $region44: #{custom-call.47} parent=38 // pred_check
        _
      $region45: #{custom-call.47} parent=38 // pred_check_branch
        %148 = sbr.rel target = $region47
      $region46: #{custom-call.47} parent=38 // pred_region
        %s150 = ssub.s32 256, 1
        loop: start=0, step=1, limit=1
        $region48: #{custom-call.47} parent=46 // loop_pre_header
          _
        $region49: #{custom-call.47} parent=46 // loop_header
          %s152 = sphi 0, %s156
          %p153 = scmp.ge.s32.totalorder %s152, 1
          %s157 = sphi [#allocation1], [#allocation1]
          %s158 = sphi %s1, %s1
        $region50: #{custom-call.47} parent=46 // loop_header_branch
          %155 = sbr.rel (%p153) target = $region54
        $region51: #{custom-call.47} parent=46 // loop_body
          %v159 = vld [vmem:[%s157] sm:%s150]
          %160 = vst [vmem:[%s158] sm:%s150] %v159
        $region52: #{custom-call.47} parent=46 // loop_footer
          %s156 = sadd.s32 1, %s152
        $region53: #{custom-call.47} parent=46 // loop_footer_branch
          %151 = sbr.rel target = $region49
        $region54: #{custom-call.47} parent=46 // loop_exit
          _
      $region47: #{custom-call.47} parent=38 // pred_fallthru
        _
    $region39: #{custom-call.47} parent=1 // pred_fallthru
      _
    %175 = vnop

// kernel: closed_call.44
$region0: #{closed_call.44}
  #allocation0 [shape = 'u32[]', space=smem, size = 0x4, offset = 0x4, fixed_abs, tag = 'smem constant byte address 0x4 - core index']
  #allocation1 [shape = 'u32[72,128]{1,0:T(1,128)}', space=vmem, size = 0x9000, scoped, tag = 'internal scratch']
  %s0 = inlined_call_operand.vmem [shape: bf16[1024,16], index: 0, kind: input, shape index: {}]
  %s1 = inlined_call_operand.vmem [shape: bf16[8,1024], index: 1, kind: input, shape index: {}]
  %s2 = inlined_call_operand.vmem [shape: bf16[16,256], index: 2, kind: input, shape index: {}]
  %s3 = inlined_call_operand.vmem [shape: f32[1,256], index: 3, kind: input, shape index: {}]
  %s4 = inlined_call_operand.vmem [shape: f32[2,8,256], index: 4, kind: output, shape index: {0}]
  %s5 = inlined_call_operand.vmem [shape: f32[2,1,256], index: 5, kind: output, shape index: {1}]
  %6 = xla_tuple %s4, %s5
  %s7 = sld [smem:[#allocation0]]
  $region61: #{closed_call.44} parent=0
    _
  %s9 = ssub.s32 1, %s7
  %s10 = scalar_select 0, %s9, %s7
  loop: start=0, step=1, limit=4
  $region2: #{closed_call.44} parent=0 // loop_pre_header
    _
  $region3: #{closed_call.44} parent=0 // loop_header
    %s12 = sphi 0, %s16
    %p13 = scmp.ge.s32.totalorder %s12, 4
    %s19 = sphi 0, %s31
    %s20 = sphi 0, %s27
    %s21 = sphi 0, %s19
    %s22 = sphi 0, %s20
    %s23 = sphi 0, %s21
    %s24 = sphi 0, %s22
    %s36 = sphi 0, %s38
    %s39 = sphi 0, %s36
    %s40 = sphi 0, %s39
    %s56 = sphi 0, %s40
    %s64 = sphi 0, %s66
    %s67 = sphi 0, %s64
    %s68 = sphi 0, %s67
    %s84 = sphi 0, %s68
    %s88 = sphi 0, %s88
    %s90 = sphi 0, %s88
    %s91 = sphi 0, %s90
    %s105 = sphi 0, %s91
    %s109 = sphi 0, %s109
    %s111 = sphi 0, %s109
    %s112 = sphi 0, %s111
    %s126 = sphi 0, %s112
    %s132 = sphi 0, %s134
    %s135 = sphi 0, %s132
    %s136 = sphi 0, %s135
    %s152 = sphi 0, %s136
    %s158 = sphi 0, %s160
    %s161 = sphi 0, %s158
    %s162 = sphi 0, %s161
    %s178 = sphi 0, %s162
  $region4: #{closed_call.44} parent=0 // loop_header_branch
    %15 = sbr.rel (%p13) target = $region8
  $region5: #{closed_call.44} parent=0 // loop_body
    %s17 = ssub.s32 %s12, 1
    %s18 = ssub.s32 %s12, 2
    %s25 = sadd.s32 1, %s20
    %p26 = scmp.ge.s32.totalorder %s25, 1
    %s27 = scalar_select %p26, 0, %s25
    %s28 = sadd.s32 1, %s19
    %s29 = scalar_select %p26, %s28, %s19
    %p30 = scmp.ge.s32.totalorder %s29, 2
    %s31 = scalar_select %p30, 0, %s29
    %s32 = sadd.s32 %s19, %s20
    %s33 = sadd.s32 %s31, %s27
    %s34 = ssub.s32 %s32, %s33
    %p35 = scmp.eq.s32.totalorder %s34, 0
    %s37 = sadd.s32 %s36, 1
    %s38 = scalar_select %p35, %s36, %s37
    %p41 = pneg %p35
    %p42 = scmp.eq.s32.totalorder %s12, 1
    %p43 = por %p41, %p42
    %p44 = scmp.ne.s32.totalorder %s36, %s39
    %p45 = scmp.eq.s32.totalorder %s12, 0
    %p46 = por %p44, %p45
    %p47 = scmp.ne.s32.totalorder %s36, %s39
    %p48 = scmp.eq.s32.totalorder %s17, 1
    %p49 = por %p47, %p48
    %p50 = scmp.ne.s32.totalorder %s39, %s40
    %p51 = scmp.eq.s32.totalorder %s17, 0
    %p52 = por %p50, %p51
    %p53 = scmp.ne.s32.totalorder %s39, %s40
    %p54 = scmp.eq.s32.totalorder %s18, 1
    %p55 = por %p53, %p54
    %p57 = scmp.ne.s32.totalorder %s40, %s56
    %p58 = scmp.eq.s32.totalorder %s18, 0
    %p59 = por %p57, %p58
    %s60 = sadd.s32 %s19, %s20
    %s61 = sadd.s32 %s31, %s27
    %s62 = ssub.s32 %s60, %s61
    %p63 = scmp.eq.s32.totalorder %s62, 0
    %s65 = sadd.s32 %s64, 1
    %s66 = scalar_select %p63, %s64, %s65
    %p69 = pneg %p63
    %p70 = scmp.eq.s32.totalorder %s12, 1
    %p71 = por %p69, %p70
    %p72 = scmp.ne.s32.totalorder %s64, %s67
    %p73 = scmp.eq.s32.totalorder %s12, 0
    %p74 = por %p72, %p73
    %p75 = scmp.ne.s32.totalorder %s64, %s67
    %p76 = scmp.eq.s32.totalorder %s17, 1
    %p77 = por %p75, %p76
    %p78 = scmp.ne.s32.totalorder %s67, %s68
    %p79 = scmp.eq.s32.totalorder %s17, 0
    %p80 = por %p78, %p79
    %p81 = scmp.ne.s32.totalorder %s67, %s68
    %p82 = scmp.eq.s32.totalorder %s18, 1
    %p83 = por %p81, %p82
    %p85 = scmp.ne.s32.totalorder %s68, %s84
    %p86 = scmp.eq.s32.totalorder %s18, 0
    %p87 = por %p85, %p86
    %s89 = sadd.s32 %s88, 1
    %p92 = scmp.eq.s32.totalorder %s12, 1
    %p93 = scmp.ne.s32.totalorder %s88, %s90
    %p94 = scmp.eq.s32.totalorder %s12, 0
    %p95 = por %p93, %p94
    %p96 = scmp.ne.s32.totalorder %s88, %s90
    %p97 = scmp.eq.s32.totalorder %s17, 1
    %p98 = por %p96, %p97
    %p99 = scmp.ne.s32.totalorder %s90, %s91
    %p100 = scmp.eq.s32.totalorder %s17, 0
    %p101 = por %p99, %p100
    %p102 = scmp.ne.s32.totalorder %s90, %s91
    %p103 = scmp.eq.s32.totalorder %s18, 1
    %p104 = por %p102, %p103
    %p106 = scmp.ne.s32.totalorder %s91, %s105
    %p107 = scmp.eq.s32.totalorder %s18, 0
    %p108 = por %p106, %p107
    %s110 = sadd.s32 %s109, 1
    %p113 = scmp.eq.s32.totalorder %s12, 1
    %p114 = scmp.ne.s32.totalorder %s109, %s111
    %p115 = scmp.eq.s32.totalorder %s12, 0
    %p116 = por %p114, %p115
    %p117 = scmp.ne.s32.totalorder %s109, %s111
    %p118 = scmp.eq.s32.totalorder %s17, 1
    %p119 = por %p117, %p118
    %p120 = scmp.ne.s32.totalorder %s111, %s112
    %p121 = scmp.eq.s32.totalorder %s17, 0
    %p122 = por %p120, %p121
    %p123 = scmp.ne.s32.totalorder %s111, %s112
    %p124 = scmp.eq.s32.totalorder %s18, 1
    %p125 = por %p123, %p124
    %p127 = scmp.ne.s32.totalorder %s112, %s126
    %p128 = scmp.eq.s32.totalorder %s18, 0
    %p129 = por %p127, %p128
    %s130 = ssub.s32 %s19, %s31
    %p131 = scmp.eq.s32.totalorder %s130, 0
    %s133 = sadd.s32 %s132, 1
    %s134 = scalar_select %p131, %s132, %s133
    %p137 = pneg %p131
    %p138 = scmp.eq.s32.totalorder %s12, 1
    %p139 = por %p137, %p138
    %p140 = scmp.ne.s32.totalorder %s132, %s135
    %p141 = scmp.eq.s32.totalorder %s12, 0
    %p142 = por %p140, %p141
    %p143 = scmp.ne.s32.totalorder %s132, %s135
    %p144 = scmp.eq.s32.totalorder %s17, 1
    %p145 = por %p143, %p144
    %p146 = scmp.ne.s32.totalorder %s135, %s136
    %p147 = scmp.eq.s32.totalorder %s17, 0
    %p148 = por %p146, %p147
    %p149 = scmp.ne.s32.totalorder %s135, %s136
    %p150 = scmp.eq.s32.totalorder %s18, 1
    %p151 = por %p149, %p150
    %p153 = scmp.ne.s32.totalorder %s136, %s152
    %p154 = scmp.eq.s32.totalorder %s18, 0
    %p155 = por %p153, %p154
    %s156 = ssub.s32 %s19, %s31
    %p157 = scmp.eq.s32.totalorder %s156, 0
    %s159 = sadd.s32 %s158, 1
    %s160 = scalar_select %p157, %s158, %s159
    %p163 = pneg %p157
    %p164 = scmp.eq.s32.totalorder %s12, 1
    %p165 = por %p163, %p164
    %p166 = scmp.ne.s32.totalorder %s158, %s161
    %p167 = scmp.eq.s32.totalorder %s12, 0
    %p168 = por %p166, %p167
    %p169 = scmp.ne.s32.totalorder %s158, %s161
    %p170 = scmp.eq.s32.totalorder %s17, 1
    %p171 = por %p169, %p170
    %p172 = scmp.ne.s32.totalorder %s161, %s162
    %p173 = scmp.eq.s32.totalorder %s17, 0
    %p174 = por %p172, %p173
    %p175 = scmp.ne.s32.totalorder %s161, %s162
    %p176 = scmp.eq.s32.totalorder %s18, 1
    %p177 = por %p175, %p176
    %p179 = scmp.ne.s32.totalorder %s162, %s178
    %p180 = scmp.eq.s32.totalorder %s18, 0
    %p181 = por %p179, %p180
    %p182 = scmp.le.s32.totalorder 1, %s12
    %p183 = scmp.lt.s32.totalorder %s12, 3
    %p184 = pnand %p182, %p183
    %p185 = pneg %p184
    // Predicated region
    $region9: #{closed_call.44} parent=5 // pred_check
      _
    $region10: #{closed_call.44} parent=5 // pred_check_branch
      %187 = sbr.rel (%p184) target = $region12
    $region11: #{closed_call.44} parent=5 // pred_region
      %s188 = ssub.s32 %s12, 1
      // Predicated region
      $region13: #{closed_call.44} parent=11 // pred_check
        %p189 = pneg %p101
      $region14: #{closed_call.44} parent=11 // pred_check_branch
        %191 = sbr.rel (%p189) target = $region16
      $region15: #{closed_call.44} parent=11 // pred_region
        _
      $region16: #{closed_call.44} parent=11 // pred_fallthru
        _
      // Predicated region
      $region17: #{closed_call.44} parent=11 // pred_check
        %p192 = pneg %p122
      $region18: #{closed_call.44} parent=11 // pred_check_branch
        %194 = sbr.rel (%p192) target = $region20
      $region19: #{closed_call.44} parent=11 // pred_region
        _
      $region20: #{closed_call.44} parent=11 // pred_fallthru
        _
    $region12: #{closed_call.44} parent=5 // pred_fallthru
      _
    %p195 = scmp.lt.s32.totalorder %s12, 2
    // Predicated region
    $region21: #{closed_call.44} parent=5 // pred_check
      %p196 = pneg %p195
    $region22: #{closed_call.44} parent=5 // pred_check_branch
      %198 = sbr.rel (%p196) target = $region24
    $region23: #{closed_call.44} parent=5 // pred_region
      // Predicated region
      $region25: #{closed_call.44} parent=23 // pred_check
        %p199 = pneg %p46
      $region26: #{closed_call.44} parent=23 // pred_check_branch
        %201 = sbr.rel (%p199) target = $region28
      $region27: #{closed_call.44} parent=23 // pred_region
        %s202 = sadd.s32 %s19, %s20
        %s203 = smul.u32 64, %s202
        %p204 = scmp.lt.s32.totalorder %s203, 127
        %s205 = scalar_select %p204, %s203, 127
        %s206 = smul.addr %s205, 4
        %s207 = scalar_lea.vmem %s0, %s206
        %s208 = sadd.s32 %s19, %s20
        %s209 = smul.u32 64, %s208
      $region28: #{closed_call.44} parent=23 // pred_fallthru
        _
      // Predicated region
      $region29: #{closed_call.44} parent=23 // pred_check
        %p210 = pneg %p74
      $region30: #{closed_call.44} parent=23 // pred_check_branch
        %212 = sbr.rel (%p210) target = $region32
      $region31: #{closed_call.44} parent=23 // pred_region
        %s213 = sadd.s32 %s19, %s20
        %s214 = smul.u32 4, %s213
        %p215 = scmp.lt.s32.totalorder %s214, 7
        %s216 = scalar_select %p215, %s214, 7
        %s217 = smul.addr %s216, 4
        %s218 = scalar_lea.vmem %s1, %s217
        %s219 = sadd.s32 %s19, %s20
        %s220 = smul.u32 4, %s219
      $region32: #{closed_call.44} parent=23 // pred_fallthru
        _
    $region24: #{closed_call.44} parent=5 // pred_fallthru
      _
    %p221 = scmp.le.s32.totalorder 1, %s12
    %p222 = scmp.lt.s32.totalorder %s12, 3
    %p223 = pnand %p221, %p222
    %p224 = pneg %p223
    // Predicated region
    $region33: #{closed_call.44} parent=5 // pred_check
      _
    $region34: #{closed_call.44} parent=5 // pred_check_branch
      %226 = sbr.rel (%p223) target = $region36
    $region35: #{closed_call.44} parent=5 // pred_region
      %s227 = ssub.s32 %s12, 1
      %s228 = sadd.s32 %s21, %s22
      %s229 = smul.u32 64, %s228
      %p230 = scmp.lt.s32.totalorder %s229, 127
      %s231 = scalar_select %p230, %s229, 127
      %s232 = smul.addr %s231, 4
      %s233 = scalar_lea.vmem %s0, %s232
      %p234 = pneg %p52
      %p235 = pneg %p49
      %s236 = sadd.s32 %s21, %s22
      %s237 = smul.u32 4, %s236
      %p238 = scmp.lt.s32.totalorder %s237, 7
      %s239 = scalar_select %p238, %s237, 7
      %s240 = smul.addr %s239, 4
      %s241 = scalar_lea.vmem %s1, %s240
      %p242 = pneg %p80
      %p243 = pneg %p77
      %p244 = pneg %p101
      %p245 = pneg %p98
      %p246 = pneg %p122
      %p247 = pneg %p119
      %p248 = pneg %p148
      %p249 = pneg %p145
      %p250 = scmp.lt.s32.totalorder %s21, 1
      %s251 = scalar_select %p250, %s21, 1
      %s252 = smul.addr %s251, 2
      %s253 = smul.addr %s252, 8
      %s254 = scalar_lea.vmem %s4, %s253
      %p255 = pneg %p174
      %p256 = pneg %p171
      %p257 = scmp.lt.s32.totalorder %s21, 1
      %s258 = scalar_select %p257, %s21, 1
      %s259 = smul.addr %s258, 2
      %s260 = scalar_lea.vmem %s5, %s259
      %s261 = sadd.s32 %s21, %s22
      %s262 = smul.u32 64, %s261
      %p263 = scmp.lt.s32.totalorder %s262, 127
      %s264 = scalar_select %p263, %s262, 127
      %s265 = smul.addr %s264, 4
      %s266 = scalar_lea.vmem %s0, %s265
      %s267 = sadd.s32 %s21, %s22
      %s268 = smul.u32 64, %s267
      %s269 = sadd.s32 %s21, %s22
      %s270 = smul.u32 4, %s269
      %p271 = scmp.lt.s32.totalorder %s270, 7
      %s272 = scalar_select %p271, %s270, 7
      %s273 = smul.addr %s272, 4
      %s274 = scalar_lea.vmem %s1, %s273
      %s275 = sadd.s32 %s21, %s22
      %s276 = smul.u32 4, %s275
      %p277 = scmp.lt.s32.totalorder %s21, 1
      %s278 = scalar_select %p277, %s21, 1
      %s279 = smul.addr %s278, 2
      %s280 = smul.addr %s279, 8
      %s281 = scalar_lea.vmem %s4, %s280
      %p282 = scmp.lt.s32.totalorder %s21, 1
      %s283 = scalar_select %p282, %s21, 1
      %s284 = smul.addr %s283, 2
      %s285 = scalar_lea.vmem %s5, %s284
      %v287 = vld [vmem:[%s266] sm:$0xf]
      %v288 = vld [vmem:[%s266 + $0x4] sm:$0xf]
      %v289 = vld [vmem:[%s266 + $0x8] sm:$0xf]
      %v290 = vld [vmem:[%s266 + $0xc] sm:$0xf]
      %v291 = vld [vmem:[%s266 + $0x10] sm:$0xf]
      %v292 = vld [vmem:[%s266 + $0x14] sm:$0xf]
      %v293 = vld [vmem:[%s266 + $0x18] sm:$0xf]
      %v294 = vld [vmem:[%s266 + $0x1c] sm:$0xf]
      %v295 = vld [vmem:[%s266 + $0x20] sm:$0xf]
      %v296 = vld [vmem:[%s266 + $0x24] sm:$0xf]
      %v297 = vld [vmem:[%s266 + $0x28] sm:$0xf]
      %v298 = vld [vmem:[%s266 + $0x2c] sm:$0xf]
      %v299 = vld [vmem:[%s266 + $0x30] sm:$0xf]
      %v300 = vld [vmem:[%s266 + $0x34] sm:$0xf]
      %v301 = vld [vmem:[%s266 + $0x38] sm:$0xf]
      %v302 = vld [vmem:[%s266 + $0x3c] sm:$0xf]
      %v303 = vld [vmem:[%s266 + $0x40] sm:$0xf]
      %v304 = vld [vmem:[%s266 + $0x44] sm:$0xf]
      %v305 = vld [vmem:[%s266 + $0x48] sm:$0xf]
      %v306 = vld [vmem:[%s266 + $0x4c] sm:$0xf]
      %v307 = vld [vmem:[%s266 + $0x50] sm:$0xf]
      %v308 = vld [vmem:[%s266 + $0x54] sm:$0xf]
      %v309 = vld [vmem:[%s266 + $0x58] sm:$0xf]
      %v310 = vld [vmem:[%s266 + $0x5c] sm:$0xf]
      %v311 = vld [vmem:[%s266 + $0x60] sm:$0xf]
      %v312 = vld [vmem:[%s266 + $0x64] sm:$0xf]
      %v313 = vld [vmem:[%s266 + $0x68] sm:$0xf]
      %v314 = vld [vmem:[%s266 + $0x6c] sm:$0xf]
      %v315 = vld [vmem:[%s266 + $0x70] sm:$0xf]
      %v316 = vld [vmem:[%s266 + $0x74] sm:$0xf]
      %v317 = vld [vmem:[%s266 + $0x78] sm:$0xf]
      %v318 = vld [vmem:[%s266 + $0x7c] sm:$0xf]
      %v319 = vld [vmem:[%s266 + $0x80] sm:$0xf]
      %v320 = vld [vmem:[%s266 + $0x84] sm:$0xf]
      %v321 = vld [vmem:[%s266 + $0x88] sm:$0xf]
      %v322 = vld [vmem:[%s266 + $0x8c] sm:$0xf]
      %v323 = vld [vmem:[%s266 + $0x90] sm:$0xf]
      %v324 = vld [vmem:[%s266 + $0x94] sm:$0xf]
      %v325 = vld [vmem:[%s266 + $0x98] sm:$0xf]
      %v326 = vld [vmem:[%s266 + $0x9c] sm:$0xf]
      %v327 = vld [vmem:[%s266 + $0xa0] sm:$0xf]
      %v328 = vld [vmem:[%s266 + $0xa4] sm:$0xf]
      %v329 = vld [vmem:[%s266 + $0xa8] sm:$0xf]
      %v330 = vld [vmem:[%s266 + $0xac] sm:$0xf]
      %v331 = vld [vmem:[%s266 + $0xb0] sm:$0xf]
      %v332 = vld [vmem:[%s266 + $0xb4] sm:$0xf]
      %v333 = vld [vmem:[%s266 + $0xb8] sm:$0xf]
      %v334 = vld [vmem:[%s266 + $0xbc] sm:$0xf]
      %v335 = vld [vmem:[%s266 + $0xc0] sm:$0xf]
      %v336 = vld [vmem:[%s266 + $0xc4] sm:$0xf]
      %v337 = vld [vmem:[%s266 + $0xc8] sm:$0xf]
      %v338 = vld [vmem:[%s266 + $0xcc] sm:$0xf]
      %v339 = vld [vmem:[%s266 + $0xd0] sm:$0xf]
      %v340 = vld [vmem:[%s266 + $0xd4] sm:$0xf]
      %v341 = vld [vmem:[%s266 + $0xd8] sm:$0xf]
      %v342 = vld [vmem:[%s266 + $0xdc] sm:$0xf]
      %v343 = vld [vmem:[%s266 + $0xe0] sm:$0xf]
      %v344 = vld [vmem:[%s266 + $0xe4] sm:$0xf]
      %v345 = vld [vmem:[%s266 + $0xe8] sm:$0xf]
      %v346 = vld [vmem:[%s266 + $0xec] sm:$0xf]
      %v347 = vld [vmem:[%s266 + $0xf0] sm:$0xf]
      %v348 = vld [vmem:[%s266 + $0xf4] sm:$0xf]
      %v349 = vld [vmem:[%s266 + $0xf8] sm:$0xf]
      %v350 = vld [vmem:[%s266 + $0xfc] sm:$0xf]
      %v351 = vld [vmem:[%s2] sm:$0xff]
      %v352 = vld [vmem:[%s2 + $0x8] sm:$0xff]
      %v353 = vld [vmem:[%s3] sm:$0x3]
      %v355 = vperm.slane %v353, 0
      %v356 = vperm.slane %v353, 1
      %v423 = vunpack.c.l.b16 %v287
      %v424 = vunpack.c.l.b16 %v288
      %v425 = vunpack.c.l.b16 %v289
      %v426 = vunpack.c.l.b16 %v290
      %v427 = vunpack.c.l.b16 %v291
      %v428 = vunpack.c.l.b16 %v292
      %v429 = vunpack.c.l.b16 %v293
      %v430 = vunpack.c.l.b16 %v294
      %v431 = vunpack.c.l.b16 %v295
      %v432 = vunpack.c.l.b16 %v296
      %v433 = vunpack.c.l.b16 %v297
      %v434 = vunpack.c.l.b16 %v298
      %v435 = vunpack.c.l.b16 %v299
      %v436 = vunpack.c.l.b16 %v300
      %v437 = vunpack.c.l.b16 %v301
      %v438 = vunpack.c.l.b16 %v302
      %v439 = vunpack.c.l.b16 %v303
      %v440 = vunpack.c.l.b16 %v304
      %v441 = vunpack.c.l.b16 %v305
      %v442 = vunpack.c.l.b16 %v306
      %v443 = vunpack.c.l.b16 %v307
      %v444 = vunpack.c.l.b16 %v308
      %v445 = vunpack.c.l.b16 %v309
      %v446 = vunpack.c.l.b16 %v310
      %v447 = vunpack.c.l.b16 %v311
      %v448 = vunpack.c.l.b16 %v312
      %v449 = vunpack.c.l.b16 %v313
      %v450 = vunpack.c.l.b16 %v314
      %v451 = vunpack.c.l.b16 %v315
      %v452 = vunpack.c.l.b16 %v316
      %v453 = vunpack.c.l.b16 %v317
      %v454 = vunpack.c.l.b16 %v318
      %v455 = vunpack.c.l.b16 %v319
      %v456 = vunpack.c.l.b16 %v320
      %v457 = vunpack.c.l.b16 %v321
      %v458 = vunpack.c.l.b16 %v322
      %v459 = vunpack.c.l.b16 %v323
      %v460 = vunpack.c.l.b16 %v324
      %v461 = vunpack.c.l.b16 %v325
      %v462 = vunpack.c.l.b16 %v326
      %v463 = vunpack.c.l.b16 %v327
      %v464 = vunpack.c.l.b16 %v328
      %v465 = vunpack.c.l.b16 %v329
      %v466 = vunpack.c.l.b16 %v330
      %v467 = vunpack.c.l.b16 %v331
      %v468 = vunpack.c.l.b16 %v332
      %v469 = vunpack.c.l.b16 %v333
      %v470 = vunpack.c.l.b16 %v334
      %v471 = vunpack.c.l.b16 %v335
      %v472 = vunpack.c.l.b16 %v336
      %v473 = vunpack.c.l.b16 %v337
      %v474 = vunpack.c.l.b16 %v338
      %v475 = vunpack.c.l.b16 %v339
      %v476 = vunpack.c.l.b16 %v340
      %v477 = vunpack.c.l.b16 %v341
      %v478 = vunpack.c.l.b16 %v342
      %v479 = vunpack.c.l.b16 %v343
      %v480 = vunpack.c.l.b16 %v344
      %v481 = vunpack.c.l.b16 %v345
      %v482 = vunpack.c.l.b16 %v346
      %v483 = vunpack.c.l.b16 %v347
      %v484 = vunpack.c.l.b16 %v348
      %v485 = vunpack.c.l.b16 %v349
      %v486 = vunpack.c.l.b16 %v350
      %v487 = vpack.c.b16 %v424, %v423
      %v488 = vpack.c.b16 %v426, %v425
      %v489 = vpack.c.b16 %v428, %v427
      %v490 = vpack.c.b16 %v430, %v429
      %v491 = vpack.c.b16 %v432, %v431
      %v492 = vpack.c.b16 %v434, %v433
      %v493 = vpack.c.b16 %v436, %v435
      %v494 = vpack.c.b16 %v438, %v437
      %v495 = vpack.c.b16 %v440, %v439
      %v496 = vpack.c.b16 %v442, %v441
      %v497 = vpack.c.b16 %v444, %v443
      %v498 = vpack.c.b16 %v446, %v445
      %v499 = vpack.c.b16 %v448, %v447
      %v500 = vpack.c.b16 %v450, %v449
      %v501 = vpack.c.b16 %v452, %v451
      %v502 = vpack.c.b16 %v454, %v453
      %v503 = vpack.c.b16 %v456, %v455
      %v504 = vpack.c.b16 %v458, %v457
      %v505 = vpack.c.b16 %v460, %v459
      %v506 = vpack.c.b16 %v462, %v461
      %v507 = vpack.c.b16 %v464, %v463
      %v508 = vpack.c.b16 %v466, %v465
      %v509 = vpack.c.b16 %v468, %v467
      %v510 = vpack.c.b16 %v470, %v469
      %v511 = vpack.c.b16 %v472, %v471
      %v512 = vpack.c.b16 %v474, %v473
      %v513 = vpack.c.b16 %v476, %v475
      %v514 = vpack.c.b16 %v478, %v477
      %v515 = vpack.c.b16 %v480, %v479
      %v516 = vpack.c.b16 %v482, %v481
      %v517 = vpack.c.b16 %v484, %v483
      %v518 = vpack.c.b16 %v486, %v485
      %v521 = vunpack.c.l.b16 %v351
      %v522 = vunpack.c.h.b16 %v351
      %v523 = vunpack.c.l.b16 %v352
      %v524 = vunpack.c.h.b16 %v352
      %v525 = vpack.c.b16 %v523, %v521
      %v526 = vpack.c.b16 %v524, %v522
      %vm529 = vcmask 130048
      %v531 = vsel %vm529, %v487, 0
      %v534 = vsel %vm529, %v488, 0
      %v537 = vsel %vm529, %v489, 0
      %v540 = vsel %vm529, %v490, 0
      %v543 = vsel %vm529, %v491, 0
      %v546 = vsel %vm529, %v492, 0
      %v549 = vsel %vm529, %v493, 0
      %v552 = vsel %vm529, %v494, 0
      %v555 = vsel %vm529, %v495, 0
      %v558 = vsel %vm529, %v496, 0
      %v561 = vsel %vm529, %v497, 0
      %v564 = vsel %vm529, %v498, 0
      %v567 = vsel %vm529, %v499, 0
      %v570 = vsel %vm529, %v500, 0
      %v573 = vsel %vm529, %v501, 0
      %v576 = vsel %vm529, %v502, 0
      %v579 = vsel %vm529, %v503, 0
      %v582 = vsel %vm529, %v504, 0
      %v585 = vsel %vm529, %v505, 0
      %v588 = vsel %vm529, %v506, 0
      %v591 = vsel %vm529, %v507, 0
      %v594 = vsel %vm529, %v508, 0
      %v597 = vsel %vm529, %v509, 0
      %v600 = vsel %vm529, %v510, 0
      %v603 = vsel %vm529, %v511, 0
      %v606 = vsel %vm529, %v512, 0
      %v609 = vsel %vm529, %v513, 0
      %v612 = vsel %vm529, %v514, 0
      %v615 = vsel %vm529, %v515, 0
      %v618 = vsel %vm529, %v516, 0
      %v621 = vsel %vm529, %v517, 0
      %v624 = vsel %vm529, %v518, 0
      %626 = vmatpush.bf16.msra.mxu0 0
      %627 = vmatpush.bf16.msra.mxu0 0
      %628 = vmatpush.bf16.msra.mxu0 0
      %629 = vmatpush.bf16.msra.mxu0 0
      %630 = vmatpush.bf16.msra.mxu0 0
      %631 = vmatpush.bf16.msra.mxu0 0
      %632 = vmatpush.bf16.msra.mxu0 0
      %633 = vmatpush.bf16.msra.mxu0 %v525
      %634 = vmatmul.bf16.gmra.mxu0 %v531
      %v635 = vpop.f32.mrf.mxu0
      %v636 = vadd.f32 %v355, %v635
      %v637 = vpop.f32.mrf.mxu0
      %v638 = vadd.f32 %v355, %v637
      %639 = vmatmul.bf16.gmra.mxu0 %v534
      %v640 = vpop.f32.mrf.mxu0
      %v641 = vadd.f32 %v355, %v640
      %v642 = vpop.f32.mrf.mxu0
      %v643 = vadd.f32 %v355, %v642
      %644 = vmatmul.bf16.gmra.mxu0 %v537
      %v645 = vpop.f32.mrf.mxu0
      %v646 = vadd.f32 %v355, %v645
      %v647 = vpop.f32.mrf.mxu0
      %v648 = vadd.f32 %v355, %v647
      %649 = vmatmul.bf16.gmra.mxu0 %v540
      %v650 = vpop.f32.mrf.mxu0
      %v651 = vadd.f32 %v355, %v650
      %v652 = vpop.f32.mrf.mxu0
      %v653 = vadd.f32 %v355, %v652
      %654 = vmatmul.bf16.gmra.mxu0 %v543
      %v655 = vpop.f32.mrf.mxu0
      %v656 = vadd.f32 %v355, %v655
      %v657 = vpop.f32.mrf.mxu0
      %v658 = vadd.f32 %v355, %v657
      %659 = vmatmul.bf16.gmra.mxu0 %v546
      %v660 = vpop.f32.mrf.mxu0
      %v661 = vadd.f32 %v355, %v660
      %v662 = vpop.f32.mrf.mxu0
      %v663 = vadd.f32 %v355, %v662
      %664 = vmatmul.bf16.gmra.mxu0 %v549
      %v665 = vpop.f32.mrf.mxu0
      %v666 = vadd.f32 %v355, %v665
      %v667 = vpop.f32.mrf.mxu0
      %v668 = vadd.f32 %v355, %v667
      %669 = vmatmul.bf16.gmra.mxu0 %v552
      %v670 = vpop.f32.mrf.mxu0
      %v671 = vadd.f32 %v355, %v670
      %v672 = vpop.f32.mrf.mxu0
      %v673 = vadd.f32 %v355, %v672
      %674 = vmatmul.bf16.gmra.mxu0 %v555
      %v675 = vpop.f32.mrf.mxu0
      %v676 = vadd.f32 %v355, %v675
      %v677 = vpop.f32.mrf.mxu0
      %v678 = vadd.f32 %v355, %v677
      %679 = vmatmul.bf16.gmra.mxu0 %v558
      %v680 = vpop.f32.mrf.mxu0
      %v681 = vadd.f32 %v355, %v680
      %v682 = vpop.f32.mrf.mxu0
      %v683 = vadd.f32 %v355, %v682
      %684 = vmatmul.bf16.gmra.mxu0 %v561
      %v685 = vpop.f32.mrf.mxu0
      %v686 = vadd.f32 %v355, %v685
      %v687 = vpop.f32.mrf.mxu0
      %v688 = vadd.f32 %v355, %v687
      %689 = vmatmul.bf16.gmra.mxu0 %v564
      %v690 = vpop.f32.mrf.mxu0
      %v691 = vadd.f32 %v355, %v690
      %v692 = vpop.f32.mrf.mxu0
      %v693 = vadd.f32 %v355, %v692
      %694 = vmatmul.bf16.gmra.mxu0 %v567
      %v695 = vpop.f32.mrf.mxu0
      %v696 = vadd.f32 %v355, %v695
      %v697 = vpop.f32.mrf.mxu0
      %v698 = vadd.f32 %v355, %v697
      %699 = vmatmul.bf16.gmra.mxu0 %v570
      %v700 = vpop.f32.mrf.mxu0
      %v701 = vadd.f32 %v355, %v700
      %v702 = vpop.f32.mrf.mxu0
      %v703 = vadd.f32 %v355, %v702
      %704 = vmatmul.bf16.gmra.mxu0 %v573
      %v705 = vpop.f32.mrf.mxu0
      %v706 = vadd.f32 %v355, %v705
      %v707 = vpop.f32.mrf.mxu0
      %v708 = vadd.f32 %v355, %v707
      %709 = vmatmul.bf16.gmra.mxu0 %v576
      %v710 = vpop.f32.mrf.mxu0
      %v711 = vadd.f32 %v355, %v710
      %v712 = vpop.f32.mrf.mxu0
      %v713 = vadd.f32 %v355, %v712
      %714 = vmatmul.bf16.gmra.mxu0 %v579
      %v715 = vpop.f32.mrf.mxu0
      %v716 = vadd.f32 %v355, %v715
      %v717 = vpop.f32.mrf.mxu0
      %v718 = vadd.f32 %v355, %v717
      %719 = vmatmul.bf16.gmra.mxu0 %v582
      %v720 = vpop.f32.mrf.mxu0
      %v721 = vadd.f32 %v355, %v720
      %v722 = vpop.f32.mrf.mxu0
      %v723 = vadd.f32 %v355, %v722
      %724 = vmatmul.bf16.gmra.mxu0 %v585
      %v725 = vpop.f32.mrf.mxu0
      %v726 = vadd.f32 %v355, %v725
      %v727 = vpop.f32.mrf.mxu0
      %v728 = vadd.f32 %v355, %v727
      %729 = vmatmul.bf16.gmra.mxu0 %v588
      %v730 = vpop.f32.mrf.mxu0
      %v731 = vadd.f32 %v355, %v730
      %v732 = vpop.f32.mrf.mxu0
      %v733 = vadd.f32 %v355, %v732
      %734 = vmatmul.bf16.gmra.mxu0 %v591
      %v735 = vpop.f32.mrf.mxu0
      %v736 = vadd.f32 %v355, %v735
      %v737 = vpop.f32.mrf.mxu0
      %v738 = vadd.f32 %v355, %v737
      %739 = vmatmul.bf16.gmra.mxu0 %v594
      %v740 = vpop.f32.mrf.mxu0
      %v741 = vadd.f32 %v355, %v740
      %v742 = vpop.f32.mrf.mxu0
      %v743 = vadd.f32 %v355, %v742
      %744 = vmatmul.bf16.gmra.mxu0 %v597
      %v745 = vpop.f32.mrf.mxu0
      %v746 = vadd.f32 %v355, %v745
      %v747 = vpop.f32.mrf.mxu0
      %v748 = vadd.f32 %v355, %v747
      %749 = vmatmul.bf16.gmra.mxu0 %v600
      %v750 = vpop.f32.mrf.mxu0
      %v751 = vadd.f32 %v355, %v750
      %v752 = vpop.f32.mrf.mxu0
      %v753 = vadd.f32 %v355, %v752
      %754 = vmatmul.bf16.gmra.mxu0 %v603
      %v755 = vpop.f32.mrf.mxu0
      %v756 = vadd.f32 %v355, %v755
      %v757 = vpop.f32.mrf.mxu0
      %v758 = vadd.f32 %v355, %v757
      %759 = vmatmul.bf16.gmra.mxu0 %v606
      %v760 = vpop.f32.mrf.mxu0
      %v761 = vadd.f32 %v355, %v760
      %v762 = vpop.f32.mrf.mxu0
      %v763 = vadd.f32 %v355, %v762
      %764 = vmatmul.bf16.gmra.mxu0 %v609
      %v765 = vpop.f32.mrf.mxu0
      %v766 = vadd.f32 %v355, %v765
      %v767 = vpop.f32.mrf.mxu0
      %v768 = vadd.f32 %v355, %v767
      %769 = vmatmul.bf16.gmra.mxu0 %v612
      %v770 = vpop.f32.mrf.mxu0
      %v771 = vadd.f32 %v355, %v770
      %v772 = vpop.f32.mrf.mxu0
      %v773 = vadd.f32 %v355, %v772
      %774 = vmatmul.bf16.gmra.mxu0 %v615
      %v775 = vpop.f32.mrf.mxu0
      %v776 = vadd.f32 %v355, %v775
      %v777 = vpop.f32.mrf.mxu0
      %v778 = vadd.f32 %v355, %v777
      %779 = vmatmul.bf16.gmra.mxu0 %v618
      %v780 = vpop.f32.mrf.mxu0
      %v781 = vadd.f32 %v355, %v780
      %v782 = vpop.f32.mrf.mxu0
      %v783 = vadd.f32 %v355, %v782
      %784 = vmatmul.bf16.gmra.mxu0 %v621
      %v785 = vpop.f32.mrf.mxu0
      %v786 = vadd.f32 %v355, %v785
      %v787 = vpop.f32.mrf.mxu0
      %v788 = vadd.f32 %v355, %v787
      %789 = vmatmul.bf16.gmra.mxu0 %v624
      %v790 = vpop.f32.mrf.mxu0
      %v791 = vadd.f32 %v355, %v790
      %v792 = vpop.f32.mrf.mxu0
      %v793 = vadd.f32 %v355, %v792
      %794 = vdwg.mxu0
      %795 = vmatpush.bf16.msra.mxu0 0
      %796 = vmatpush.bf16.msra.mxu0 0
      %797 = vmatpush.bf16.msra.mxu0 0
      %798 = vmatpush.bf16.msra.mxu0 0
      %799 = vmatpush.bf16.msra.mxu0 0
      %800 = vmatpush.bf16.msra.mxu0 0
      %801 = vmatpush.bf16.msra.mxu0 0
      %802 = vmatpush.bf16.msra.mxu0 %v526
      %803 = vmatmul.bf16.gmra.mxu0 %v531
      %v804 = vpop.f32.mrf.mxu0
      %v805 = vadd.f32 %v356, %v804
      %v806 = vpop.f32.mrf.mxu0
      %v807 = vadd.f32 %v356, %v806
      %808 = vmatmul.bf16.gmra.mxu0 %v534
      %v809 = vpop.f32.mrf.mxu0
      %v810 = vadd.f32 %v356, %v809
      %v811 = vpop.f32.mrf.mxu0
      %v812 = vadd.f32 %v356, %v811
      %813 = vmatmul.bf16.gmra.mxu0 %v537
      %v814 = vpop.f32.mrf.mxu0
      %v815 = vadd.f32 %v356, %v814
      %v816 = vpop.f32.mrf.mxu0
      %v817 = vadd.f32 %v356, %v816
      %818 = vmatmul.bf16.gmra.mxu0 %v540
      %v819 = vpop.f32.mrf.mxu0
      %v820 = vadd.f32 %v356, %v819
      %v821 = vpop.f32.mrf.mxu0
      %v822 = vadd.f32 %v356, %v821
      %823 = vmatmul.bf16.gmra.mxu0 %v543
      %v824 = vpop.f32.mrf.mxu0
      %v825 = vadd.f32 %v356, %v824
      %v826 = vpop.f32.mrf.mxu0
      %v827 = vadd.f32 %v356, %v826
      %828 = vmatmul.bf16.gmra.mxu0 %v546
      %v829 = vpop.f32.mrf.mxu0
      %v830 = vadd.f32 %v356, %v829
      %v831 = vpop.f32.mrf.mxu0
      %v832 = vadd.f32 %v356, %v831
      %833 = vmatmul.bf16.gmra.mxu0 %v549
      %v834 = vpop.f32.mrf.mxu0
      %v835 = vadd.f32 %v356, %v834
      %v836 = vpop.f32.mrf.mxu0
      %v837 = vadd.f32 %v356, %v836
      %838 = vmatmul.bf16.gmra.mxu0 %v552
      %v839 = vpop.f32.mrf.mxu0
      %v840 = vadd.f32 %v356, %v839
      %v841 = vpop.f32.mrf.mxu0
      %v842 = vadd.f32 %v356, %v841
      %843 = vmatmul.bf16.gmra.mxu0 %v555
      %v844 = vpop.f32.mrf.mxu0
      %v845 = vadd.f32 %v356, %v844
      %v846 = vpop.f32.mrf.mxu0
      %v847 = vadd.f32 %v356, %v846
      %848 = vmatmul.bf16.gmra.mxu0 %v558
      %v849 = vpop.f32.mrf.mxu0
      %v850 = vadd.f32 %v356, %v849
      %v851 = vpop.f32.mrf.mxu0
      %v852 = vadd.f32 %v356, %v851
      %853 = vmatmul.bf16.gmra.mxu0 %v561
      %v854 = vpop.f32.mrf.mxu0
      %v855 = vadd.f32 %v356, %v854
      %v856 = vpop.f32.mrf.mxu0
      %v857 = vadd.f32 %v356, %v856
      %858 = vmatmul.bf16.gmra.mxu0 %v564
      %v859 = vpop.f32.mrf.mxu0
      %v860 = vadd.f32 %v356, %v859
      %v861 = vpop.f32.mrf.mxu0
      %v862 = vadd.f32 %v356, %v861
      %863 = vmatmul.bf16.gmra.mxu0 %v567
      %v864 = vpop.f32.mrf.mxu0
      %v865 = vadd.f32 %v356, %v864
      %v866 = vpop.f32.mrf.mxu0
      %v867 = vadd.f32 %v356, %v866
      %868 = vmatmul.bf16.gmra.mxu0 %v570
      %v869 = vpop.f32.mrf.mxu0
      %v870 = vadd.f32 %v356, %v869
      %v871 = vpop.f32.mrf.mxu0
      %v872 = vadd.f32 %v356, %v871
      %873 = vmatmul.bf16.gmra.mxu0 %v573
      %v874 = vpop.f32.mrf.mxu0
      %v875 = vadd.f32 %v356, %v874
      %v876 = vpop.f32.mrf.mxu0
      %v877 = vadd.f32 %v356, %v876
      %878 = vmatmul.bf16.gmra.mxu0 %v576
      %v879 = vpop.f32.mrf.mxu0
      %v880 = vadd.f32 %v356, %v879
      %v881 = vpop.f32.mrf.mxu0
      %v882 = vadd.f32 %v356, %v881
      %883 = vmatmul.bf16.gmra.mxu0 %v579
      %v884 = vpop.f32.mrf.mxu0
      %v885 = vadd.f32 %v356, %v884
      %v886 = vpop.f32.mrf.mxu0
      %v887 = vadd.f32 %v356, %v886
      %888 = vmatmul.bf16.gmra.mxu0 %v582
      %v889 = vpop.f32.mrf.mxu0
      %v890 = vadd.f32 %v356, %v889
      %v891 = vpop.f32.mrf.mxu0
      %v892 = vadd.f32 %v356, %v891
      %893 = vmatmul.bf16.gmra.mxu0 %v585
      %v894 = vpop.f32.mrf.mxu0
      %v895 = vadd.f32 %v356, %v894
      %v896 = vpop.f32.mrf.mxu0
      %v897 = vadd.f32 %v356, %v896
      %898 = vmatmul.bf16.gmra.mxu0 %v588
      %v899 = vpop.f32.mrf.mxu0
      %v900 = vadd.f32 %v356, %v899
      %v901 = vpop.f32.mrf.mxu0
      %v902 = vadd.f32 %v356, %v901
      %903 = vmatmul.bf16.gmra.mxu0 %v591
      %v904 = vpop.f32.mrf.mxu0
      %v905 = vadd.f32 %v356, %v904
      %v906 = vpop.f32.mrf.mxu0
      %v907 = vadd.f32 %v356, %v906
      %908 = vmatmul.bf16.gmra.mxu0 %v594
      %v909 = vpop.f32.mrf.mxu0
      %v910 = vadd.f32 %v356, %v909
      %v911 = vpop.f32.mrf.mxu0
      %v912 = vadd.f32 %v356, %v911
      %913 = vmatmul.bf16.gmra.mxu0 %v597
      %v914 = vpop.f32.mrf.mxu0
      %v915 = vadd.f32 %v356, %v914
      %v916 = vpop.f32.mrf.mxu0
      %v917 = vadd.f32 %v356, %v916
      %918 = vmatmul.bf16.gmra.mxu0 %v600
      %v919 = vpop.f32.mrf.mxu0
      %v920 = vadd.f32 %v356, %v919
      %v921 = vpop.f32.mrf.mxu0
      %v922 = vadd.f32 %v356, %v921
      %923 = vmatmul.bf16.gmra.mxu0 %v603
      %v924 = vpop.f32.mrf.mxu0
      %v925 = vadd.f32 %v356, %v924
      %v926 = vpop.f32.mrf.mxu0
      %v927 = vadd.f32 %v356, %v926
      %928 = vmatmul.bf16.gmra.mxu0 %v606
      %v929 = vpop.f32.mrf.mxu0
      %v930 = vadd.f32 %v356, %v929
      %v931 = vpop.f32.mrf.mxu0
      %v932 = vadd.f32 %v356, %v931
      %933 = vmatmul.bf16.gmra.mxu0 %v609
      %v934 = vpop.f32.mrf.mxu0
      %v935 = vadd.f32 %v356, %v934
      %v936 = vpop.f32.mrf.mxu0
      %v937 = vadd.f32 %v356, %v936
      %938 = vmatmul.bf16.gmra.mxu0 %v612
      %v939 = vpop.f32.mrf.mxu0
      %v940 = vadd.f32 %v356, %v939
      %v941 = vpop.f32.mrf.mxu0
      %v942 = vadd.f32 %v356, %v941
      %943 = vmatmul.bf16.gmra.mxu0 %v615
      %v944 = vpop.f32.mrf.mxu0
      %v945 = vadd.f32 %v356, %v944
      %v946 = vpop.f32.mrf.mxu0
      %v947 = vadd.f32 %v356, %v946
      %948 = vmatmul.bf16.gmra.mxu0 %v618
      %v949 = vpop.f32.mrf.mxu0
      %v950 = vadd.f32 %v356, %v949
      %v951 = vpop.f32.mrf.mxu0
      %v952 = vadd.f32 %v356, %v951
      %953 = vmatmul.bf16.gmra.mxu0 %v621
      %v954 = vpop.f32.mrf.mxu0
      %v955 = vadd.f32 %v356, %v954
      %v956 = vpop.f32.mrf.mxu0
      %v957 = vadd.f32 %v356, %v956
      %958 = vmatmul.bf16.gmra.mxu0 %v624
      %v959 = vpop.f32.mrf.mxu0
      %v960 = vadd.f32 %v356, %v959
      %v961 = vpop.f32.mrf.mxu0
      %v962 = vadd.f32 %v356, %v961
      %963 = vdwg.mxu0
      %v964 = vmul.f32 %v636, 0.5
      %v965 = vmul.f32 %v805, 0.5
      %v966 = vmul.f32 %v638, 0.5
      %v967 = vmul.f32 %v807, 0.5
      %v968 = vmul.f32 %v641, 0.5
      %v969 = vmul.f32 %v810, 0.5
      %v970 = vmul.f32 %v643, 0.5
      %v971 = vmul.f32 %v812, 0.5
      %v972 = vmul.f32 %v646, 0.5
      %v973 = vmul.f32 %v815, 0.5
      %v974 = vmul.f32 %v648, 0.5
      %v975 = vmul.f32 %v817, 0.5
      %v976 = vmul.f32 %v651, 0.5
      %v977 = vmul.f32 %v820, 0.5
      %v978 = vmul.f32 %v653, 0.5
      %v979 = vmul.f32 %v822, 0.5
      %v980 = vmul.f32 %v656, 0.5
      %v981 = vmul.f32 %v825, 0.5
      %v982 = vmul.f32 %v658, 0.5
      %v983 = vmul.f32 %v827, 0.5
      %v984 = vmul.f32 %v661, 0.5
      %v985 = vmul.f32 %v830, 0.5
      %v986 = vmul.f32 %v663, 0.5
      %v987 = vmul.f32 %v832, 0.5
      %v988 = vmul.f32 %v666, 0.5
      %v989 = vmul.f32 %v835, 0.5
      %v990 = vmul.f32 %v668, 0.5
      %v991 = vmul.f32 %v837, 0.5
      %v992 = vmul.f32 %v671, 0.5
      %v993 = vmul.f32 %v840, 0.5
      %v994 = vmul.f32 %v673, 0.5
      %v995 = vmul.f32 %v842, 0.5
      %v996 = vmul.f32 %v676, 0.5
      %v997 = vmul.f32 %v845, 0.5
      %v998 = vmul.f32 %v678, 0.5
      %v999 = vmul.f32 %v847, 0.5
      %v1000 = vmul.f32 %v681, 0.5
      %v1001 = vmul.f32 %v850, 0.5
      %v1002 = vmul.f32 %v683, 0.5
      %v1003 = vmul.f32 %v852, 0.5
      %v1004 = vmul.f32 %v686, 0.5
      %v1005 = vmul.f32 %v855, 0.5
      %v1006 = vmul.f32 %v688, 0.5
      %v1007 = vmul.f32 %v857, 0.5
      %v1008 = vmul.f32 %v691, 0.5
      %v1009 = vmul.f32 %v860, 0.5
      %v1010 = vmul.f32 %v693, 0.5
      %v1011 = vmul.f32 %v862, 0.5
      %v1012 = vmul.f32 %v696, 0.5
      %v1013 = vmul.f32 %v865, 0.5
      %v1014 = vmul.f32 %v698, 0.5
      %v1015 = vmul.f32 %v867, 0.5
      %v1016 = vmul.f32 %v701, 0.5
      %v1017 = vmul.f32 %v870, 0.5
      %v1018 = vmul.f32 %v703, 0.5
      %v1019 = vmul.f32 %v872, 0.5
      %v1020 = vmul.f32 %v706, 0.5
      %v1021 = vmul.f32 %v875, 0.5
      %v1022 = vmul.f32 %v708, 0.5
      %v1023 = vmul.f32 %v877, 0.5
      %v1024 = vmul.f32 %v711, 0.5
      %v1025 = vmul.f32 %v880, 0.5
      %v1026 = vmul.f32 %v713, 0.5
      %v1027 = vmul.f32 %v882, 0.5
      %v1028 = vmul.f32 %v716, 0.5
      %v1029 = vmul.f32 %v885, 0.5
      %v1030 = vmul.f32 %v718, 0.5
      %v1031 = vmul.f32 %v887, 0.5
      %v1032 = vmul.f32 %v721, 0.5
      %v1033 = vmul.f32 %v890, 0.5
      %v1034 = vmul.f32 %v723, 0.5
      %v1035 = vmul.f32 %v892, 0.5
      %v1036 = vmul.f32 %v726, 0.5
      %v1037 = vmul.f32 %v895, 0.5
      %v1038 = vmul.f32 %v728, 0.5
      %v1039 = vmul.f32 %v897, 0.5
      %v1040 = vmul.f32 %v731, 0.5
      %v1041 = vmul.f32 %v900, 0.5
      %v1042 = vmul.f32 %v733, 0.5
      %v1043 = vmul.f32 %v902, 0.5
      %v1044 = vmul.f32 %v736, 0.5
      %v1045 = vmul.f32 %v905, 0.5
      %v1046 = vmul.f32 %v738, 0.5
      %v1047 = vmul.f32 %v907, 0.5
      %v1048 = vmul.f32 %v741, 0.5
      %v1049 = vmul.f32 %v910, 0.5
      %v1050 = vmul.f32 %v743, 0.5
      %v1051 = vmul.f32 %v912, 0.5
      %v1052 = vmul.f32 %v746, 0.5
      %v1053 = vmul.f32 %v915, 0.5
      %v1054 = vmul.f32 %v748, 0.5
      %v1055 = vmul.f32 %v917, 0.5
      %v1056 = vmul.f32 %v751, 0.5
      %v1057 = vmul.f32 %v920, 0.5
      %v1058 = vmul.f32 %v753, 0.5
      %v1059 = vmul.f32 %v922, 0.5
      %v1060 = vmul.f32 %v756, 0.5
      %v1061 = vmul.f32 %v925, 0.5
      %v1062 = vmul.f32 %v758, 0.5
      %v1063 = vmul.f32 %v927, 0.5
      %v1064 = vmul.f32 %v761, 0.5
      %v1065 = vmul.f32 %v930, 0.5
      %v1066 = vmul.f32 %v763, 0.5
      %v1067 = vmul.f32 %v932, 0.5
      %v1068 = vmul.f32 %v766, 0.5
      %v1069 = vmul.f32 %v935, 0.5
      %v1070 = vmul.f32 %v768, 0.5
      %v1071 = vmul.f32 %v937, 0.5
      %v1072 = vmul.f32 %v771, 0.5
      %v1073 = vmul.f32 %v940, 0.5
      %v1074 = vmul.f32 %v773, 0.5
      %v1075 = vmul.f32 %v942, 0.5
      %v1076 = vmul.f32 %v776, 0.5
      %v1077 = vmul.f32 %v945, 0.5
      %v1078 = vmul.f32 %v778, 0.5
      %v1079 = vmul.f32 %v947, 0.5
      %v1080 = vmul.f32 %v781, 0.5
      %v1081 = vmul.f32 %v950, 0.5
      %v1082 = vmul.f32 %v783, 0.5
      %v1083 = vmul.f32 %v952, 0.5
      %v1084 = vmul.f32 %v786, 0.5
      %v1085 = vmul.f32 %v955, 0.5
      %v1086 = vmul.f32 %v788, 0.5
      %v1087 = vmul.f32 %v957, 0.5
      %v1088 = vmul.f32 %v791, 0.5
      %v1089 = vmul.f32 %v960, 0.5
      %v1090 = vmul.f32 %v793, 0.5
      %v1091 = vmul.f32 %v962, 0.5
      %v1092 = vtanh.pop %v964
      %v1093 = vtanh.pop %v965
      %v1094 = vtanh.pop %v966
      %v1095 = vtanh.pop %v967
      %v1096 = vtanh.pop %v968
      %v1097 = vtanh.pop %v969
      %v1098 = vtanh.pop %v970
      %v1099 = vtanh.pop %v971
      %v1100 = vtanh.pop %v972
      %v1101 = vtanh.pop %v973
      %v1102 = vtanh.pop %v974
      %v1103 = vtanh.pop %v975
      %v1104 = vtanh.pop %v976
      %v1105 = vtanh.pop %v977
      %v1106 = vtanh.pop %v978
      %v1107 = vtanh.pop %v979
      %v1108 = vtanh.pop %v980
      %v1109 = vtanh.pop %v981
      %v1110 = vtanh.pop %v982
      %v1111 = vtanh.pop %v983
      %v1112 = vtanh.pop %v984
      %v1113 = vtanh.pop %v985
      %v1114 = vtanh.pop %v986
      %v1115 = vtanh.pop %v987
      %v1116 = vtanh.pop %v988
      %v1117 = vtanh.pop %v989
      %v1118 = vtanh.pop %v990
      %v1119 = vtanh.pop %v991
      %v1120 = vtanh.pop %v992
      %v1121 = vtanh.pop %v993
      %v1122 = vtanh.pop %v994
      %v1123 = vtanh.pop %v995
      %v1124 = vtanh.pop %v996
      %v1125 = vtanh.pop %v997
      %v1126 = vtanh.pop %v998
      %v1127 = vtanh.pop %v999
      %v1128 = vtanh.pop %v1000
      %v1129 = vtanh.pop %v1001
      %v1130 = vtanh.pop %v1002
      %v1131 = vtanh.pop %v1003
      %v1132 = vtanh.pop %v1004
      %v1133 = vtanh.pop %v1005
      %v1134 = vtanh.pop %v1006
      %v1135 = vtanh.pop %v1007
      %v1136 = vtanh.pop %v1008
      %v1137 = vtanh.pop %v1009
      %v1138 = vtanh.pop %v1010
      %v1139 = vtanh.pop %v1011
      %v1140 = vtanh.pop %v1012
      %v1141 = vtanh.pop %v1013
      %v1142 = vtanh.pop %v1014
      %v1143 = vtanh.pop %v1015
      %v1144 = vtanh.pop %v1016
      %v1145 = vtanh.pop %v1017
      %v1146 = vtanh.pop %v1018
      %v1147 = vtanh.pop %v1019
      %v1148 = vtanh.pop %v1020
      %v1149 = vtanh.pop %v1021
      %v1150 = vtanh.pop %v1022
      %v1151 = vtanh.pop %v1023
      %v1152 = vtanh.pop %v1024
      %v1153 = vtanh.pop %v1025
      %v1154 = vtanh.pop %v1026
      %v1155 = vtanh.pop %v1027
      %v1156 = vtanh.pop %v1028
      %v1157 = vtanh.pop %v1029
      %v1158 = vtanh.pop %v1030
      %v1159 = vtanh.pop %v1031
      %v1160 = vtanh.pop %v1032
      %v1161 = vtanh.pop %v1033
      %v1162 = vtanh.pop %v1034
      %v1163 = vtanh.pop %v1035
      %v1164 = vtanh.pop %v1036
      %v1165 = vtanh.pop %v1037
      %v1166 = vtanh.pop %v1038
      %v1167 = vtanh.pop %v1039
      %v1168 = vtanh.pop %v1040
      %v1169 = vtanh.pop %v1041
      %v1170 = vtanh.pop %v1042
      %v1171 = vtanh.pop %v1043
      %v1172 = vtanh.pop %v1044
      %v1173 = vtanh.pop %v1045
      %v1174 = vtanh.pop %v1046
      %v1175 = vtanh.pop %v1047
      %v1176 = vtanh.pop %v1048
      %v1177 = vtanh.pop %v1049
      %v1178 = vtanh.pop %v1050
      %v1179 = vtanh.pop %v1051
      %v1180 = vtanh.pop %v1052
      %v1181 = vtanh.pop %v1053
      %v1182 = vtanh.pop %v1054
      %v1183 = vtanh.pop %v1055
      %v1184 = vtanh.pop %v1056
      %v1185 = vtanh.pop %v1057
      %v1186 = vtanh.pop %v1058
      %v1187 = vtanh.pop %v1059
      %v1188 = vtanh.pop %v1060
      %v1189 = vtanh.pop %v1061
      %v1190 = vtanh.pop %v1062
      %v1191 = vtanh.pop %v1063
      %v1192 = vtanh.pop %v1064
      %v1193 = vtanh.pop %v1065
      %v1194 = vtanh.pop %v1066
      %v1195 = vtanh.pop %v1067
      %v1196 = vtanh.pop %v1068
      %v1197 = vtanh.pop %v1069
      %v1198 = vtanh.pop %v1070
      %v1199 = vtanh.pop %v1071
      %v1200 = vtanh.pop %v1072
      %v1201 = vtanh.pop %v1073
      %v1202 = vtanh.pop %v1074
      %v1203 = vtanh.pop %v1075
      %v1204 = vtanh.pop %v1076
      %v1205 = vtanh.pop %v1077
      %v1206 = vtanh.pop %v1078
      %v1207 = vtanh.pop %v1079
      %v1208 = vtanh.pop %v1080
      %v1209 = vtanh.pop %v1081
      %v1210 = vtanh.pop %v1082
      %v1211 = vtanh.pop %v1083
      %v1212 = vtanh.pop %v1084
      %v1213 = vtanh.pop %v1085
      %v1214 = vtanh.pop %v1086
      %v1215 = vtanh.pop %v1087
      %v1216 = vtanh.pop %v1088
      %v1217 = vtanh.pop %v1089
      %v1218 = vtanh.pop %v1090
      %v1219 = vtanh.pop %v1091
      %v1220 = vmul.f32 %v1092, 0.5
      %v1221 = vmul.f32 %v1093, 0.5
      %v1222 = vmul.f32 %v1094, 0.5
      %v1223 = vmul.f32 %v1095, 0.5
      %v1224 = vmul.f32 %v1096, 0.5
      %v1225 = vmul.f32 %v1097, 0.5
      %v1226 = vmul.f32 %v1098, 0.5
      %v1227 = vmul.f32 %v1099, 0.5
      %v1228 = vmul.f32 %v1100, 0.5
      %v1229 = vmul.f32 %v1101, 0.5
      %v1230 = vmul.f32 %v1102, 0.5
      %v1231 = vmul.f32 %v1103, 0.5
      %v1232 = vmul.f32 %v1104, 0.5
      %v1233 = vmul.f32 %v1105, 0.5
      %v1234 = vmul.f32 %v1106, 0.5
      %v1235 = vmul.f32 %v1107, 0.5
      %v1236 = vmul.f32 %v1108, 0.5
      %v1237 = vmul.f32 %v1109, 0.5
      %v1238 = vmul.f32 %v1110, 0.5
      %v1239 = vmul.f32 %v1111, 0.5
      %v1240 = vmul.f32 %v1112, 0.5
      %v1241 = vmul.f32 %v1113, 0.5
      %v1242 = vmul.f32 %v1114, 0.5
      %v1243 = vmul.f32 %v1115, 0.5
      %v1244 = vmul.f32 %v1116, 0.5
      %v1245 = vmul.f32 %v1117, 0.5
      %v1246 = vmul.f32 %v1118, 0.5
      %v1247 = vmul.f32 %v1119, 0.5
      %v1248 = vmul.f32 %v1120, 0.5
      %v1249 = vmul.f32 %v1121, 0.5
      %v1250 = vmul.f32 %v1122, 0.5
      %v1251 = vmul.f32 %v1123, 0.5
      %v1252 = vmul.f32 %v1124, 0.5
      %v1253 = vmul.f32 %v1125, 0.5
      %v1254 = vmul.f32 %v1126, 0.5
      %v1255 = vmul.f32 %v1127, 0.5
      %v1256 = vmul.f32 %v1128, 0.5
      %v1257 = vmul.f32 %v1129, 0.5
      %v1258 = vmul.f32 %v1130, 0.5
      %v1259 = vmul.f32 %v1131, 0.5
      %v1260 = vmul.f32 %v1132, 0.5
      %v1261 = vmul.f32 %v1133, 0.5
      %v1262 = vmul.f32 %v1134, 0.5
      %v1263 = vmul.f32 %v1135, 0.5
      %v1264 = vmul.f32 %v1136, 0.5
      %v1265 = vmul.f32 %v1137, 0.5
      %v1266 = vmul.f32 %v1138, 0.5
      %v1267 = vmul.f32 %v1139, 0.5
      %v1268 = vmul.f32 %v1140, 0.5
      %v1269 = vmul.f32 %v1141, 0.5
      %v1270 = vmul.f32 %v1142, 0.5
      %v1271 = vmul.f32 %v1143, 0.5
      %v1272 = vmul.f32 %v1144, 0.5
      %v1273 = vmul.f32 %v1145, 0.5
      %v1274 = vmul.f32 %v1146, 0.5
      %v1275 = vmul.f32 %v1147, 0.5
      %v1276 = vmul.f32 %v1148, 0.5
      %v1277 = vmul.f32 %v1149, 0.5
      %v1278 = vmul.f32 %v1150, 0.5
      %v1279 = vmul.f32 %v1151, 0.5
      %v1280 = vmul.f32 %v1152, 0.5
      %v1281 = vmul.f32 %v1153, 0.5
      %v1282 = vmul.f32 %v1154, 0.5
      %v1283 = vmul.f32 %v1155, 0.5
      %v1284 = vmul.f32 %v1156, 0.5
      %v1285 = vmul.f32 %v1157, 0.5
      %v1286 = vmul.f32 %v1158, 0.5
      %v1287 = vmul.f32 %v1159, 0.5
      %v1288 = vmul.f32 %v1160, 0.5
      %v1289 = vmul.f32 %v1161, 0.5
      %v1290 = vmul.f32 %v1162, 0.5
      %v1291 = vmul.f32 %v1163, 0.5
      %v1292 = vmul.f32 %v1164, 0.5
      %v1293 = vmul.f32 %v1165, 0.5
      %v1294 = vmul.f32 %v1166, 0.5
      %v1295 = vmul.f32 %v1167, 0.5
      %v1296 = vmul.f32 %v1168, 0.5
      %v1297 = vmul.f32 %v1169, 0.5
      %v1298 = vmul.f32 %v1170, 0.5
      %v1299 = vmul.f32 %v1171, 0.5
      %v1300 = vmul.f32 %v1172, 0.5
      %v1301 = vmul.f32 %v1173, 0.5
      %v1302 = vmul.f32 %v1174, 0.5
      %v1303 = vmul.f32 %v1175, 0.5
      %v1304 = vmul.f32 %v1176, 0.5
      %v1305 = vmul.f32 %v1177, 0.5
      %v1306 = vmul.f32 %v1178, 0.5
      %v1307 = vmul.f32 %v1179, 0.5
      %v1308 = vmul.f32 %v1180, 0.5
      %v1309 = vmul.f32 %v1181, 0.5
      %v1310 = vmul.f32 %v1182, 0.5
      %v1311 = vmul.f32 %v1183, 0.5
      %v1312 = vmul.f32 %v1184, 0.5
      %v1313 = vmul.f32 %v1185, 0.5
      %v1314 = vmul.f32 %v1186, 0.5
      %v1315 = vmul.f32 %v1187, 0.5
      %v1316 = vmul.f32 %v1188, 0.5
      %v1317 = vmul.f32 %v1189, 0.5
      %v1318 = vmul.f32 %v1190, 0.5
      %v1319 = vmul.f32 %v1191, 0.5
      %v1320 = vmul.f32 %v1192, 0.5
      %v1321 = vmul.f32 %v1193, 0.5
      %v1322 = vmul.f32 %v1194, 0.5
      %v1323 = vmul.f32 %v1195, 0.5
      %v1324 = vmul.f32 %v1196, 0.5
      %v1325 = vmul.f32 %v1197, 0.5
      %v1326 = vmul.f32 %v1198, 0.5
      %v1327 = vmul.f32 %v1199, 0.5
      %v1328 = vmul.f32 %v1200, 0.5
      %v1329 = vmul.f32 %v1201, 0.5
      %v1330 = vmul.f32 %v1202, 0.5
      %v1331 = vmul.f32 %v1203, 0.5
      %v1332 = vmul.f32 %v1204, 0.5
      %v1333 = vmul.f32 %v1205, 0.5
      %v1334 = vmul.f32 %v1206, 0.5
      %v1335 = vmul.f32 %v1207, 0.5
      %v1336 = vmul.f32 %v1208, 0.5
      %v1337 = vmul.f32 %v1209, 0.5
      %v1338 = vmul.f32 %v1210, 0.5
      %v1339 = vmul.f32 %v1211, 0.5
      %v1340 = vmul.f32 %v1212, 0.5
      %v1341 = vmul.f32 %v1213, 0.5
      %v1342 = vmul.f32 %v1214, 0.5
      %v1343 = vmul.f32 %v1215, 0.5
      %v1344 = vmul.f32 %v1216, 0.5
      %v1345 = vmul.f32 %v1217, 0.5
      %v1346 = vmul.f32 %v1218, 0.5
      %v1347 = vmul.f32 %v1219, 0.5
      %v1348 = vadd.f32 %v1220, 0.5
      %v1349 = vadd.f32 %v1221, 0.5
      %v1350 = vadd.f32 %v1222, 0.5
      %v1351 = vadd.f32 %v1223, 0.5
      %v1352 = vadd.f32 %v1224, 0.5
      %v1353 = vadd.f32 %v1225, 0.5
      %v1354 = vadd.f32 %v1226, 0.5
      %v1355 = vadd.f32 %v1227, 0.5
      %v1356 = vadd.f32 %v1228, 0.5
      %v1357 = vadd.f32 %v1229, 0.5
      %v1358 = vadd.f32 %v1230, 0.5
      %v1359 = vadd.f32 %v1231, 0.5
      %v1360 = vadd.f32 %v1232, 0.5
      %v1361 = vadd.f32 %v1233, 0.5
      %v1362 = vadd.f32 %v1234, 0.5
      %v1363 = vadd.f32 %v1235, 0.5
      %v1364 = vadd.f32 %v1236, 0.5
      %v1365 = vadd.f32 %v1237, 0.5
      %v1366 = vadd.f32 %v1238, 0.5
      %v1367 = vadd.f32 %v1239, 0.5
      %v1368 = vadd.f32 %v1240, 0.5
      %v1369 = vadd.f32 %v1241, 0.5
      %v1370 = vadd.f32 %v1242, 0.5
      %v1371 = vadd.f32 %v1243, 0.5
      %v1372 = vadd.f32 %v1244, 0.5
      %v1373 = vadd.f32 %v1245, 0.5
      %v1374 = vadd.f32 %v1246, 0.5
      %v1375 = vadd.f32 %v1247, 0.5
      %v1376 = vadd.f32 %v1248, 0.5
      %v1377 = vadd.f32 %v1249, 0.5
      %v1378 = vadd.f32 %v1250, 0.5
      %v1379 = vadd.f32 %v1251, 0.5
      %v1380 = vadd.f32 %v1252, 0.5
      %v1381 = vadd.f32 %v1253, 0.5
      %v1382 = vadd.f32 %v1254, 0.5
      %v1383 = vadd.f32 %v1255, 0.5
      %v1384 = vadd.f32 %v1256, 0.5
      %v1385 = vadd.f32 %v1257, 0.5
      %v1386 = vadd.f32 %v1258, 0.5
      %v1387 = vadd.f32 %v1259, 0.5
      %v1388 = vadd.f32 %v1260, 0.5
      %v1389 = vadd.f32 %v1261, 0.5
      %v1390 = vadd.f32 %v1262, 0.5
      %v1391 = vadd.f32 %v1263, 0.5
      %v1392 = vadd.f32 %v1264, 0.5
      %v1393 = vadd.f32 %v1265, 0.5
      %v1394 = vadd.f32 %v1266, 0.5
      %v1395 = vadd.f32 %v1267, 0.5
      %v1396 = vadd.f32 %v1268, 0.5
      %v1397 = vadd.f32 %v1269, 0.5
      %v1398 = vadd.f32 %v1270, 0.5
      %v1399 = vadd.f32 %v1271, 0.5
      %v1400 = vadd.f32 %v1272, 0.5
      %v1401 = vadd.f32 %v1273, 0.5
      %v1402 = vadd.f32 %v1274, 0.5
      %v1403 = vadd.f32 %v1275, 0.5
      %v1404 = vadd.f32 %v1276, 0.5
      %v1405 = vadd.f32 %v1277, 0.5
      %v1406 = vadd.f32 %v1278, 0.5
      %v1407 = vadd.f32 %v1279, 0.5
      %v1408 = vadd.f32 %v1280, 0.5
      %v1409 = vadd.f32 %v1281, 0.5
      %v1410 = vadd.f32 %v1282, 0.5
      %v1411 = vadd.f32 %v1283, 0.5
      %v1412 = vadd.f32 %v1284, 0.5
      %v1413 = vadd.f32 %v1285, 0.5
      %v1414 = vadd.f32 %v1286, 0.5
      %v1415 = vadd.f32 %v1287, 0.5
      %v1416 = vadd.f32 %v1288, 0.5
      %v1417 = vadd.f32 %v1289, 0.5
      %v1418 = vadd.f32 %v1290, 0.5
      %v1419 = vadd.f32 %v1291, 0.5
      %v1420 = vadd.f32 %v1292, 0.5
      %v1421 = vadd.f32 %v1293, 0.5
      %v1422 = vadd.f32 %v1294, 0.5
      %v1423 = vadd.f32 %v1295, 0.5
      %v1424 = vadd.f32 %v1296, 0.5
      %v1425 = vadd.f32 %v1297, 0.5
      %v1426 = vadd.f32 %v1298, 0.5
      %v1427 = vadd.f32 %v1299, 0.5
      %v1428 = vadd.f32 %v1300, 0.5
      %v1429 = vadd.f32 %v1301, 0.5
      %v1430 = vadd.f32 %v1302, 0.5
      %v1431 = vadd.f32 %v1303, 0.5
      %v1432 = vadd.f32 %v1304, 0.5
      %v1433 = vadd.f32 %v1305, 0.5
      %v1434 = vadd.f32 %v1306, 0.5
      %v1435 = vadd.f32 %v1307, 0.5
      %v1436 = vadd.f32 %v1308, 0.5
      %v1437 = vadd.f32 %v1309, 0.5
      %v1438 = vadd.f32 %v1310, 0.5
      %v1439 = vadd.f32 %v1311, 0.5
      %v1440 = vadd.f32 %v1312, 0.5
      %v1441 = vadd.f32 %v1313, 0.5
      %v1442 = vadd.f32 %v1314, 0.5
      %v1443 = vadd.f32 %v1315, 0.5
      %v1444 = vadd.f32 %v1316, 0.5
      %v1445 = vadd.f32 %v1317, 0.5
      %v1446 = vadd.f32 %v1318, 0.5
      %v1447 = vadd.f32 %v1319, 0.5
      %v1448 = vadd.f32 %v1320, 0.5
      %v1449 = vadd.f32 %v1321, 0.5
      %v1450 = vadd.f32 %v1322, 0.5
      %v1451 = vadd.f32 %v1323, 0.5
      %v1452 = vadd.f32 %v1324, 0.5
      %v1453 = vadd.f32 %v1325, 0.5
      %v1454 = vadd.f32 %v1326, 0.5
      %v1455 = vadd.f32 %v1327, 0.5
      %v1456 = vadd.f32 %v1328, 0.5
      %v1457 = vadd.f32 %v1329, 0.5
      %v1458 = vadd.f32 %v1330, 0.5
      %v1459 = vadd.f32 %v1331, 0.5
      %v1460 = vadd.f32 %v1332, 0.5
      %v1461 = vadd.f32 %v1333, 0.5
      %v1462 = vadd.f32 %v1334, 0.5
      %v1463 = vadd.f32 %v1335, 0.5
      %v1464 = vadd.f32 %v1336, 0.5
      %v1465 = vadd.f32 %v1337, 0.5
      %v1466 = vadd.f32 %v1338, 0.5
      %v1467 = vadd.f32 %v1339, 0.5
      %v1468 = vadd.f32 %v1340, 0.5
      %v1469 = vadd.f32 %v1341, 0.5
      %v1470 = vadd.f32 %v1342, 0.5
      %v1471 = vadd.f32 %v1343, 0.5
      %v1472 = vadd.f32 %v1344, 0.5
      %v1473 = vadd.f32 %v1345, 0.5
      %v1474 = vadd.f32 %v1346, 0.5
      %v1475 = vadd.f32 %v1347, 0.5
      %v1476 = vpack.c.bf16 %v1350, %v1348
      %v1477 = vpack.c.bf16 %v1351, %v1349
      %v1478 = vpack.c.bf16 %v1354, %v1352
      %v1479 = vpack.c.bf16 %v1355, %v1353
      %v1480 = vpack.c.bf16 %v1358, %v1356
      %v1481 = vpack.c.bf16 %v1359, %v1357
      %v1482 = vpack.c.bf16 %v1362, %v1360
      %v1483 = vpack.c.bf16 %v1363, %v1361
      %v1484 = vpack.c.bf16 %v1366, %v1364
      %v1485 = vpack.c.bf16 %v1367, %v1365
      %v1486 = vpack.c.bf16 %v1370, %v1368
      %v1487 = vpack.c.bf16 %v1371, %v1369
      %v1488 = vpack.c.bf16 %v1374, %v1372
      %v1489 = vpack.c.bf16 %v1375, %v1373
      %v1490 = vpack.c.bf16 %v1378, %v1376
      %v1491 = vpack.c.bf16 %v1379, %v1377
      %v1492 = vpack.c.bf16 %v1382, %v1380
      %v1493 = vpack.c.bf16 %v1383, %v1381
      %v1494 = vpack.c.bf16 %v1386, %v1384
      %v1495 = vpack.c.bf16 %v1387, %v1385
      %v1496 = vpack.c.bf16 %v1390, %v1388
      %v1497 = vpack.c.bf16 %v1391, %v1389
      %v1498 = vpack.c.bf16 %v1394, %v1392
      %v1499 = vpack.c.bf16 %v1395, %v1393
      %v1500 = vpack.c.bf16 %v1398, %v1396
      %v1501 = vpack.c.bf16 %v1399, %v1397
      %v1502 = vpack.c.bf16 %v1402, %v1400
      %v1503 = vpack.c.bf16 %v1403, %v1401
      %v1504 = vpack.c.bf16 %v1406, %v1404
      %v1505 = vpack.c.bf16 %v1407, %v1405
      %v1506 = vpack.c.bf16 %v1410, %v1408
      %v1507 = vpack.c.bf16 %v1411, %v1409
      %v1508 = vpack.c.bf16 %v1414, %v1412
      %v1509 = vpack.c.bf16 %v1415, %v1413
      %v1510 = vpack.c.bf16 %v1418, %v1416
      %v1511 = vpack.c.bf16 %v1419, %v1417
      %v1512 = vpack.c.bf16 %v1422, %v1420
      %v1513 = vpack.c.bf16 %v1423, %v1421
      %v1514 = vpack.c.bf16 %v1426, %v1424
      %v1515 = vpack.c.bf16 %v1427, %v1425
      %v1516 = vpack.c.bf16 %v1430, %v1428
      %v1517 = vpack.c.bf16 %v1431, %v1429
      %v1518 = vpack.c.bf16 %v1434, %v1432
      %v1519 = vpack.c.bf16 %v1435, %v1433
      %v1520 = vpack.c.bf16 %v1438, %v1436
      %v1521 = vpack.c.bf16 %v1439, %v1437
      %v1522 = vpack.c.bf16 %v1442, %v1440
      %v1523 = vpack.c.bf16 %v1443, %v1441
      %v1524 = vpack.c.bf16 %v1446, %v1444
      %v1525 = vpack.c.bf16 %v1447, %v1445
      %v1526 = vpack.c.bf16 %v1450, %v1448
      %v1527 = vpack.c.bf16 %v1451, %v1449
      %v1528 = vpack.c.bf16 %v1454, %v1452
      %v1529 = vpack.c.bf16 %v1455, %v1453
      %v1530 = vpack.c.bf16 %v1458, %v1456
      %v1531 = vpack.c.bf16 %v1459, %v1457
      %v1532 = vpack.c.bf16 %v1462, %v1460
      %v1533 = vpack.c.bf16 %v1463, %v1461
      %v1534 = vpack.c.bf16 %v1466, %v1464
      %v1535 = vpack.c.bf16 %v1467, %v1465
      %v1536 = vpack.c.bf16 %v1470, %v1468
      %v1537 = vpack.c.bf16 %v1471, %v1469
      %v1538 = vpack.c.bf16 %v1474, %v1472
      %v1539 = vpack.c.bf16 %v1475, %v1473
      %v1540 = vld [vmem:[%s274] sm:$0xff]
      %v1541 = vld [vmem:[%s274 + $0x8] sm:$0xff]
      %v1544 = vunpack.c.l.b16 %v1540
      %v1545 = vunpack.c.h.b16 %v1540
      %v1546 = vunpack.c.l.b16 %v1541
      %v1547 = vunpack.c.h.b16 %v1541
      %v1548 = vpack.c.b16 %v1544, %v1544
      %v1549 = vpack.c.b16 %v1545, %v1545
      %v1550 = vpack.c.b16 %v1546, %v1546
      %v1551 = vpack.c.b16 %v1547, %v1547
      %1556 = vmatpush.bf16.msra.mxu0 %v1490
      %1557 = vmatpush.bf16.msra.mxu0 %v1488
      %1558 = vmatpush.bf16.msra.mxu0 %v1486
      %1559 = vmatpush.bf16.msra.mxu0 %v1484
      %1560 = vmatpush.bf16.msra.mxu0 %v1482
      %1561 = vmatpush.bf16.msra.mxu0 %v1480
      %1562 = vmatpush.bf16.msra.mxu0 %v1478
      %1563 = vmatpush.bf16.msra.mxu0 %v1476
      %1564 = vmatmul.bf16.gmra.mxu0 %v1548
      %v1565 = vpop.f32.mrf.mxu0
      %v1566 = vadd.f32 0.0, %v1565
      %v1567 = vpop.f32.mrf.mxu0
      %1568 = vdwg.mxu0
      %1569 = vmatpush.bf16.msra.mxu0 %v1506
      %1570 = vmatpush.bf16.msra.mxu0 %v1504
      %1571 = vmatpush.bf16.msra.mxu0 %v1502
      %1572 = vmatpush.bf16.msra.mxu0 %v1500
      %1573 = vmatpush.bf16.msra.mxu0 %v1498
      %1574 = vmatpush.bf16.msra.mxu0 %v1496
      %1575 = vmatpush.bf16.msra.mxu0 %v1494
      %1576 = vmatpush.bf16.msra.mxu0 %v1492
      %1577 = vmatmul.bf16.gmra.mxu0 %v1549
      %v1578 = vpop.f32.mrf.mxu0
      %v1579 = vadd.f32 %v1566, %v1578
      %v1580 = vpop.f32.mrf.mxu0
      %1581 = vdwg.mxu0
      %1582 = vmatpush.bf16.msra.mxu0 %v1522
      %1583 = vmatpush.bf16.msra.mxu0 %v1520
      %1584 = vmatpush.bf16.msra.mxu0 %v1518
      %1585 = vmatpush.bf16.msra.mxu0 %v1516
      %1586 = vmatpush.bf16.msra.mxu0 %v1514
      %1587 = vmatpush.bf16.msra.mxu0 %v1512
      %1588 = vmatpush.bf16.msra.mxu0 %v1510
      %1589 = vmatpush.bf16.msra.mxu0 %v1508
      %1590 = vmatmul.bf16.gmra.mxu0 %v1550
      %v1591 = vpop.f32.mrf.mxu0
      %v1592 = vadd.f32 %v1579, %v1591
      %v1593 = vpop.f32.mrf.mxu0
      %1594 = vdwg.mxu0
      %1595 = vmatpush.bf16.msra.mxu0 %v1538
      %1596 = vmatpush.bf16.msra.mxu0 %v1536
      %1597 = vmatpush.bf16.msra.mxu0 %v1534
      %1598 = vmatpush.bf16.msra.mxu0 %v1532
      %1599 = vmatpush.bf16.msra.mxu0 %v1530
      %1600 = vmatpush.bf16.msra.mxu0 %v1528
      %1601 = vmatpush.bf16.msra.mxu0 %v1526
      %1602 = vmatpush.bf16.msra.mxu0 %v1524
      %1603 = vmatmul.bf16.gmra.mxu0 %v1551
      %v1604 = vpop.f32.mrf.mxu0
      %v1605 = vadd.f32 %v1592, %v1604
      %v1606 = vpop.f32.mrf.mxu0
      %1607 = vdwg.mxu0
      %1608 = vmatpush.bf16.msra.mxu0 %v1491
      %1609 = vmatpush.bf16.msra.mxu0 %v1489
      %1610 = vmatpush.bf16.msra.mxu0 %v1487
      %1611 = vmatpush.bf16.msra.mxu0 %v1485
      %1612 = vmatpush.bf16.msra.mxu0 %v1483
      %1613 = vmatpush.bf16.msra.mxu0 %v1481
      %1614 = vmatpush.bf16.msra.mxu0 %v1479
      %1615 = vmatpush.bf16.msra.mxu0 %v1477
      %1616 = vmatmul.bf16.gmra.mxu0 %v1548
      %v1617 = vpop.f32.mrf.mxu0
      %v1618 = vadd.f32 0.0, %v1617
      %v1619 = vpop.f32.mrf.mxu0
      %1620 = vdwg.mxu0
      %1621 = vmatpush.bf16.msra.mxu0 %v1507
      %1622 = vmatpush.bf16.msra.mxu0 %v1505
      %1623 = vmatpush.bf16.msra.mxu0 %v1503
      %1624 = vmatpush.bf16.msra.mxu0 %v1501
      %1625 = vmatpush.bf16.msra.mxu0 %v1499
      %1626 = vmatpush.bf16.msra.mxu0 %v1497
      %1627 = vmatpush.bf16.msra.mxu0 %v1495
      %1628 = vmatpush.bf16.msra.mxu0 %v1493
      %1629 = vmatmul.bf16.gmra.mxu0 %v1549
      %v1630 = vpop.f32.mrf.mxu0
      %v1631 = vadd.f32 %v1618, %v1630
      %v1632 = vpop.f32.mrf.mxu0
      %1633 = vdwg.mxu0
      %1634 = vmatpush.bf16.msra.mxu0 %v1523
      %1635 = vmatpush.bf16.msra.mxu0 %v1521
      %1636 = vmatpush.bf16.msra.mxu0 %v1519
      %1637 = vmatpush.bf16.msra.mxu0 %v1517
      %1638 = vmatpush.bf16.msra.mxu0 %v1515
      %1639 = vmatpush.bf16.msra.mxu0 %v1513
      %1640 = vmatpush.bf16.msra.mxu0 %v1511
      %1641 = vmatpush.bf16.msra.mxu0 %v1509
      %1642 = vmatmul.bf16.gmra.mxu0 %v1550
      %v1643 = vpop.f32.mrf.mxu0
      %v1644 = vadd.f32 %v1631, %v1643
      %v1645 = vpop.f32.mrf.mxu0
      %1646 = vdwg.mxu0
      %1647 = vmatpush.bf16.msra.mxu0 %v1539
      %1648 = vmatpush.bf16.msra.mxu0 %v1537
      %1649 = vmatpush.bf16.msra.mxu0 %v1535
      %1650 = vmatpush.bf16.msra.mxu0 %v1533
      %1651 = vmatpush.bf16.msra.mxu0 %v1531
      %1652 = vmatpush.bf16.msra.mxu0 %v1529
      %1653 = vmatpush.bf16.msra.mxu0 %v1527
      %1654 = vmatpush.bf16.msra.mxu0 %v1525
      %1655 = vmatmul.bf16.gmra.mxu0 %v1551
      %v1656 = vpop.f32.mrf.mxu0
      %v1657 = vadd.f32 %v1644, %v1656
      %v1658 = vpop.f32.mrf.mxu0
      %1659 = vdwg.mxu0
      %v1660 = vmul.f32 %v1348, %v1348
      %v1661 = vmul.f32 %v1349, %v1349
      %v1662 = vmul.f32 %v1350, %v1350
      %v1663 = vmul.f32 %v1351, %v1351
      %v1664 = vmul.f32 %v1352, %v1352
      %v1665 = vmul.f32 %v1353, %v1353
      %v1666 = vmul.f32 %v1354, %v1354
      %v1667 = vmul.f32 %v1355, %v1355
      %v1668 = vmul.f32 %v1356, %v1356
      %v1669 = vmul.f32 %v1357, %v1357
      %v1670 = vmul.f32 %v1358, %v1358
      %v1671 = vmul.f32 %v1359, %v1359
      %v1672 = vmul.f32 %v1360, %v1360
      %v1673 = vmul.f32 %v1361, %v1361
      %v1674 = vmul.f32 %v1362, %v1362
      %v1675 = vmul.f32 %v1363, %v1363
      %v1676 = vmul.f32 %v1364, %v1364
      %v1677 = vmul.f32 %v1365, %v1365
      %v1678 = vmul.f32 %v1366, %v1366
      %v1679 = vmul.f32 %v1367, %v1367
      %v1680 = vmul.f32 %v1368, %v1368
      %v1681 = vmul.f32 %v1369, %v1369
      %v1682 = vmul.f32 %v1370, %v1370
      %v1683 = vmul.f32 %v1371, %v1371
      %v1684 = vmul.f32 %v1372, %v1372
      %v1685 = vmul.f32 %v1373, %v1373
      %v1686 = vmul.f32 %v1374, %v1374
      %v1687 = vmul.f32 %v1375, %v1375
      %v1688 = vmul.f32 %v1376, %v1376
      %v1689 = vmul.f32 %v1377, %v1377
      %v1690 = vmul.f32 %v1378, %v1378
      %v1691 = vmul.f32 %v1379, %v1379
      %v1692 = vmul.f32 %v1380, %v1380
      %v1693 = vmul.f32 %v1381, %v1381
      %v1694 = vmul.f32 %v1382, %v1382
      %v1695 = vmul.f32 %v1383, %v1383
      %v1696 = vmul.f32 %v1384, %v1384
      %v1697 = vmul.f32 %v1385, %v1385
      %v1698 = vmul.f32 %v1386, %v1386
      %v1699 = vmul.f32 %v1387, %v1387
      %v1700 = vmul.f32 %v1388, %v1388
      %v1701 = vmul.f32 %v1389, %v1389
      %v1702 = vmul.f32 %v1390, %v1390
      %v1703 = vmul.f32 %v1391, %v1391
      %v1704 = vmul.f32 %v1392, %v1392
      %v1705 = vmul.f32 %v1393, %v1393
      %v1706 = vmul.f32 %v1394, %v1394
      %v1707 = vmul.f32 %v1395, %v1395
      %v1708 = vmul.f32 %v1396, %v1396
      %v1709 = vmul.f32 %v1397, %v1397
      %v1710 = vmul.f32 %v1398, %v1398
      %v1711 = vmul.f32 %v1399, %v1399
      %v1712 = vmul.f32 %v1400, %v1400
      %v1713 = vmul.f32 %v1401, %v1401
      %v1714 = vmul.f32 %v1402, %v1402
      %v1715 = vmul.f32 %v1403, %v1403
      %v1716 = vmul.f32 %v1404, %v1404
      %v1717 = vmul.f32 %v1405, %v1405
      %v1718 = vmul.f32 %v1406, %v1406
      %v1719 = vmul.f32 %v1407, %v1407
      %v1720 = vmul.f32 %v1408, %v1408
      %v1721 = vmul.f32 %v1409, %v1409
      %v1722 = vmul.f32 %v1410, %v1410
      %v1723 = vmul.f32 %v1411, %v1411
      %v1724 = vmul.f32 %v1412, %v1412
      %v1725 = vmul.f32 %v1413, %v1413
      %v1726 = vmul.f32 %v1414, %v1414
      %v1727 = vmul.f32 %v1415, %v1415
      %v1728 = vmul.f32 %v1416, %v1416
      %v1729 = vmul.f32 %v1417, %v1417
      %v1730 = vmul.f32 %v1418, %v1418
      %v1731 = vmul.f32 %v1419, %v1419
      %v1732 = vmul.f32 %v1420, %v1420
      %v1733 = vmul.f32 %v1421, %v1421
      %v1734 = vmul.f32 %v1422, %v1422
      %v1735 = vmul.f32 %v1423, %v1423
      %v1736 = vmul.f32 %v1424, %v1424
      %v1737 = vmul.f32 %v1425, %v1425
      %v1738 = vmul.f32 %v1426, %v1426
      %v1739 = vmul.f32 %v1427, %v1427
      %v1740 = vmul.f32 %v1428, %v1428
      %v1741 = vmul.f32 %v1429, %v1429
      %v1742 = vmul.f32 %v1430, %v1430
      %v1743 = vmul.f32 %v1431, %v1431
      %v1744 = vmul.f32 %v1432, %v1432
      %v1745 = vmul.f32 %v1433, %v1433
      %v1746 = vmul.f32 %v1434, %v1434
      %v1747 = vmul.f32 %v1435, %v1435
      %v1748 = vmul.f32 %v1436, %v1436
      %v1749 = vmul.f32 %v1437, %v1437
      %v1750 = vmul.f32 %v1438, %v1438
      %v1751 = vmul.f32 %v1439, %v1439
      %v1752 = vmul.f32 %v1440, %v1440
      %v1753 = vmul.f32 %v1441, %v1441
      %v1754 = vmul.f32 %v1442, %v1442
      %v1755 = vmul.f32 %v1443, %v1443
      %v1756 = vmul.f32 %v1444, %v1444
      %v1757 = vmul.f32 %v1445, %v1445
      %v1758 = vmul.f32 %v1446, %v1446
      %v1759 = vmul.f32 %v1447, %v1447
      %v1760 = vmul.f32 %v1448, %v1448
      %v1761 = vmul.f32 %v1449, %v1449
      %v1762 = vmul.f32 %v1450, %v1450
      %v1763 = vmul.f32 %v1451, %v1451
      %v1764 = vmul.f32 %v1452, %v1452
      %v1765 = vmul.f32 %v1453, %v1453
      %v1766 = vmul.f32 %v1454, %v1454
      %v1767 = vmul.f32 %v1455, %v1455
      %v1768 = vmul.f32 %v1456, %v1456
      %v1769 = vmul.f32 %v1457, %v1457
      %v1770 = vmul.f32 %v1458, %v1458
      %v1771 = vmul.f32 %v1459, %v1459
      %v1772 = vmul.f32 %v1460, %v1460
      %v1773 = vmul.f32 %v1461, %v1461
      %v1774 = vmul.f32 %v1462, %v1462
      %v1775 = vmul.f32 %v1463, %v1463
      %v1776 = vmul.f32 %v1464, %v1464
      %v1777 = vmul.f32 %v1465, %v1465
      %v1778 = vmul.f32 %v1466, %v1466
      %v1779 = vmul.f32 %v1467, %v1467
      %v1780 = vmul.f32 %v1468, %v1468
      %v1781 = vmul.f32 %v1469, %v1469
      %v1782 = vmul.f32 %v1470, %v1470
      %v1783 = vmul.f32 %v1471, %v1471
      %v1784 = vmul.f32 %v1472, %v1472
      %v1785 = vmul.f32 %v1473, %v1473
      %v1786 = vmul.f32 %v1474, %v1474
      %v1787 = vmul.f32 %v1475, %v1475
      %v1788 = vadd.f32 %v1660, %v1662
      %v1789 = vadd.f32 %v1788, %v1664
      %v1790 = vadd.f32 %v1789, %v1666
      %v1791 = vadd.f32 %v1790, %v1668
      %v1792 = vadd.f32 %v1791, %v1670
      %v1793 = vadd.f32 %v1792, %v1672
      %v1794 = vadd.f32 %v1793, %v1674
      %v1795 = vadd.f32 %v1794, %v1676
      %v1796 = vadd.f32 %v1795, %v1678
      %v1797 = vadd.f32 %v1796, %v1680
      %v1798 = vadd.f32 %v1797, %v1682
      %v1799 = vadd.f32 %v1798, %v1684
      %v1800 = vadd.f32 %v1799, %v1686
      %v1801 = vadd.f32 %v1800, %v1688
      %v1802 = vadd.f32 %v1801, %v1690
      %v1803 = vadd.f32 %v1802, %v1692
      %v1804 = vadd.f32 %v1803, %v1694
      %v1805 = vadd.f32 %v1804, %v1696
      %v1806 = vadd.f32 %v1805, %v1698
      %v1807 = vadd.f32 %v1806, %v1700
      %v1808 = vadd.f32 %v1807, %v1702
      %v1809 = vadd.f32 %v1808, %v1704
      %v1810 = vadd.f32 %v1809, %v1706
      %v1811 = vadd.f32 %v1810, %v1708
      %v1812 = vadd.f32 %v1811, %v1710
      %v1813 = vadd.f32 %v1812, %v1712
      %v1814 = vadd.f32 %v1813, %v1714
      %v1815 = vadd.f32 %v1814, %v1716
      %v1816 = vadd.f32 %v1815, %v1718
      %v1817 = vadd.f32 %v1816, %v1720
      %v1818 = vadd.f32 %v1817, %v1722
      %v1819 = vadd.f32 %v1818, %v1724
      %v1820 = vadd.f32 %v1819, %v1726
      %v1821 = vadd.f32 %v1820, %v1728
      %v1822 = vadd.f32 %v1821, %v1730
      %v1823 = vadd.f32 %v1822, %v1732
      %v1824 = vadd.f32 %v1823, %v1734
      %v1825 = vadd.f32 %v1824, %v1736
      %v1826 = vadd.f32 %v1825, %v1738
      %v1827 = vadd.f32 %v1826, %v1740
      %v1828 = vadd.f32 %v1827, %v1742
      %v1829 = vadd.f32 %v1828, %v1744
      %v1830 = vadd.f32 %v1829, %v1746
      %v1831 = vadd.f32 %v1830, %v1748
      %v1832 = vadd.f32 %v1831, %v1750
      %v1833 = vadd.f32 %v1832, %v1752
      %v1834 = vadd.f32 %v1833, %v1754
      %v1835 = vadd.f32 %v1834, %v1756
      %v1836 = vadd.f32 %v1835, %v1758
      %v1837 = vadd.f32 %v1836, %v1760
      %v1838 = vadd.f32 %v1837, %v1762
      %v1839 = vadd.f32 %v1838, %v1764
      %v1840 = vadd.f32 %v1839, %v1766
      %v1841 = vadd.f32 %v1840, %v1768
      %v1842 = vadd.f32 %v1841, %v1770
      %v1843 = vadd.f32 %v1842, %v1772
      %v1844 = vadd.f32 %v1843, %v1774
      %v1845 = vadd.f32 %v1844, %v1776
      %v1846 = vadd.f32 %v1845, %v1778
      %v1847 = vadd.f32 %v1846, %v1780
      %v1848 = vadd.f32 %v1847, %v1782
      %v1849 = vadd.f32 %v1848, %v1784
      %v1850 = vadd.f32 %v1849, %v1786
      %v1851 = vrot.slane %v1850, 4
      %v1852 = vadd.f32 %v1850, %v1851
      %v1853 = vrot.slane %v1852, 2
      %v1854 = vadd.f32 %v1852, %v1853
      %v1855 = vrot.slane %v1854, 1
      %v1856 = vadd.f32 %v1854, %v1855
      %v1857 = vadd.f32 %v1661, %v1663
      %v1858 = vadd.f32 %v1857, %v1665
      %v1859 = vadd.f32 %v1858, %v1667
      %v1860 = vadd.f32 %v1859, %v1669
      %v1861 = vadd.f32 %v1860, %v1671
      %v1862 = vadd.f32 %v1861, %v1673
      %v1863 = vadd.f32 %v1862, %v1675
      %v1864 = vadd.f32 %v1863, %v1677
      %v1865 = vadd.f32 %v1864, %v1679
      %v1866 = vadd.f32 %v1865, %v1681
      %v1867 = vadd.f32 %v1866, %v1683
      %v1868 = vadd.f32 %v1867, %v1685
      %v1869 = vadd.f32 %v1868, %v1687
      %v1870 = vadd.f32 %v1869, %v1689
      %v1871 = vadd.f32 %v1870, %v1691
      %v1872 = vadd.f32 %v1871, %v1693
      %v1873 = vadd.f32 %v1872, %v1695
      %v1874 = vadd.f32 %v1873, %v1697
      %v1875 = vadd.f32 %v1874, %v1699
      %v1876 = vadd.f32 %v1875, %v1701
      %v1877 = vadd.f32 %v1876, %v1703
      %v1878 = vadd.f32 %v1877, %v1705
      %v1879 = vadd.f32 %v1878, %v1707
      %v1880 = vadd.f32 %v1879, %v1709
      %v1881 = vadd.f32 %v1880, %v1711
      %v1882 = vadd.f32 %v1881, %v1713
      %v1883 = vadd.f32 %v1882, %v1715
      %v1884 = vadd.f32 %v1883, %v1717
      %v1885 = vadd.f32 %v1884, %v1719
      %v1886 = vadd.f32 %v1885, %v1721
      %v1887 = vadd.f32 %v1886, %v1723
      %v1888 = vadd.f32 %v1887, %v1725
      %v1889 = vadd.f32 %v1888, %v1727
      %v1890 = vadd.f32 %v1889, %v1729
      %v1891 = vadd.f32 %v1890, %v1731
      %v1892 = vadd.f32 %v1891, %v1733
      %v1893 = vadd.f32 %v1892, %v1735
      %v1894 = vadd.f32 %v1893, %v1737
      %v1895 = vadd.f32 %v1894, %v1739
      %v1896 = vadd.f32 %v1895, %v1741
      %v1897 = vadd.f32 %v1896, %v1743
      %v1898 = vadd.f32 %v1897, %v1745
      %v1899 = vadd.f32 %v1898, %v1747
      %v1900 = vadd.f32 %v1899, %v1749
      %v1901 = vadd.f32 %v1900, %v1751
      %v1902 = vadd.f32 %v1901, %v1753
      %v1903 = vadd.f32 %v1902, %v1755
      %v1904 = vadd.f32 %v1903, %v1757
      %v1905 = vadd.f32 %v1904, %v1759
      %v1906 = vadd.f32 %v1905, %v1761
      %v1907 = vadd.f32 %v1906, %v1763
      %v1908 = vadd.f32 %v1907, %v1765
      %v1909 = vadd.f32 %v1908, %v1767
      %v1910 = vadd.f32 %v1909, %v1769
      %v1911 = vadd.f32 %v1910, %v1771
      %v1912 = vadd.f32 %v1911, %v1773
      %v1913 = vadd.f32 %v1912, %v1775
      %v1914 = vadd.f32 %v1913, %v1777
      %v1915 = vadd.f32 %v1914, %v1779
      %v1916 = vadd.f32 %v1915, %v1781
      %v1917 = vadd.f32 %v1916, %v1783
      %v1918 = vadd.f32 %v1917, %v1785
      %v1919 = vadd.f32 %v1918, %v1787
      %v1920 = vrot.slane %v1919, 4
      %v1921 = vadd.f32 %v1919, %v1920
      %v1922 = vrot.slane %v1921, 2
      %v1923 = vadd.f32 %v1921, %v1922
      %v1924 = vrot.slane %v1923, 1
      %v1925 = vadd.f32 %v1923, %v1924
      %p1926 = scmp.eq.s32.totalorder %s22, 0
      // Predicated region
      $region37: #{closed_call.44} parent=35 // pred_check
        %p1927 = pneg %p1926
      $region38: #{closed_call.44} parent=35 // pred_check_branch
        %1929 = sbr.rel (%p1927) target = $region40
      $region39: #{closed_call.44} parent=35 // pred_region
        %1930 = vst [vmem:[%s281] sm:$0xff] 0.0
        %1931 = vst [vmem:[%s281 + $0x8] sm:$0xff] 0.0
        %v1932 = vlaneseq
        %vm1933 = vcmp.ge.s32.totalorder %v1932, 0
        %vm1934 = vcmp.lt.s32.totalorder %v1932, 256
        %vm1935 = vmand %vm1933, %vm1934
        %1936 = vst.msk [vmem:[%s285] sm:$0x3] %vm1935, 0.0
      $region40: #{closed_call.44} parent=35 // pred_fallthru
        _
      %v1937 = vld [vmem:[%s281] sm:$0xff]
      %v1938 = vld [vmem:[%s281 + $0x8] sm:$0xff]
      %v1939 = vadd.f32 %v1937, %v1605
      %v1940 = vadd.f32 %v1938, %v1657
      %1941 = vst [vmem:[%s281] sm:$0xff] %v1939
      %1942 = vst [vmem:[%s281 + $0x8] sm:$0xff] %v1940
      %v1943 = vld [vmem:[%s285] sm:$0x3]
      %v1946 = vrot.slane %v1925, 7
      %vm1947 = vcmask 1040384
      %v1948 = vsel %vm1947, %v1856, %v1946
      %v1950 = vadd.f32 %v1943, %v1948
      %v1951 = vlaneseq
      %vm1952 = vcmp.ge.s32.totalorder %v1951, 0
      %vm1953 = vcmp.lt.s32.totalorder %v1951, 256
      %vm1954 = vmand %vm1952, %vm1953
      %1955 = vst.msk [vmem:[%s285] sm:$0x3] %vm1954, %v1950
      %p1956 = scmp.lt.s32.totalorder %s21, 1
      %s1957 = scalar_select %p1956, %s21, 1
      %s1958 = smul.addr %s1957, 2
      %s1959 = smul.addr %s1958, 8
      %s1960 = scalar_lea.vmem %s4, %s1959
      %p1961 = scmp.lt.s32.totalorder %s21, 1
      %s1962 = scalar_select %p1961, %s21, 1
      %s1963 = smul.addr %s1962, 2
      %s1964 = scalar_lea.vmem %s5, %s1963
      // Predicated region
      $region41: #{closed_call.44} parent=35 // pred_check
        %p1965 = pneg %p145
      $region42: #{closed_call.44} parent=35 // pred_check_branch
        %1967 = sbr.rel (%p1965) target = $region44
      $region43: #{closed_call.44} parent=35 // pred_region
        _
      $region44: #{closed_call.44} parent=35 // pred_fallthru
        _
      // Predicated region
      $region45: #{closed_call.44} parent=35 // pred_check
        %p1968 = pneg %p171
      $region46: #{closed_call.44} parent=35 // pred_check_branch
        %1970 = sbr.rel (%p1968) target = $region48
      $region47: #{closed_call.44} parent=35 // pred_region
        _
      $region48: #{closed_call.44} parent=35 // pred_fallthru
        _
    $region36: #{closed_call.44} parent=5 // pred_fallthru
      _
    %p1971 = scmp.le.s32.totalorder 2, %s12
    // Predicated region
    $region49: #{closed_call.44} parent=5 // pred_check
      %p1972 = pneg %p1971
    $region50: #{closed_call.44} parent=5 // pred_check_branch
      %1974 = sbr.rel (%p1972) target = $region52
    $region51: #{closed_call.44} parent=5 // pred_region
      %s1975 = ssub.s32 %s12, 2
      // Predicated region
      $region53: #{closed_call.44} parent=51 // pred_check
        %p1976 = pneg %p151
      $region54: #{closed_call.44} parent=51 // pred_check_branch
        %1978 = sbr.rel (%p1976) target = $region56
      $region55: #{closed_call.44} parent=51 // pred_region
        %p1979 = scmp.lt.s32.totalorder %s23, 1
        %s1980 = scalar_select %p1979, %s23, 1
        %s1981 = smul.addr %s1980, 2
        %s1982 = smul.addr %s1981, 8
        %s1983 = scalar_lea.vmem %s4, %s1982
      $region56: #{closed_call.44} parent=51 // pred_fallthru
        _
      // Predicated region
      $region57: #{closed_call.44} parent=51 // pred_check
        %p1984 = pneg %p177
      $region58: #{closed_call.44} parent=51 // pred_check_branch
        %1986 = sbr.rel (%p1984) target = $region60
      $region59: #{closed_call.44} parent=51 // pred_region
        %p1987 = scmp.lt.s32.totalorder %s23, 1
        %s1988 = scalar_select %p1987, %s23, 1
        %s1989 = smul.addr %s1988, 2
        %s1990 = scalar_lea.vmem %s5, %s1989
      $region60: #{closed_call.44} parent=51 // pred_fallthru
        _
    $region52: #{closed_call.44} parent=5 // pred_fallthru
      _
  $region6: #{closed_call.44} parent=0 // loop_footer
    %s16 = sadd.s32 1, %s12
  $region7: #{closed_call.44} parent=0 // loop_footer_branch
    %11 = sbr.rel target = $region3
  $region8: #{closed_call.44} parent=0 // loop_exit
    _

// kernel: closed_call.45
$region0: #{closed_call.45}
  #allocation0 [shape = 'u32[]', space=smem, size = 0x4, offset = 0x4, fixed_abs, tag = 'smem constant byte address 0x4 - core index']
  #allocation1 [shape = 'u32[72,128]{1,0:T(1,128)}', space=vmem, size = 0x9000, scoped, tag = 'internal scratch']
  #allocation2 [shape = 'f32[1,1]{1,0:T(1,128)S(1)}', space=vmem, size = 0x200, scoped, tag = 'scoped memory for closed_call.45']
  %s0 = inlined_call_operand.vmem [shape: bf16[1024,16], index: 0, kind: input, shape index: {}]
  %s1 = inlined_call_operand.vmem [shape: bf16[6,1024], index: 1, kind: input, shape index: {}]
  %s2 = inlined_call_operand.vmem [shape: bf16[8,1024], index: 2, kind: input, shape index: {}]
  %s3 = inlined_call_operand.vmem [shape: bf16[16,1], index: 3, kind: input, shape index: {}]
  %s4 = inlined_call_operand.<no memory space> [shape: f32[1,1], index: 4, kind: input, shape index: {}]
  %s5 = inlined_call_operand.vmem [shape: bf16[1024,1], index: 5, kind: output, shape index: {0}]
  %s6 = inlined_call_operand.vmem [shape: f32[2,6,1], index: 6, kind: output, shape index: {1}]
  %s7 = inlined_call_operand.vmem [shape: f32[2,1,1], index: 7, kind: output, shape index: {2}]
  %s8 = inlined_call_operand.vmem [shape: f32[2,8,1], index: 8, kind: output, shape index: {3}]
  %9 = xla_tuple %s5, %s6, %s7, %s8
  %s10 = sld [smem:[#allocation0]]
  $region81: #{closed_call.45} parent=0
    _
  %s12 = ssub.s32 1, %s10
  %s13 = scalar_select 0, %s12, %s10
  %v14 = vstv %s4
  %15 = vst [vmem:[#allocation2] sm:$0x1] %v14
  loop: start=0, step=1, limit=4
  $region2: #{closed_call.45} parent=0 // loop_pre_header
    _
  $region3: #{closed_call.45} parent=0 // loop_header
    %s17 = sphi 0, %s21
    %p18 = scmp.ge.s32.totalorder %s17, 4
    %s24 = sphi 0, %s36
    %s25 = sphi 0, %s32
    %s26 = sphi 0, %s24
    %s27 = sphi 0, %s25
    %s28 = sphi 0, %s26
    %s29 = sphi 0, %s27
    %s41 = sphi 0, %s43
    %s44 = sphi 0, %s41
    %s45 = sphi 0, %s44
    %s61 = sphi 0, %s45
    %s69 = sphi 0, %s71
    %s72 = sphi 0, %s69
    %s73 = sphi 0, %s72
    %s89 = sphi 0, %s73
    %s97 = sphi 0, %s99
    %s100 = sphi 0, %s97
    %s101 = sphi 0, %s100
    %s117 = sphi 0, %s101
    %s121 = sphi 0, %s121
    %s123 = sphi 0, %s121
    %s124 = sphi 0, %s123
    %s138 = sphi 0, %s124
    %s142 = sphi 0, %s142
    %s144 = sphi 0, %s142
    %s145 = sphi 0, %s144
    %s159 = sphi 0, %s145
    %s167 = sphi 0, %s169
    %s170 = sphi 0, %s167
    %s171 = sphi 0, %s170
    %s187 = sphi 0, %s171
    %s193 = sphi 0, %s195
    %s196 = sphi 0, %s193
    %s197 = sphi 0, %s196
    %s213 = sphi 0, %s197
    %s219 = sphi 0, %s221
    %s222 = sphi 0, %s219
    %s223 = sphi 0, %s222
    %s239 = sphi 0, %s223
    %s245 = sphi 0, %s247
    %s248 = sphi 0, %s245
    %s249 = sphi 0, %s248
    %s265 = sphi 0, %s249
  $region4: #{closed_call.45} parent=0 // loop_header_branch
    %20 = sbr.rel (%p18) target = $region8
  $region5: #{closed_call.45} parent=0 // loop_body
    %s22 = ssub.s32 %s17, 1
    %s23 = ssub.s32 %s17, 2
    %s30 = sadd.s32 1, %s25
    %p31 = scmp.ge.s32.totalorder %s30, 1
    %s32 = scalar_select %p31, 0, %s30
    %s33 = sadd.s32 1, %s24
    %s34 = scalar_select %p31, %s33, %s24
    %p35 = scmp.ge.s32.totalorder %s34, 2
    %s36 = scalar_select %p35, 0, %s34
    %s37 = sadd.s32 %s24, %s25
    %s38 = sadd.s32 %s36, %s32
    %s39 = ssub.s32 %s37, %s38
    %p40 = scmp.eq.s32.totalorder %s39, 0
    %s42 = sadd.s32 %s41, 1
    %s43 = scalar_select %p40, %s41, %s42
    %p46 = pneg %p40
    %p47 = scmp.eq.s32.totalorder %s17, 1
    %p48 = por %p46, %p47
    %p49 = scmp.ne.s32.totalorder %s41, %s44
    %p50 = scmp.eq.s32.totalorder %s17, 0
    %p51 = por %p49, %p50
    %p52 = scmp.ne.s32.totalorder %s41, %s44
    %p53 = scmp.eq.s32.totalorder %s22, 1
    %p54 = por %p52, %p53
    %p55 = scmp.ne.s32.totalorder %s44, %s45
    %p56 = scmp.eq.s32.totalorder %s22, 0
    %p57 = por %p55, %p56
    %p58 = scmp.ne.s32.totalorder %s44, %s45
    %p59 = scmp.eq.s32.totalorder %s23, 1
    %p60 = por %p58, %p59
    %p62 = scmp.ne.s32.totalorder %s45, %s61
    %p63 = scmp.eq.s32.totalorder %s23, 0
    %p64 = por %p62, %p63
    %s65 = sadd.s32 %s24, %s25
    %s66 = sadd.s32 %s36, %s32
    %s67 = ssub.s32 %s65, %s66
    %p68 = scmp.eq.s32.totalorder %s67, 0
    %s70 = sadd.s32 %s69, 1
    %s71 = scalar_select %p68, %s69, %s70
    %p74 = pneg %p68
    %p75 = scmp.eq.s32.totalorder %s17, 1
    %p76 = por %p74, %p75
    %p77 = scmp.ne.s32.totalorder %s69, %s72
    %p78 = scmp.eq.s32.totalorder %s17, 0
    %p79 = por %p77, %p78
    %p80 = scmp.ne.s32.totalorder %s69, %s72
    %p81 = scmp.eq.s32.totalorder %s22, 1
    %p82 = por %p80, %p81
    %p83 = scmp.ne.s32.totalorder %s72, %s73
    %p84 = scmp.eq.s32.totalorder %s22, 0
    %p85 = por %p83, %p84
    %p86 = scmp.ne.s32.totalorder %s72, %s73
    %p87 = scmp.eq.s32.totalorder %s23, 1
    %p88 = por %p86, %p87
    %p90 = scmp.ne.s32.totalorder %s73, %s89
    %p91 = scmp.eq.s32.totalorder %s23, 0
    %p92 = por %p90, %p91
    %s93 = sadd.s32 %s24, %s25
    %s94 = sadd.s32 %s36, %s32
    %s95 = ssub.s32 %s93, %s94
    %p96 = scmp.eq.s32.totalorder %s95, 0
    %s98 = sadd.s32 %s97, 1
    %s99 = scalar_select %p96, %s97, %s98
    %p102 = pneg %p96
    %p103 = scmp.eq.s32.totalorder %s17, 1
    %p104 = por %p102, %p103
    %p105 = scmp.ne.s32.totalorder %s97, %s100
    %p106 = scmp.eq.s32.totalorder %s17, 0
    %p107 = por %p105, %p106
    %p108 = scmp.ne.s32.totalorder %s97, %s100
    %p109 = scmp.eq.s32.totalorder %s22, 1
    %p110 = por %p108, %p109
    %p111 = scmp.ne.s32.totalorder %s100, %s101
    %p112 = scmp.eq.s32.totalorder %s22, 0
    %p113 = por %p111, %p112
    %p114 = scmp.ne.s32.totalorder %s100, %s101
    %p115 = scmp.eq.s32.totalorder %s23, 1
    %p116 = por %p114, %p115
    %p118 = scmp.ne.s32.totalorder %s101, %s117
    %p119 = scmp.eq.s32.totalorder %s23, 0
    %p120 = por %p118, %p119
    %s122 = sadd.s32 %s121, 1
    %p125 = scmp.eq.s32.totalorder %s17, 1
    %p126 = scmp.ne.s32.totalorder %s121, %s123
    %p127 = scmp.eq.s32.totalorder %s17, 0
    %p128 = por %p126, %p127
    %p129 = scmp.ne.s32.totalorder %s121, %s123
    %p130 = scmp.eq.s32.totalorder %s22, 1
    %p131 = por %p129, %p130
    %p132 = scmp.ne.s32.totalorder %s123, %s124
    %p133 = scmp.eq.s32.totalorder %s22, 0
    %p134 = por %p132, %p133
    %p135 = scmp.ne.s32.totalorder %s123, %s124
    %p136 = scmp.eq.s32.totalorder %s23, 1
    %p137 = por %p135, %p136
    %p139 = scmp.ne.s32.totalorder %s124, %s138
    %p140 = scmp.eq.s32.totalorder %s23, 0
    %p141 = por %p139, %p140
    %s143 = sadd.s32 %s142, 1
    %p146 = scmp.eq.s32.totalorder %s17, 1
    %p147 = scmp.ne.s32.totalorder %s142, %s144
    %p148 = scmp.eq.s32.totalorder %s17, 0
    %p149 = por %p147, %p148
    %p150 = scmp.ne.s32.totalorder %s142, %s144
    %p151 = scmp.eq.s32.totalorder %s22, 1
    %p152 = por %p150, %p151
    %p153 = scmp.ne.s32.totalorder %s144, %s145
    %p154 = scmp.eq.s32.totalorder %s22, 0
    %p155 = por %p153, %p154
    %p156 = scmp.ne.s32.totalorder %s144, %s145
    %p157 = scmp.eq.s32.totalorder %s23, 1
    %p158 = por %p156, %p157
    %p160 = scmp.ne.s32.totalorder %s145, %s159
    %p161 = scmp.eq.s32.totalorder %s23, 0
    %p162 = por %p160, %p161
    %s163 = sadd.s32 %s24, %s25
    %s164 = sadd.s32 %s36, %s32
    %s165 = ssub.s32 %s163, %s164
    %p166 = scmp.eq.s32.totalorder %s165, 0
    %s168 = sadd.s32 %s167, 1
    %s169 = scalar_select %p166, %s167, %s168
    %p172 = pneg %p166
    %p173 = scmp.eq.s32.totalorder %s17, 1
    %p174 = por %p172, %p173
    %p175 = scmp.ne.s32.totalorder %s167, %s170
    %p176 = scmp.eq.s32.totalorder %s17, 0
    %p177 = por %p175, %p176
    %p178 = scmp.ne.s32.totalorder %s167, %s170
    %p179 = scmp.eq.s32.totalorder %s22, 1
    %p180 = por %p178, %p179
    %p181 = scmp.ne.s32.totalorder %s170, %s171
    %p182 = scmp.eq.s32.totalorder %s22, 0
    %p183 = por %p181, %p182
    %p184 = scmp.ne.s32.totalorder %s170, %s171
    %p185 = scmp.eq.s32.totalorder %s23, 1
    %p186 = por %p184, %p185
    %p188 = scmp.ne.s32.totalorder %s171, %s187
    %p189 = scmp.eq.s32.totalorder %s23, 0
    %p190 = por %p188, %p189
    %s191 = ssub.s32 %s24, %s36
    %p192 = scmp.eq.s32.totalorder %s191, 0
    %s194 = sadd.s32 %s193, 1
    %s195 = scalar_select %p192, %s193, %s194
    %p198 = pneg %p192
    %p199 = scmp.eq.s32.totalorder %s17, 1
    %p200 = por %p198, %p199
    %p201 = scmp.ne.s32.totalorder %s193, %s196
    %p202 = scmp.eq.s32.totalorder %s17, 0
    %p203 = por %p201, %p202
    %p204 = scmp.ne.s32.totalorder %s193, %s196
    %p205 = scmp.eq.s32.totalorder %s22, 1
    %p206 = por %p204, %p205
    %p207 = scmp.ne.s32.totalorder %s196, %s197
    %p208 = scmp.eq.s32.totalorder %s22, 0
    %p209 = por %p207, %p208
    %p210 = scmp.ne.s32.totalorder %s196, %s197
    %p211 = scmp.eq.s32.totalorder %s23, 1
    %p212 = por %p210, %p211
    %p214 = scmp.ne.s32.totalorder %s197, %s213
    %p215 = scmp.eq.s32.totalorder %s23, 0
    %p216 = por %p214, %p215
    %s217 = ssub.s32 %s24, %s36
    %p218 = scmp.eq.s32.totalorder %s217, 0
    %s220 = sadd.s32 %s219, 1
    %s221 = scalar_select %p218, %s219, %s220
    %p224 = pneg %p218
    %p225 = scmp.eq.s32.totalorder %s17, 1
    %p226 = por %p224, %p225
    %p227 = scmp.ne.s32.totalorder %s219, %s222
    %p228 = scmp.eq.s32.totalorder %s17, 0
    %p229 = por %p227, %p228
    %p230 = scmp.ne.s32.totalorder %s219, %s222
    %p231 = scmp.eq.s32.totalorder %s22, 1
    %p232 = por %p230, %p231
    %p233 = scmp.ne.s32.totalorder %s222, %s223
    %p234 = scmp.eq.s32.totalorder %s22, 0
    %p235 = por %p233, %p234
    %p236 = scmp.ne.s32.totalorder %s222, %s223
    %p237 = scmp.eq.s32.totalorder %s23, 1
    %p238 = por %p236, %p237
    %p240 = scmp.ne.s32.totalorder %s223, %s239
    %p241 = scmp.eq.s32.totalorder %s23, 0
    %p242 = por %p240, %p241
    %s243 = ssub.s32 %s24, %s36
    %p244 = scmp.eq.s32.totalorder %s243, 0
    %s246 = sadd.s32 %s245, 1
    %s247 = scalar_select %p244, %s245, %s246
    %p250 = pneg %p244
    %p251 = scmp.eq.s32.totalorder %s17, 1
    %p252 = por %p250, %p251
    %p253 = scmp.ne.s32.totalorder %s245, %s248
    %p254 = scmp.eq.s32.totalorder %s17, 0
    %p255 = por %p253, %p254
    %p256 = scmp.ne.s32.totalorder %s245, %s248
    %p257 = scmp.eq.s32.totalorder %s22, 1
    %p258 = por %p256, %p257
    %p259 = scmp.ne.s32.totalorder %s248, %s249
    %p260 = scmp.eq.s32.totalorder %s22, 0
    %p261 = por %p259, %p260
    %p262 = scmp.ne.s32.totalorder %s248, %s249
    %p263 = scmp.eq.s32.totalorder %s23, 1
    %p264 = por %p262, %p263
    %p266 = scmp.ne.s32.totalorder %s249, %s265
    %p267 = scmp.eq.s32.totalorder %s23, 0
    %p268 = por %p266, %p267
    %p269 = scmp.le.s32.totalorder 1, %s17
    %p270 = scmp.lt.s32.totalorder %s17, 3
    %p271 = pnand %p269, %p270
    %p272 = pneg %p271
    // Predicated region
    $region9: #{closed_call.45} parent=5 // pred_check
      _
    $region10: #{closed_call.45} parent=5 // pred_check_branch
      %274 = sbr.rel (%p271) target = $region12
    $region11: #{closed_call.45} parent=5 // pred_region
      %s275 = ssub.s32 %s17, 1
      // Predicated region
      $region13: #{closed_call.45} parent=11 // pred_check
        %p276 = pneg %p134
      $region14: #{closed_call.45} parent=11 // pred_check_branch
        %278 = sbr.rel (%p276) target = $region16
      $region15: #{closed_call.45} parent=11 // pred_region
        _
      $region16: #{closed_call.45} parent=11 // pred_fallthru
        _
      // Predicated region
      $region17: #{closed_call.45} parent=11 // pred_check
        %p279 = pneg %p155
      $region18: #{closed_call.45} parent=11 // pred_check_branch
        %281 = sbr.rel (%p279) target = $region20
      $region19: #{closed_call.45} parent=11 // pred_region
        _
      $region20: #{closed_call.45} parent=11 // pred_fallthru
        _
    $region12: #{closed_call.45} parent=5 // pred_fallthru
      _
    %p282 = scmp.lt.s32.totalorder %s17, 2
    // Predicated region
    $region21: #{closed_call.45} parent=5 // pred_check
      %p283 = pneg %p282
    $region22: #{closed_call.45} parent=5 // pred_check_branch
      %285 = sbr.rel (%p283) target = $region24
    $region23: #{closed_call.45} parent=5 // pred_region
      // Predicated region
      $region25: #{closed_call.45} parent=23 // pred_check
        %p286 = pneg %p51
      $region26: #{closed_call.45} parent=23 // pred_check_branch
        %288 = sbr.rel (%p286) target = $region28
      $region27: #{closed_call.45} parent=23 // pred_region
        %s289 = sadd.s32 %s24, %s25
        %s290 = smul.u32 64, %s289
        %p291 = scmp.lt.s32.totalorder %s290, 127
        %s292 = scalar_select %p291, %s290, 127
        %s293 = smul.addr %s292, 4
        %s294 = scalar_lea.vmem %s0, %s293
        %s295 = sadd.s32 %s24, %s25
        %s296 = smul.u32 64, %s295
      $region28: #{closed_call.45} parent=23 // pred_fallthru
        _
      // Predicated region
      $region29: #{closed_call.45} parent=23 // pred_check
        %p297 = pneg %p79
      $region30: #{closed_call.45} parent=23 // pred_check_branch
        %299 = sbr.rel (%p297) target = $region32
      $region31: #{closed_call.45} parent=23 // pred_region
        %s300 = sadd.s32 %s24, %s25
        %s301 = smul.u32 4, %s300
        %p302 = scmp.lt.s32.totalorder %s301, 7
        %s303 = scalar_select %p302, %s301, 7
        %s304 = smul.addr %s303, 4
        %s305 = scalar_lea.vmem %s1, %s304
        %s306 = sadd.s32 %s24, %s25
        %s307 = smul.u32 4, %s306
      $region32: #{closed_call.45} parent=23 // pred_fallthru
        _
      // Predicated region
      $region33: #{closed_call.45} parent=23 // pred_check
        %p308 = pneg %p107
      $region34: #{closed_call.45} parent=23 // pred_check_branch
        %310 = sbr.rel (%p308) target = $region36
      $region35: #{closed_call.45} parent=23 // pred_region
        %s311 = sadd.s32 %s24, %s25
        %s312 = smul.u32 4, %s311
        %p313 = scmp.lt.s32.totalorder %s312, 7
        %s314 = scalar_select %p313, %s312, 7
        %s315 = smul.addr %s314, 4
        %s316 = scalar_lea.vmem %s2, %s315
        %s317 = sadd.s32 %s24, %s25
        %s318 = smul.u32 4, %s317
      $region36: #{closed_call.45} parent=23 // pred_fallthru
        _
    $region24: #{closed_call.45} parent=5 // pred_fallthru
      _
    %p319 = scmp.le.s32.totalorder 1, %s17
    %p320 = scmp.lt.s32.totalorder %s17, 3
    %p321 = pnand %p319, %p320
    %p322 = pneg %p321
    // Predicated region
    $region37: #{closed_call.45} parent=5 // pred_check
      _
    $region38: #{closed_call.45} parent=5 // pred_check_branch
      %324 = sbr.rel (%p321) target = $region40
    $region39: #{closed_call.45} parent=5 // pred_region
      %s325 = ssub.s32 %s17, 1
      %s326 = sadd.s32 %s26, %s27
      %s327 = smul.u32 64, %s326
      %p328 = scmp.lt.s32.totalorder %s327, 127
      %s329 = scalar_select %p328, %s327, 127
      %s330 = smul.addr %s329, 4
      %s331 = scalar_lea.vmem %s0, %s330
      %p332 = pneg %p57
      %p333 = pneg %p54
      %s334 = sadd.s32 %s26, %s27
      %s335 = smul.u32 4, %s334
      %p336 = scmp.lt.s32.totalorder %s335, 7
      %s337 = scalar_select %p336, %s335, 7
      %s338 = smul.addr %s337, 4
      %s339 = scalar_lea.vmem %s1, %s338
      %p340 = pneg %p85
      %p341 = pneg %p82
      %s342 = sadd.s32 %s26, %s27
      %s343 = smul.u32 4, %s342
      %p344 = scmp.lt.s32.totalorder %s343, 7
      %s345 = scalar_select %p344, %s343, 7
      %s346 = smul.addr %s345, 4
      %s347 = scalar_lea.vmem %s2, %s346
      %p348 = pneg %p113
      %p349 = pneg %p110
      %p350 = pneg %p134
      %p351 = pneg %p131
      %p352 = pneg %p155
      %p353 = pneg %p152
      %p354 = pneg %p183
      %p355 = pneg %p180
      %s356 = sadd.s32 %s26, %s27
      %s357 = smul.u32 64, %s356
      %p358 = scmp.lt.s32.totalorder %s357, 127
      %s359 = scalar_select %p358, %s357, 127
      %s360 = smul.addr %s359, 4
      %s361 = scalar_lea.vmem %s5, %s360
      %p362 = pneg %p209
      %p363 = pneg %p206
      %p364 = scmp.lt.s32.totalorder %s26, 1
      %s365 = scalar_select %p364, %s26, 1
      %s366 = smul.addr %s365, 8
      %s367 = scalar_lea.vmem %s6, %s366
      %p368 = pneg %p235
      %p369 = pneg %p232
      %p370 = scmp.lt.s32.totalorder %s26, 1
      %s371 = scalar_select %p370, %s26, 1
      %s372 = scalar_lea.vmem %s7, %s371
      %p373 = pneg %p261
      %p374 = pneg %p258
      %p375 = scmp.lt.s32.totalorder %s26, 1
      %s376 = scalar_select %p375, %s26, 1
      %s377 = smul.addr %s376, 8
      %s378 = scalar_lea.vmem %s8, %s377
      %s379 = sadd.s32 %s26, %s27
      %s380 = smul.u32 64, %s379
      %p381 = scmp.lt.s32.totalorder %s380, 127
      %s382 = scalar_select %p381, %s380, 127
      %s383 = smul.addr %s382, 4
      %s384 = scalar_lea.vmem %s0, %s383
      %s385 = sadd.s32 %s26, %s27
      %s386 = smul.u32 64, %s385
      %s387 = sadd.s32 %s26, %s27
      %s388 = smul.u32 4, %s387
      %p389 = scmp.lt.s32.totalorder %s388, 7
      %s390 = scalar_select %p389, %s388, 7
      %s391 = smul.addr %s390, 4
      %s392 = scalar_lea.vmem %s1, %s391
      %s393 = sadd.s32 %s26, %s27
      %s394 = smul.u32 4, %s393
      %s395 = sadd.s32 %s26, %s27
      %s396 = smul.u32 4, %s395
      %p397 = scmp.lt.s32.totalorder %s396, 7
      %s398 = scalar_select %p397, %s396, 7
      %s399 = smul.addr %s398, 4
      %s400 = scalar_lea.vmem %s2, %s399
      %s401 = sadd.s32 %s26, %s27
      %s402 = smul.u32 4, %s401
      %s403 = sadd.s32 %s26, %s27
      %s404 = smul.u32 64, %s403
      %p405 = scmp.lt.s32.totalorder %s404, 127
      %s406 = scalar_select %p405, %s404, 127
      %s407 = smul.addr %s406, 4
      %s408 = scalar_lea.vmem %s5, %s407
      %s409 = sadd.s32 %s26, %s27
      %s410 = smul.u32 64, %s409
      %p411 = scmp.lt.s32.totalorder %s26, 1
      %s412 = scalar_select %p411, %s26, 1
      %s413 = smul.addr %s412, 8
      %s414 = scalar_lea.vmem %s6, %s413
      %p415 = scmp.lt.s32.totalorder %s26, 1
      %s416 = scalar_select %p415, %s26, 1
      %s417 = scalar_lea.vmem %s7, %s416
      %p418 = scmp.lt.s32.totalorder %s26, 1
      %s419 = scalar_select %p418, %s26, 1
      %s420 = smul.addr %s419, 8
      %s421 = scalar_lea.vmem %s8, %s420
      %v423 = vld [vmem:[%s384] sm:$0xf]
      %v424 = vld [vmem:[%s384 + $0x4] sm:$0xf]
      %v425 = vld [vmem:[%s384 + $0x8] sm:$0xf]
      %v426 = vld [vmem:[%s384 + $0xc] sm:$0xf]
      %v427 = vld [vmem:[%s384 + $0x10] sm:$0xf]
      %v428 = vld [vmem:[%s384 + $0x14] sm:$0xf]
      %v429 = vld [vmem:[%s384 + $0x18] sm:$0xf]
      %v430 = vld [vmem:[%s384 + $0x1c] sm:$0xf]
      %v431 = vld [vmem:[%s384 + $0x20] sm:$0xf]
      %v432 = vld [vmem:[%s384 + $0x24] sm:$0xf]
      %v433 = vld [vmem:[%s384 + $0x28] sm:$0xf]
      %v434 = vld [vmem:[%s384 + $0x2c] sm:$0xf]
      %v435 = vld [vmem:[%s384 + $0x30] sm:$0xf]
      %v436 = vld [vmem:[%s384 + $0x34] sm:$0xf]
      %v437 = vld [vmem:[%s384 + $0x38] sm:$0xf]
      %v438 = vld [vmem:[%s384 + $0x3c] sm:$0xf]
      %v439 = vld [vmem:[%s384 + $0x40] sm:$0xf]
      %v440 = vld [vmem:[%s384 + $0x44] sm:$0xf]
      %v441 = vld [vmem:[%s384 + $0x48] sm:$0xf]
      %v442 = vld [vmem:[%s384 + $0x4c] sm:$0xf]
      %v443 = vld [vmem:[%s384 + $0x50] sm:$0xf]
      %v444 = vld [vmem:[%s384 + $0x54] sm:$0xf]
      %v445 = vld [vmem:[%s384 + $0x58] sm:$0xf]
      %v446 = vld [vmem:[%s384 + $0x5c] sm:$0xf]
      %v447 = vld [vmem:[%s384 + $0x60] sm:$0xf]
      %v448 = vld [vmem:[%s384 + $0x64] sm:$0xf]
      %v449 = vld [vmem:[%s384 + $0x68] sm:$0xf]
      %v450 = vld [vmem:[%s384 + $0x6c] sm:$0xf]
      %v451 = vld [vmem:[%s384 + $0x70] sm:$0xf]
      %v452 = vld [vmem:[%s384 + $0x74] sm:$0xf]
      %v453 = vld [vmem:[%s384 + $0x78] sm:$0xf]
      %v454 = vld [vmem:[%s384 + $0x7c] sm:$0xf]
      %v455 = vld [vmem:[%s384 + $0x80] sm:$0xf]
      %v456 = vld [vmem:[%s384 + $0x84] sm:$0xf]
      %v457 = vld [vmem:[%s384 + $0x88] sm:$0xf]
      %v458 = vld [vmem:[%s384 + $0x8c] sm:$0xf]
      %v459 = vld [vmem:[%s384 + $0x90] sm:$0xf]
      %v460 = vld [vmem:[%s384 + $0x94] sm:$0xf]
      %v461 = vld [vmem:[%s384 + $0x98] sm:$0xf]
      %v462 = vld [vmem:[%s384 + $0x9c] sm:$0xf]
      %v463 = vld [vmem:[%s384 + $0xa0] sm:$0xf]
      %v464 = vld [vmem:[%s384 + $0xa4] sm:$0xf]
      %v465 = vld [vmem:[%s384 + $0xa8] sm:$0xf]
      %v466 = vld [vmem:[%s384 + $0xac] sm:$0xf]
      %v467 = vld [vmem:[%s384 + $0xb0] sm:$0xf]
      %v468 = vld [vmem:[%s384 + $0xb4] sm:$0xf]
      %v469 = vld [vmem:[%s384 + $0xb8] sm:$0xf]
      %v470 = vld [vmem:[%s384 + $0xbc] sm:$0xf]
      %v471 = vld [vmem:[%s384 + $0xc0] sm:$0xf]
      %v472 = vld [vmem:[%s384 + $0xc4] sm:$0xf]
      %v473 = vld [vmem:[%s384 + $0xc8] sm:$0xf]
      %v474 = vld [vmem:[%s384 + $0xcc] sm:$0xf]
      %v475 = vld [vmem:[%s384 + $0xd0] sm:$0xf]
      %v476 = vld [vmem:[%s384 + $0xd4] sm:$0xf]
      %v477 = vld [vmem:[%s384 + $0xd8] sm:$0xf]
      %v478 = vld [vmem:[%s384 + $0xdc] sm:$0xf]
      %v479 = vld [vmem:[%s384 + $0xe0] sm:$0xf]
      %v480 = vld [vmem:[%s384 + $0xe4] sm:$0xf]
      %v481 = vld [vmem:[%s384 + $0xe8] sm:$0xf]
      %v482 = vld [vmem:[%s384 + $0xec] sm:$0xf]
      %v483 = vld [vmem:[%s384 + $0xf0] sm:$0xf]
      %v484 = vld [vmem:[%s384 + $0xf4] sm:$0xf]
      %v485 = vld [vmem:[%s384 + $0xf8] sm:$0xf]
      %v486 = vld [vmem:[%s384 + $0xfc] sm:$0xf]
      %v487 = vld [vmem:[%s3] sm:$0xf]
      %v488 = vld [vmem:[%s3 + $0x4] sm:$0xf]
      %v489 = vld [vmem:[#allocation2] sm:$0x1]
      %v491 = vperm.slane %v489, 0
      %v557 = vunpack.c.l.b16 %v423
      %v558 = vunpack.c.l.b16 %v424
      %v559 = vunpack.c.l.b16 %v425
      %v560 = vunpack.c.l.b16 %v426
      %v561 = vunpack.c.l.b16 %v427
      %v562 = vunpack.c.l.b16 %v428
      %v563 = vunpack.c.l.b16 %v429
      %v564 = vunpack.c.l.b16 %v430
      %v565 = vunpack.c.l.b16 %v431
      %v566 = vunpack.c.l.b16 %v432
      %v567 = vunpack.c.l.b16 %v433
      %v568 = vunpack.c.l.b16 %v434
      %v569 = vunpack.c.l.b16 %v435
      %v570 = vunpack.c.l.b16 %v436
      %v571 = vunpack.c.l.b16 %v437
      %v572 = vunpack.c.l.b16 %v438
      %v573 = vunpack.c.l.b16 %v439
      %v574 = vunpack.c.l.b16 %v440
      %v575 = vunpack.c.l.b16 %v441
      %v576 = vunpack.c.l.b16 %v442
      %v577 = vunpack.c.l.b16 %v443
      %v578 = vunpack.c.l.b16 %v444
      %v579 = vunpack.c.l.b16 %v445
      %v580 = vunpack.c.l.b16 %v446
      %v581 = vunpack.c.l.b16 %v447
      %v582 = vunpack.c.l.b16 %v448
      %v583 = vunpack.c.l.b16 %v449
      %v584 = vunpack.c.l.b16 %v450
      %v585 = vunpack.c.l.b16 %v451
      %v586 = vunpack.c.l.b16 %v452
      %v587 = vunpack.c.l.b16 %v453
      %v588 = vunpack.c.l.b16 %v454
      %v589 = vunpack.c.l.b16 %v455
      %v590 = vunpack.c.l.b16 %v456
      %v591 = vunpack.c.l.b16 %v457
      %v592 = vunpack.c.l.b16 %v458
      %v593 = vunpack.c.l.b16 %v459
      %v594 = vunpack.c.l.b16 %v460
      %v595 = vunpack.c.l.b16 %v461
      %v596 = vunpack.c.l.b16 %v462
      %v597 = vunpack.c.l.b16 %v463
      %v598 = vunpack.c.l.b16 %v464
      %v599 = vunpack.c.l.b16 %v465
      %v600 = vunpack.c.l.b16 %v466
      %v601 = vunpack.c.l.b16 %v467
      %v602 = vunpack.c.l.b16 %v468
      %v603 = vunpack.c.l.b16 %v469
      %v604 = vunpack.c.l.b16 %v470
      %v605 = vunpack.c.l.b16 %v471
      %v606 = vunpack.c.l.b16 %v472
      %v607 = vunpack.c.l.b16 %v473
      %v608 = vunpack.c.l.b16 %v474
      %v609 = vunpack.c.l.b16 %v475
      %v610 = vunpack.c.l.b16 %v476
      %v611 = vunpack.c.l.b16 %v477
      %v612 = vunpack.c.l.b16 %v478
      %v613 = vunpack.c.l.b16 %v479
      %v614 = vunpack.c.l.b16 %v480
      %v615 = vunpack.c.l.b16 %v481
      %v616 = vunpack.c.l.b16 %v482
      %v617 = vunpack.c.l.b16 %v483
      %v618 = vunpack.c.l.b16 %v484
      %v619 = vunpack.c.l.b16 %v485
      %v620 = vunpack.c.l.b16 %v486
      %v621 = vpack.c.b16 %v558, %v557
      %v622 = vpack.c.b16 %v560, %v559
      %v623 = vpack.c.b16 %v562, %v561
      %v624 = vpack.c.b16 %v564, %v563
      %v625 = vpack.c.b16 %v566, %v565
      %v626 = vpack.c.b16 %v568, %v567
      %v627 = vpack.c.b16 %v570, %v569
      %v628 = vpack.c.b16 %v572, %v571
      %v629 = vpack.c.b16 %v574, %v573
      %v630 = vpack.c.b16 %v576, %v575
      %v631 = vpack.c.b16 %v578, %v577
      %v632 = vpack.c.b16 %v580, %v579
      %v633 = vpack.c.b16 %v582, %v581
      %v634 = vpack.c.b16 %v584, %v583
      %v635 = vpack.c.b16 %v586, %v585
      %v636 = vpack.c.b16 %v588, %v587
      %v637 = vpack.c.b16 %v590, %v589
      %v638 = vpack.c.b16 %v592, %v591
      %v639 = vpack.c.b16 %v594, %v593
      %v640 = vpack.c.b16 %v596, %v595
      %v641 = vpack.c.b16 %v598, %v597
      %v642 = vpack.c.b16 %v600, %v599
      %v643 = vpack.c.b16 %v602, %v601
      %v644 = vpack.c.b16 %v604, %v603
      %v645 = vpack.c.b16 %v606, %v605
      %v646 = vpack.c.b16 %v608, %v607
      %v647 = vpack.c.b16 %v610, %v609
      %v648 = vpack.c.b16 %v612, %v611
      %v649 = vpack.c.b16 %v614, %v613
      %v650 = vpack.c.b16 %v616, %v615
      %v651 = vpack.c.b16 %v618, %v617
      %v652 = vpack.c.b16 %v620, %v619
      %v655 = vunpack.c.l.b16 %v487
      %v656 = vunpack.c.l.b16 %v488
      %v657 = vpack.c.b16 %v656, %v655
      %vm659 = vcmask 130048
      %v661 = vsel %vm659, %v621, 0
      %v664 = vsel %vm659, %v622, 0
      %v667 = vsel %vm659, %v623, 0
      %v670 = vsel %vm659, %v624, 0
      %v673 = vsel %vm659, %v625, 0
      %v676 = vsel %vm659, %v626, 0
      %v679 = vsel %vm659, %v627, 0
      %v682 = vsel %vm659, %v628, 0
      %v685 = vsel %vm659, %v629, 0
      %v688 = vsel %vm659, %v630, 0
      %v691 = vsel %vm659, %v631, 0
      %v694 = vsel %vm659, %v632, 0
      %v697 = vsel %vm659, %v633, 0
      %v700 = vsel %vm659, %v634, 0
      %v703 = vsel %vm659, %v635, 0
      %v706 = vsel %vm659, %v636, 0
      %v709 = vsel %vm659, %v637, 0
      %v712 = vsel %vm659, %v638, 0
      %v715 = vsel %vm659, %v639, 0
      %v718 = vsel %vm659, %v640, 0
      %v721 = vsel %vm659, %v641, 0
      %v724 = vsel %vm659, %v642, 0
      %v727 = vsel %vm659, %v643, 0
      %v730 = vsel %vm659, %v644, 0
      %v733 = vsel %vm659, %v645, 0
      %v736 = vsel %vm659, %v646, 0
      %v739 = vsel %vm659, %v647, 0
      %v742 = vsel %vm659, %v648, 0
      %v745 = vsel %vm659, %v649, 0
      %v748 = vsel %vm659, %v650, 0
      %v751 = vsel %vm659, %v651, 0
      %v754 = vsel %vm659, %v652, 0
      %756 = vmatpush.bf16.msra.mxu0 0
      %757 = vmatpush.bf16.msra.mxu0 0
      %758 = vmatpush.bf16.msra.mxu0 0
      %759 = vmatpush.bf16.msra.mxu0 0
      %760 = vmatpush.bf16.msra.mxu0 0
      %761 = vmatpush.bf16.msra.mxu0 0
      %762 = vmatpush.bf16.msra.mxu0 0
      %763 = vmatpush.bf16.msra.mxu0 %v657
      %764 = vmatmul.bf16.gmra.mxu0 %v661
      %v765 = vpop.f32.mrf.mxu0
      %v766 = vadd.f32 %v491, %v765
      %v767 = vpop.f32.mrf.mxu0
      %v768 = vadd.f32 %v491, %v767
      %769 = vmatmul.bf16.gmra.mxu0 %v664
      %v770 = vpop.f32.mrf.mxu0
      %v771 = vadd.f32 %v491, %v770
      %v772 = vpop.f32.mrf.mxu0
      %v773 = vadd.f32 %v491, %v772
      %774 = vmatmul.bf16.gmra.mxu0 %v667
      %v775 = vpop.f32.mrf.mxu0
      %v776 = vadd.f32 %v491, %v775
      %v777 = vpop.f32.mrf.mxu0
      %v778 = vadd.f32 %v491, %v777
      %779 = vmatmul.bf16.gmra.mxu0 %v670
      %v780 = vpop.f32.mrf.mxu0
      %v781 = vadd.f32 %v491, %v780
      %v782 = vpop.f32.mrf.mxu0
      %v783 = vadd.f32 %v491, %v782
      %784 = vmatmul.bf16.gmra.mxu0 %v673
      %v785 = vpop.f32.mrf.mxu0
      %v786 = vadd.f32 %v491, %v785
      %v787 = vpop.f32.mrf.mxu0
      %v788 = vadd.f32 %v491, %v787
      %789 = vmatmul.bf16.gmra.mxu0 %v676
      %v790 = vpop.f32.mrf.mxu0
      %v791 = vadd.f32 %v491, %v790
      %v792 = vpop.f32.mrf.mxu0
      %v793 = vadd.f32 %v491, %v792
      %794 = vmatmul.bf16.gmra.mxu0 %v679
      %v795 = vpop.f32.mrf.mxu0
      %v796 = vadd.f32 %v491, %v795
      %v797 = vpop.f32.mrf.mxu0
      %v798 = vadd.f32 %v491, %v797
      %799 = vmatmul.bf16.gmra.mxu0 %v682
      %v800 = vpop.f32.mrf.mxu0
      %v801 = vadd.f32 %v491, %v800
      %v802 = vpop.f32.mrf.mxu0
      %v803 = vadd.f32 %v491, %v802
      %804 = vmatmul.bf16.gmra.mxu0 %v685
      %v805 = vpop.f32.mrf.mxu0
      %v806 = vadd.f32 %v491, %v805
      %v807 = vpop.f32.mrf.mxu0
      %v808 = vadd.f32 %v491, %v807
      %809 = vmatmul.bf16.gmra.mxu0 %v688
      %v810 = vpop.f32.mrf.mxu0
      %v811 = vadd.f32 %v491, %v810
      %v812 = vpop.f32.mrf.mxu0
      %v813 = vadd.f32 %v491, %v812
      %814 = vmatmul.bf16.gmra.mxu0 %v691
      %v815 = vpop.f32.mrf.mxu0
      %v816 = vadd.f32 %v491, %v815
      %v817 = vpop.f32.mrf.mxu0
      %v818 = vadd.f32 %v491, %v817
      %819 = vmatmul.bf16.gmra.mxu0 %v694
      %v820 = vpop.f32.mrf.mxu0
      %v821 = vadd.f32 %v491, %v820
      %v822 = vpop.f32.mrf.mxu0
      %v823 = vadd.f32 %v491, %v822
      %824 = vmatmul.bf16.gmra.mxu0 %v697
      %v825 = vpop.f32.mrf.mxu0
      %v826 = vadd.f32 %v491, %v825
      %v827 = vpop.f32.mrf.mxu0
      %v828 = vadd.f32 %v491, %v827
      %829 = vmatmul.bf16.gmra.mxu0 %v700
      %v830 = vpop.f32.mrf.mxu0
      %v831 = vadd.f32 %v491, %v830
      %v832 = vpop.f32.mrf.mxu0
      %v833 = vadd.f32 %v491, %v832
      %834 = vmatmul.bf16.gmra.mxu0 %v703
      %v835 = vpop.f32.mrf.mxu0
      %v836 = vadd.f32 %v491, %v835
      %v837 = vpop.f32.mrf.mxu0
      %v838 = vadd.f32 %v491, %v837
      %839 = vmatmul.bf16.gmra.mxu0 %v706
      %v840 = vpop.f32.mrf.mxu0
      %v841 = vadd.f32 %v491, %v840
      %v842 = vpop.f32.mrf.mxu0
      %v843 = vadd.f32 %v491, %v842
      %844 = vmatmul.bf16.gmra.mxu0 %v709
      %v845 = vpop.f32.mrf.mxu0
      %v846 = vadd.f32 %v491, %v845
      %v847 = vpop.f32.mrf.mxu0
      %v848 = vadd.f32 %v491, %v847
      %849 = vmatmul.bf16.gmra.mxu0 %v712
      %v850 = vpop.f32.mrf.mxu0
      %v851 = vadd.f32 %v491, %v850
      %v852 = vpop.f32.mrf.mxu0
      %v853 = vadd.f32 %v491, %v852
      %854 = vmatmul.bf16.gmra.mxu0 %v715
      %v855 = vpop.f32.mrf.mxu0
      %v856 = vadd.f32 %v491, %v855
      %v857 = vpop.f32.mrf.mxu0
      %v858 = vadd.f32 %v491, %v857
      %859 = vmatmul.bf16.gmra.mxu0 %v718
      %v860 = vpop.f32.mrf.mxu0
      %v861 = vadd.f32 %v491, %v860
      %v862 = vpop.f32.mrf.mxu0
      %v863 = vadd.f32 %v491, %v862
      %864 = vmatmul.bf16.gmra.mxu0 %v721
      %v865 = vpop.f32.mrf.mxu0
      %v866 = vadd.f32 %v491, %v865
      %v867 = vpop.f32.mrf.mxu0
      %v868 = vadd.f32 %v491, %v867
      %869 = vmatmul.bf16.gmra.mxu0 %v724
      %v870 = vpop.f32.mrf.mxu0
      %v871 = vadd.f32 %v491, %v870
      %v872 = vpop.f32.mrf.mxu0
      %v873 = vadd.f32 %v491, %v872
      %874 = vmatmul.bf16.gmra.mxu0 %v727
      %v875 = vpop.f32.mrf.mxu0
      %v876 = vadd.f32 %v491, %v875
      %v877 = vpop.f32.mrf.mxu0
      %v878 = vadd.f32 %v491, %v877
      %879 = vmatmul.bf16.gmra.mxu0 %v730
      %v880 = vpop.f32.mrf.mxu0
      %v881 = vadd.f32 %v491, %v880
      %v882 = vpop.f32.mrf.mxu0
      %v883 = vadd.f32 %v491, %v882
      %884 = vmatmul.bf16.gmra.mxu0 %v733
      %v885 = vpop.f32.mrf.mxu0
      %v886 = vadd.f32 %v491, %v885
      %v887 = vpop.f32.mrf.mxu0
      %v888 = vadd.f32 %v491, %v887
      %889 = vmatmul.bf16.gmra.mxu0 %v736
      %v890 = vpop.f32.mrf.mxu0
      %v891 = vadd.f32 %v491, %v890
      %v892 = vpop.f32.mrf.mxu0
      %v893 = vadd.f32 %v491, %v892
      %894 = vmatmul.bf16.gmra.mxu0 %v739
      %v895 = vpop.f32.mrf.mxu0
      %v896 = vadd.f32 %v491, %v895
      %v897 = vpop.f32.mrf.mxu0
      %v898 = vadd.f32 %v491, %v897
      %899 = vmatmul.bf16.gmra.mxu0 %v742
      %v900 = vpop.f32.mrf.mxu0
      %v901 = vadd.f32 %v491, %v900
      %v902 = vpop.f32.mrf.mxu0
      %v903 = vadd.f32 %v491, %v902
      %904 = vmatmul.bf16.gmra.mxu0 %v745
      %v905 = vpop.f32.mrf.mxu0
      %v906 = vadd.f32 %v491, %v905
      %v907 = vpop.f32.mrf.mxu0
      %v908 = vadd.f32 %v491, %v907
      %909 = vmatmul.bf16.gmra.mxu0 %v748
      %v910 = vpop.f32.mrf.mxu0
      %v911 = vadd.f32 %v491, %v910
      %v912 = vpop.f32.mrf.mxu0
      %v913 = vadd.f32 %v491, %v912
      %914 = vmatmul.bf16.gmra.mxu0 %v751
      %v915 = vpop.f32.mrf.mxu0
      %v916 = vadd.f32 %v491, %v915
      %v917 = vpop.f32.mrf.mxu0
      %v918 = vadd.f32 %v491, %v917
      %919 = vmatmul.bf16.gmra.mxu0 %v754
      %v920 = vpop.f32.mrf.mxu0
      %v921 = vadd.f32 %v491, %v920
      %v922 = vpop.f32.mrf.mxu0
      %v923 = vadd.f32 %v491, %v922
      %924 = vdwg.mxu0
      %v925 = vmul.f32 %v766, 0.5
      %v926 = vmul.f32 %v768, 0.5
      %v927 = vmul.f32 %v771, 0.5
      %v928 = vmul.f32 %v773, 0.5
      %v929 = vmul.f32 %v776, 0.5
      %v930 = vmul.f32 %v778, 0.5
      %v931 = vmul.f32 %v781, 0.5
      %v932 = vmul.f32 %v783, 0.5
      %v933 = vmul.f32 %v786, 0.5
      %v934 = vmul.f32 %v788, 0.5
      %v935 = vmul.f32 %v791, 0.5
      %v936 = vmul.f32 %v793, 0.5
      %v937 = vmul.f32 %v796, 0.5
      %v938 = vmul.f32 %v798, 0.5
      %v939 = vmul.f32 %v801, 0.5
      %v940 = vmul.f32 %v803, 0.5
      %v941 = vmul.f32 %v806, 0.5
      %v942 = vmul.f32 %v808, 0.5
      %v943 = vmul.f32 %v811, 0.5
      %v944 = vmul.f32 %v813, 0.5
      %v945 = vmul.f32 %v816, 0.5
      %v946 = vmul.f32 %v818, 0.5
      %v947 = vmul.f32 %v821, 0.5
      %v948 = vmul.f32 %v823, 0.5
      %v949 = vmul.f32 %v826, 0.5
      %v950 = vmul.f32 %v828, 0.5
      %v951 = vmul.f32 %v831, 0.5
      %v952 = vmul.f32 %v833, 0.5
      %v953 = vmul.f32 %v836, 0.5
      %v954 = vmul.f32 %v838, 0.5
      %v955 = vmul.f32 %v841, 0.5
      %v956 = vmul.f32 %v843, 0.5
      %v957 = vmul.f32 %v846, 0.5
      %v958 = vmul.f32 %v848, 0.5
      %v959 = vmul.f32 %v851, 0.5
      %v960 = vmul.f32 %v853, 0.5
      %v961 = vmul.f32 %v856, 0.5
      %v962 = vmul.f32 %v858, 0.5
      %v963 = vmul.f32 %v861, 0.5
      %v964 = vmul.f32 %v863, 0.5
      %v965 = vmul.f32 %v866, 0.5
      %v966 = vmul.f32 %v868, 0.5
      %v967 = vmul.f32 %v871, 0.5
      %v968 = vmul.f32 %v873, 0.5
      %v969 = vmul.f32 %v876, 0.5
      %v970 = vmul.f32 %v878, 0.5
      %v971 = vmul.f32 %v881, 0.5
      %v972 = vmul.f32 %v883, 0.5
      %v973 = vmul.f32 %v886, 0.5
      %v974 = vmul.f32 %v888, 0.5
      %v975 = vmul.f32 %v891, 0.5
      %v976 = vmul.f32 %v893, 0.5
      %v977 = vmul.f32 %v896, 0.5
      %v978 = vmul.f32 %v898, 0.5
      %v979 = vmul.f32 %v901, 0.5
      %v980 = vmul.f32 %v903, 0.5
      %v981 = vmul.f32 %v906, 0.5
      %v982 = vmul.f32 %v908, 0.5
      %v983 = vmul.f32 %v911, 0.5
      %v984 = vmul.f32 %v913, 0.5
      %v985 = vmul.f32 %v916, 0.5
      %v986 = vmul.f32 %v918, 0.5
      %v987 = vmul.f32 %v921, 0.5
      %v988 = vmul.f32 %v923, 0.5
      %v989 = vtanh.pop %v925
      %v990 = vtanh.pop %v926
      %v991 = vtanh.pop %v927
      %v992 = vtanh.pop %v928
      %v993 = vtanh.pop %v929
      %v994 = vtanh.pop %v930
      %v995 = vtanh.pop %v931
      %v996 = vtanh.pop %v932
      %v997 = vtanh.pop %v933
      %v998 = vtanh.pop %v934
      %v999 = vtanh.pop %v935
      %v1000 = vtanh.pop %v936
      %v1001 = vtanh.pop %v937
      %v1002 = vtanh.pop %v938
      %v1003 = vtanh.pop %v939
      %v1004 = vtanh.pop %v940
      %v1005 = vtanh.pop %v941
      %v1006 = vtanh.pop %v942
      %v1007 = vtanh.pop %v943
      %v1008 = vtanh.pop %v944
      %v1009 = vtanh.pop %v945
      %v1010 = vtanh.pop %v946
      %v1011 = vtanh.pop %v947
      %v1012 = vtanh.pop %v948
      %v1013 = vtanh.pop %v949
      %v1014 = vtanh.pop %v950
      %v1015 = vtanh.pop %v951
      %v1016 = vtanh.pop %v952
      %v1017 = vtanh.pop %v953
      %v1018 = vtanh.pop %v954
      %v1019 = vtanh.pop %v955
      %v1020 = vtanh.pop %v956
      %v1021 = vtanh.pop %v957
      %v1022 = vtanh.pop %v958
      %v1023 = vtanh.pop %v959
      %v1024 = vtanh.pop %v960
      %v1025 = vtanh.pop %v961
      %v1026 = vtanh.pop %v962
      %v1027 = vtanh.pop %v963
      %v1028 = vtanh.pop %v964
      %v1029 = vtanh.pop %v965
      %v1030 = vtanh.pop %v966
      %v1031 = vtanh.pop %v967
      %v1032 = vtanh.pop %v968
      %v1033 = vtanh.pop %v969
      %v1034 = vtanh.pop %v970
      %v1035 = vtanh.pop %v971
      %v1036 = vtanh.pop %v972
      %v1037 = vtanh.pop %v973
      %v1038 = vtanh.pop %v974
      %v1039 = vtanh.pop %v975
      %v1040 = vtanh.pop %v976
      %v1041 = vtanh.pop %v977
      %v1042 = vtanh.pop %v978
      %v1043 = vtanh.pop %v979
      %v1044 = vtanh.pop %v980
      %v1045 = vtanh.pop %v981
      %v1046 = vtanh.pop %v982
      %v1047 = vtanh.pop %v983
      %v1048 = vtanh.pop %v984
      %v1049 = vtanh.pop %v985
      %v1050 = vtanh.pop %v986
      %v1051 = vtanh.pop %v987
      %v1052 = vtanh.pop %v988
      %v1053 = vmul.f32 %v989, 0.5
      %v1054 = vmul.f32 %v990, 0.5
      %v1055 = vmul.f32 %v991, 0.5
      %v1056 = vmul.f32 %v992, 0.5
      %v1057 = vmul.f32 %v993, 0.5
      %v1058 = vmul.f32 %v994, 0.5
      %v1059 = vmul.f32 %v995, 0.5
      %v1060 = vmul.f32 %v996, 0.5
      %v1061 = vmul.f32 %v997, 0.5
      %v1062 = vmul.f32 %v998, 0.5
      %v1063 = vmul.f32 %v999, 0.5
      %v1064 = vmul.f32 %v1000, 0.5
      %v1065 = vmul.f32 %v1001, 0.5
      %v1066 = vmul.f32 %v1002, 0.5
      %v1067 = vmul.f32 %v1003, 0.5
      %v1068 = vmul.f32 %v1004, 0.5
      %v1069 = vmul.f32 %v1005, 0.5
      %v1070 = vmul.f32 %v1006, 0.5
      %v1071 = vmul.f32 %v1007, 0.5
      %v1072 = vmul.f32 %v1008, 0.5
      %v1073 = vmul.f32 %v1009, 0.5
      %v1074 = vmul.f32 %v1010, 0.5
      %v1075 = vmul.f32 %v1011, 0.5
      %v1076 = vmul.f32 %v1012, 0.5
      %v1077 = vmul.f32 %v1013, 0.5
      %v1078 = vmul.f32 %v1014, 0.5
      %v1079 = vmul.f32 %v1015, 0.5
      %v1080 = vmul.f32 %v1016, 0.5
      %v1081 = vmul.f32 %v1017, 0.5
      %v1082 = vmul.f32 %v1018, 0.5
      %v1083 = vmul.f32 %v1019, 0.5
      %v1084 = vmul.f32 %v1020, 0.5
      %v1085 = vmul.f32 %v1021, 0.5
      %v1086 = vmul.f32 %v1022, 0.5
      %v1087 = vmul.f32 %v1023, 0.5
      %v1088 = vmul.f32 %v1024, 0.5
      %v1089 = vmul.f32 %v1025, 0.5
      %v1090 = vmul.f32 %v1026, 0.5
      %v1091 = vmul.f32 %v1027, 0.5
      %v1092 = vmul.f32 %v1028, 0.5
      %v1093 = vmul.f32 %v1029, 0.5
      %v1094 = vmul.f32 %v1030, 0.5
      %v1095 = vmul.f32 %v1031, 0.5
      %v1096 = vmul.f32 %v1032, 0.5
      %v1097 = vmul.f32 %v1033, 0.5
      %v1098 = vmul.f32 %v1034, 0.5
      %v1099 = vmul.f32 %v1035, 0.5
      %v1100 = vmul.f32 %v1036, 0.5
      %v1101 = vmul.f32 %v1037, 0.5
      %v1102 = vmul.f32 %v1038, 0.5
      %v1103 = vmul.f32 %v1039, 0.5
      %v1104 = vmul.f32 %v1040, 0.5
      %v1105 = vmul.f32 %v1041, 0.5
      %v1106 = vmul.f32 %v1042, 0.5
      %v1107 = vmul.f32 %v1043, 0.5
      %v1108 = vmul.f32 %v1044, 0.5
      %v1109 = vmul.f32 %v1045, 0.5
      %v1110 = vmul.f32 %v1046, 0.5
      %v1111 = vmul.f32 %v1047, 0.5
      %v1112 = vmul.f32 %v1048, 0.5
      %v1113 = vmul.f32 %v1049, 0.5
      %v1114 = vmul.f32 %v1050, 0.5
      %v1115 = vmul.f32 %v1051, 0.5
      %v1116 = vmul.f32 %v1052, 0.5
      %v1117 = vadd.f32 %v1053, 0.5
      %v1118 = vadd.f32 %v1054, 0.5
      %v1119 = vadd.f32 %v1055, 0.5
      %v1120 = vadd.f32 %v1056, 0.5
      %v1121 = vadd.f32 %v1057, 0.5
      %v1122 = vadd.f32 %v1058, 0.5
      %v1123 = vadd.f32 %v1059, 0.5
      %v1124 = vadd.f32 %v1060, 0.5
      %v1125 = vadd.f32 %v1061, 0.5
      %v1126 = vadd.f32 %v1062, 0.5
      %v1127 = vadd.f32 %v1063, 0.5
      %v1128 = vadd.f32 %v1064, 0.5
      %v1129 = vadd.f32 %v1065, 0.5
      %v1130 = vadd.f32 %v1066, 0.5
      %v1131 = vadd.f32 %v1067, 0.5
      %v1132 = vadd.f32 %v1068, 0.5
      %v1133 = vadd.f32 %v1069, 0.5
      %v1134 = vadd.f32 %v1070, 0.5
      %v1135 = vadd.f32 %v1071, 0.5
      %v1136 = vadd.f32 %v1072, 0.5
      %v1137 = vadd.f32 %v1073, 0.5
      %v1138 = vadd.f32 %v1074, 0.5
      %v1139 = vadd.f32 %v1075, 0.5
      %v1140 = vadd.f32 %v1076, 0.5
      %v1141 = vadd.f32 %v1077, 0.5
      %v1142 = vadd.f32 %v1078, 0.5
      %v1143 = vadd.f32 %v1079, 0.5
      %v1144 = vadd.f32 %v1080, 0.5
      %v1145 = vadd.f32 %v1081, 0.5
      %v1146 = vadd.f32 %v1082, 0.5
      %v1147 = vadd.f32 %v1083, 0.5
      %v1148 = vadd.f32 %v1084, 0.5
      %v1149 = vadd.f32 %v1085, 0.5
      %v1150 = vadd.f32 %v1086, 0.5
      %v1151 = vadd.f32 %v1087, 0.5
      %v1152 = vadd.f32 %v1088, 0.5
      %v1153 = vadd.f32 %v1089, 0.5
      %v1154 = vadd.f32 %v1090, 0.5
      %v1155 = vadd.f32 %v1091, 0.5
      %v1156 = vadd.f32 %v1092, 0.5
      %v1157 = vadd.f32 %v1093, 0.5
      %v1158 = vadd.f32 %v1094, 0.5
      %v1159 = vadd.f32 %v1095, 0.5
      %v1160 = vadd.f32 %v1096, 0.5
      %v1161 = vadd.f32 %v1097, 0.5
      %v1162 = vadd.f32 %v1098, 0.5
      %v1163 = vadd.f32 %v1099, 0.5
      %v1164 = vadd.f32 %v1100, 0.5
      %v1165 = vadd.f32 %v1101, 0.5
      %v1166 = vadd.f32 %v1102, 0.5
      %v1167 = vadd.f32 %v1103, 0.5
      %v1168 = vadd.f32 %v1104, 0.5
      %v1169 = vadd.f32 %v1105, 0.5
      %v1170 = vadd.f32 %v1106, 0.5
      %v1171 = vadd.f32 %v1107, 0.5
      %v1172 = vadd.f32 %v1108, 0.5
      %v1173 = vadd.f32 %v1109, 0.5
      %v1174 = vadd.f32 %v1110, 0.5
      %v1175 = vadd.f32 %v1111, 0.5
      %v1176 = vadd.f32 %v1112, 0.5
      %v1177 = vadd.f32 %v1113, 0.5
      %v1178 = vadd.f32 %v1114, 0.5
      %v1179 = vadd.f32 %v1115, 0.5
      %v1180 = vadd.f32 %v1116, 0.5
      %v1181 = vpack.c.bf16 %v1117, %v1117
      %v1182 = vpack.c.bf16 %v1118, %v1118
      %v1183 = vpack.c.bf16 %v1119, %v1119
      %v1184 = vpack.c.bf16 %v1120, %v1120
      %v1185 = vpack.c.bf16 %v1121, %v1121
      %v1186 = vpack.c.bf16 %v1122, %v1122
      %v1187 = vpack.c.bf16 %v1123, %v1123
      %v1188 = vpack.c.bf16 %v1124, %v1124
      %v1189 = vpack.c.bf16 %v1125, %v1125
      %v1190 = vpack.c.bf16 %v1126, %v1126
      %v1191 = vpack.c.bf16 %v1127, %v1127
      %v1192 = vpack.c.bf16 %v1128, %v1128
      %v1193 = vpack.c.bf16 %v1129, %v1129
      %v1194 = vpack.c.bf16 %v1130, %v1130
      %v1195 = vpack.c.bf16 %v1131, %v1131
      %v1196 = vpack.c.bf16 %v1132, %v1132
      %v1197 = vpack.c.bf16 %v1133, %v1133
      %v1198 = vpack.c.bf16 %v1134, %v1134
      %v1199 = vpack.c.bf16 %v1135, %v1135
      %v1200 = vpack.c.bf16 %v1136, %v1136
      %v1201 = vpack.c.bf16 %v1137, %v1137
      %v1202 = vpack.c.bf16 %v1138, %v1138
      %v1203 = vpack.c.bf16 %v1139, %v1139
      %v1204 = vpack.c.bf16 %v1140, %v1140
      %v1205 = vpack.c.bf16 %v1141, %v1141
      %v1206 = vpack.c.bf16 %v1142, %v1142
      %v1207 = vpack.c.bf16 %v1143, %v1143
      %v1208 = vpack.c.bf16 %v1144, %v1144
      %v1209 = vpack.c.bf16 %v1145, %v1145
      %v1210 = vpack.c.bf16 %v1146, %v1146
      %v1211 = vpack.c.bf16 %v1147, %v1147
      %v1212 = vpack.c.bf16 %v1148, %v1148
      %v1213 = vpack.c.bf16 %v1149, %v1149
      %v1214 = vpack.c.bf16 %v1150, %v1150
      %v1215 = vpack.c.bf16 %v1151, %v1151
      %v1216 = vpack.c.bf16 %v1152, %v1152
      %v1217 = vpack.c.bf16 %v1153, %v1153
      %v1218 = vpack.c.bf16 %v1154, %v1154
      %v1219 = vpack.c.bf16 %v1155, %v1155
      %v1220 = vpack.c.bf16 %v1156, %v1156
      %v1221 = vpack.c.bf16 %v1157, %v1157
      %v1222 = vpack.c.bf16 %v1158, %v1158
      %v1223 = vpack.c.bf16 %v1159, %v1159
      %v1224 = vpack.c.bf16 %v1160, %v1160
      %v1225 = vpack.c.bf16 %v1161, %v1161
      %v1226 = vpack.c.bf16 %v1162, %v1162
      %v1227 = vpack.c.bf16 %v1163, %v1163
      %v1228 = vpack.c.bf16 %v1164, %v1164
      %v1229 = vpack.c.bf16 %v1165, %v1165
      %v1230 = vpack.c.bf16 %v1166, %v1166
      %v1231 = vpack.c.bf16 %v1167, %v1167
      %v1232 = vpack.c.bf16 %v1168, %v1168
      %v1233 = vpack.c.bf16 %v1169, %v1169
      %v1234 = vpack.c.bf16 %v1170, %v1170
      %v1235 = vpack.c.bf16 %v1171, %v1171
      %v1236 = vpack.c.bf16 %v1172, %v1172
      %v1237 = vpack.c.bf16 %v1173, %v1173
      %v1238 = vpack.c.bf16 %v1174, %v1174
      %v1239 = vpack.c.bf16 %v1175, %v1175
      %v1240 = vpack.c.bf16 %v1176, %v1176
      %v1241 = vpack.c.bf16 %v1177, %v1177
      %v1242 = vpack.c.bf16 %v1178, %v1178
      %v1243 = vpack.c.bf16 %v1179, %v1179
      %v1244 = vpack.c.bf16 %v1180, %v1180
      %vm1245 = vcmask 3072
      %1246 = vst.msk [vmem:[%s408] sm:$0xf] %vm1245, %v1181
      %1247 = vst.msk [vmem:[%s408 + $0x4] sm:$0xf] %vm1245, %v1182
      %1248 = vst.msk [vmem:[%s408 + $0x8] sm:$0xf] %vm1245, %v1183
      %1249 = vst.msk [vmem:[%s408 + $0xc] sm:$0xf] %vm1245, %v1184
      %1250 = vst.msk [vmem:[%s408 + $0x10] sm:$0xf] %vm1245, %v1185
      %1251 = vst.msk [vmem:[%s408 + $0x14] sm:$0xf] %vm1245, %v1186
      %1252 = vst.msk [vmem:[%s408 + $0x18] sm:$0xf] %vm1245, %v1187
      %1253 = vst.msk [vmem:[%s408 + $0x1c] sm:$0xf] %vm1245, %v1188
      %1254 = vst.msk [vmem:[%s408 + $0x20] sm:$0xf] %vm1245, %v1189
      %1255 = vst.msk [vmem:[%s408 + $0x24] sm:$0xf] %vm1245, %v1190
      %1256 = vst.msk [vmem:[%s408 + $0x28] sm:$0xf] %vm1245, %v1191
      %1257 = vst.msk [vmem:[%s408 + $0x2c] sm:$0xf] %vm1245, %v1192
      %1258 = vst.msk [vmem:[%s408 + $0x30] sm:$0xf] %vm1245, %v1193
      %1259 = vst.msk [vmem:[%s408 + $0x34] sm:$0xf] %vm1245, %v1194
      %1260 = vst.msk [vmem:[%s408 + $0x38] sm:$0xf] %vm1245, %v1195
      %1261 = vst.msk [vmem:[%s408 + $0x3c] sm:$0xf] %vm1245, %v1196
      %1262 = vst.msk [vmem:[%s408 + $0x40] sm:$0xf] %vm1245, %v1197
      %1263 = vst.msk [vmem:[%s408 + $0x44] sm:$0xf] %vm1245, %v1198
      %1264 = vst.msk [vmem:[%s408 + $0x48] sm:$0xf] %vm1245, %v1199
      %1265 = vst.msk [vmem:[%s408 + $0x4c] sm:$0xf] %vm1245, %v1200
      %1266 = vst.msk [vmem:[%s408 + $0x50] sm:$0xf] %vm1245, %v1201
      %1267 = vst.msk [vmem:[%s408 + $0x54] sm:$0xf] %vm1245, %v1202
      %1268 = vst.msk [vmem:[%s408 + $0x58] sm:$0xf] %vm1245, %v1203
      %1269 = vst.msk [vmem:[%s408 + $0x5c] sm:$0xf] %vm1245, %v1204
      %1270 = vst.msk [vmem:[%s408 + $0x60] sm:$0xf] %vm1245, %v1205
      %1271 = vst.msk [vmem:[%s408 + $0x64] sm:$0xf] %vm1245, %v1206
      %1272 = vst.msk [vmem:[%s408 + $0x68] sm:$0xf] %vm1245, %v1207
      %1273 = vst.msk [vmem:[%s408 + $0x6c] sm:$0xf] %vm1245, %v1208
      %1274 = vst.msk [vmem:[%s408 + $0x70] sm:$0xf] %vm1245, %v1209
      %1275 = vst.msk [vmem:[%s408 + $0x74] sm:$0xf] %vm1245, %v1210
      %1276 = vst.msk [vmem:[%s408 + $0x78] sm:$0xf] %vm1245, %v1211
      %1277 = vst.msk [vmem:[%s408 + $0x7c] sm:$0xf] %vm1245, %v1212
      %1278 = vst.msk [vmem:[%s408 + $0x80] sm:$0xf] %vm1245, %v1213
      %1279 = vst.msk [vmem:[%s408 + $0x84] sm:$0xf] %vm1245, %v1214
      %1280 = vst.msk [vmem:[%s408 + $0x88] sm:$0xf] %vm1245, %v1215
      %1281 = vst.msk [vmem:[%s408 + $0x8c] sm:$0xf] %vm1245, %v1216
      %1282 = vst.msk [vmem:[%s408 + $0x90] sm:$0xf] %vm1245, %v1217
      %1283 = vst.msk [vmem:[%s408 + $0x94] sm:$0xf] %vm1245, %v1218
      %1284 = vst.msk [vmem:[%s408 + $0x98] sm:$0xf] %vm1245, %v1219
      %1285 = vst.msk [vmem:[%s408 + $0x9c] sm:$0xf] %vm1245, %v1220
      %1286 = vst.msk [vmem:[%s408 + $0xa0] sm:$0xf] %vm1245, %v1221
      %1287 = vst.msk [vmem:[%s408 + $0xa4] sm:$0xf] %vm1245, %v1222
      %1288 = vst.msk [vmem:[%s408 + $0xa8] sm:$0xf] %vm1245, %v1223
      %1289 = vst.msk [vmem:[%s408 + $0xac] sm:$0xf] %vm1245, %v1224
      %1290 = vst.msk [vmem:[%s408 + $0xb0] sm:$0xf] %vm1245, %v1225
      %1291 = vst.msk [vmem:[%s408 + $0xb4] sm:$0xf] %vm1245, %v1226
      %1292 = vst.msk [vmem:[%s408 + $0xb8] sm:$0xf] %vm1245, %v1227
      %1293 = vst.msk [vmem:[%s408 + $0xbc] sm:$0xf] %vm1245, %v1228
      %1294 = vst.msk [vmem:[%s408 + $0xc0] sm:$0xf] %vm1245, %v1229
      %1295 = vst.msk [vmem:[%s408 + $0xc4] sm:$0xf] %vm1245, %v1230
      %1296 = vst.msk [vmem:[%s408 + $0xc8] sm:$0xf] %vm1245, %v1231
      %1297 = vst.msk [vmem:[%s408 + $0xcc] sm:$0xf] %vm1245, %v1232
      %1298 = vst.msk [vmem:[%s408 + $0xd0] sm:$0xf] %vm1245, %v1233
      %1299 = vst.msk [vmem:[%s408 + $0xd4] sm:$0xf] %vm1245, %v1234
      %1300 = vst.msk [vmem:[%s408 + $0xd8] sm:$0xf] %vm1245, %v1235
      %1301 = vst.msk [vmem:[%s408 + $0xdc] sm:$0xf] %vm1245, %v1236
      %1302 = vst.msk [vmem:[%s408 + $0xe0] sm:$0xf] %vm1245, %v1237
      %1303 = vst.msk [vmem:[%s408 + $0xe4] sm:$0xf] %vm1245, %v1238
      %1304 = vst.msk [vmem:[%s408 + $0xe8] sm:$0xf] %vm1245, %v1239
      %1305 = vst.msk [vmem:[%s408 + $0xec] sm:$0xf] %vm1245, %v1240
      %1306 = vst.msk [vmem:[%s408 + $0xf0] sm:$0xf] %vm1245, %v1241
      %1307 = vst.msk [vmem:[%s408 + $0xf4] sm:$0xf] %vm1245, %v1242
      %1308 = vst.msk [vmem:[%s408 + $0xf8] sm:$0xf] %vm1245, %v1243
      %1309 = vst.msk [vmem:[%s408 + $0xfc] sm:$0xf] %vm1245, %v1244
      %v1310 = vld [vmem:[%s392] sm:$0x77]
      %v1311 = vld [vmem:[%s392 + $0x8] sm:$0x77]
      %v1314 = vunpack.c.l.b16 %v1310
      %v1315 = vunpack.c.h.b16 %v1310
      %v1316 = vunpack.c.l.b16 %v1311
      %v1317 = vunpack.c.h.b16 %v1311
      %v1318 = vpack.c.b16 %v1314, %v1314
      %v1319 = vpack.c.b16 %v1315, %v1315
      %v1320 = vpack.c.b16 %v1316, %v1316
      %v1321 = vpack.c.b16 %v1317, %v1317
      %v1390 = vunpack.c.l.b16 %v1181
      %v1391 = vunpack.c.l.b16 %v1182
      %v1392 = vunpack.c.l.b16 %v1183
      %v1393 = vunpack.c.l.b16 %v1184
      %v1394 = vunpack.c.l.b16 %v1185
      %v1395 = vunpack.c.l.b16 %v1186
      %v1396 = vunpack.c.l.b16 %v1187
      %v1397 = vunpack.c.l.b16 %v1188
      %v1398 = vunpack.c.l.b16 %v1189
      %v1399 = vunpack.c.l.b16 %v1190
      %v1400 = vunpack.c.l.b16 %v1191
      %v1401 = vunpack.c.l.b16 %v1192
      %v1402 = vunpack.c.l.b16 %v1193
      %v1403 = vunpack.c.l.b16 %v1194
      %v1404 = vunpack.c.l.b16 %v1195
      %v1405 = vunpack.c.l.b16 %v1196
      %v1406 = vunpack.c.l.b16 %v1197
      %v1407 = vunpack.c.l.b16 %v1198
      %v1408 = vunpack.c.l.b16 %v1199
      %v1409 = vunpack.c.l.b16 %v1200
      %v1410 = vunpack.c.l.b16 %v1201
      %v1411 = vunpack.c.l.b16 %v1202
      %v1412 = vunpack.c.l.b16 %v1203
      %v1413 = vunpack.c.l.b16 %v1204
      %v1414 = vunpack.c.l.b16 %v1205
      %v1415 = vunpack.c.l.b16 %v1206
      %v1416 = vunpack.c.l.b16 %v1207
      %v1417 = vunpack.c.l.b16 %v1208
      %v1418 = vunpack.c.l.b16 %v1209
      %v1419 = vunpack.c.l.b16 %v1210
      %v1420 = vunpack.c.l.b16 %v1211
      %v1421 = vunpack.c.l.b16 %v1212
      %v1422 = vunpack.c.l.b16 %v1213
      %v1423 = vunpack.c.l.b16 %v1214
      %v1424 = vunpack.c.l.b16 %v1215
      %v1425 = vunpack.c.l.b16 %v1216
      %v1426 = vunpack.c.l.b16 %v1217
      %v1427 = vunpack.c.l.b16 %v1218
      %v1428 = vunpack.c.l.b16 %v1219
      %v1429 = vunpack.c.l.b16 %v1220
      %v1430 = vunpack.c.l.b16 %v1221
      %v1431 = vunpack.c.l.b16 %v1222
      %v1432 = vunpack.c.l.b16 %v1223
      %v1433 = vunpack.c.l.b16 %v1224
      %v1434 = vunpack.c.l.b16 %v1225
      %v1435 = vunpack.c.l.b16 %v1226
      %v1436 = vunpack.c.l.b16 %v1227
      %v1437 = vunpack.c.l.b16 %v1228
      %v1438 = vunpack.c.l.b16 %v1229
      %v1439 = vunpack.c.l.b16 %v1230
      %v1440 = vunpack.c.l.b16 %v1231
      %v1441 = vunpack.c.l.b16 %v1232
      %v1442 = vunpack.c.l.b16 %v1233
      %v1443 = vunpack.c.l.b16 %v1234
      %v1444 = vunpack.c.l.b16 %v1235
      %v1445 = vunpack.c.l.b16 %v1236
      %v1446 = vunpack.c.l.b16 %v1237
      %v1447 = vunpack.c.l.b16 %v1238
      %v1448 = vunpack.c.l.b16 %v1239
      %v1449 = vunpack.c.l.b16 %v1240
      %v1450 = vunpack.c.l.b16 %v1241
      %v1451 = vunpack.c.l.b16 %v1242
      %v1452 = vunpack.c.l.b16 %v1243
      %v1453 = vunpack.c.l.b16 %v1244
      %v1454 = vpack.c.b16 %v1391, %v1390
      %v1455 = vpack.c.b16 %v1393, %v1392
      %v1456 = vpack.c.b16 %v1395, %v1394
      %v1457 = vpack.c.b16 %v1397, %v1396
      %v1458 = vpack.c.b16 %v1399, %v1398
      %v1459 = vpack.c.b16 %v1401, %v1400
      %v1460 = vpack.c.b16 %v1403, %v1402
      %v1461 = vpack.c.b16 %v1405, %v1404
      %v1462 = vpack.c.b16 %v1407, %v1406
      %v1463 = vpack.c.b16 %v1409, %v1408
      %v1464 = vpack.c.b16 %v1411, %v1410
      %v1465 = vpack.c.b16 %v1413, %v1412
      %v1466 = vpack.c.b16 %v1415, %v1414
      %v1467 = vpack.c.b16 %v1417, %v1416
      %v1468 = vpack.c.b16 %v1419, %v1418
      %v1469 = vpack.c.b16 %v1421, %v1420
      %v1470 = vpack.c.b16 %v1423, %v1422
      %v1471 = vpack.c.b16 %v1425, %v1424
      %v1472 = vpack.c.b16 %v1427, %v1426
      %v1473 = vpack.c.b16 %v1429, %v1428
      %v1474 = vpack.c.b16 %v1431, %v1430
      %v1475 = vpack.c.b16 %v1433, %v1432
      %v1476 = vpack.c.b16 %v1435, %v1434
      %v1477 = vpack.c.b16 %v1437, %v1436
      %v1478 = vpack.c.b16 %v1439, %v1438
      %v1479 = vpack.c.b16 %v1441, %v1440
      %v1480 = vpack.c.b16 %v1443, %v1442
      %v1481 = vpack.c.b16 %v1445, %v1444
      %v1482 = vpack.c.b16 %v1447, %v1446
      %v1483 = vpack.c.b16 %v1449, %v1448
      %v1484 = vpack.c.b16 %v1451, %v1450
      %v1485 = vpack.c.b16 %v1453, %v1452
      %1518 = vmatpush.bf16.msra.mxu0 %v1461
      %1519 = vmatpush.bf16.msra.mxu0 %v1460
      %1520 = vmatpush.bf16.msra.mxu0 %v1459
      %1521 = vmatpush.bf16.msra.mxu0 %v1458
      %1522 = vmatpush.bf16.msra.mxu0 %v1457
      %1523 = vmatpush.bf16.msra.mxu0 %v1456
      %1524 = vmatpush.bf16.msra.mxu0 %v1455
      %1525 = vmatpush.bf16.msra.mxu0 %v1454
      %1526 = vmatmul.bf16.gmra.mxu0 %v1318
      %v1527 = vpop.f32.mrf.mxu0
      %v1528 = vadd.f32 0.0, %v1527
      %v1529 = vpop.f32.mrf.mxu0
      %1530 = vdwg.mxu0
      %1531 = vmatpush.bf16.msra.mxu0 %v1469
      %1532 = vmatpush.bf16.msra.mxu0 %v1468
      %1533 = vmatpush.bf16.msra.mxu0 %v1467
      %1534 = vmatpush.bf16.msra.mxu0 %v1466
      %1535 = vmatpush.bf16.msra.mxu0 %v1465
      %1536 = vmatpush.bf16.msra.mxu0 %v1464
      %1537 = vmatpush.bf16.msra.mxu0 %v1463
      %1538 = vmatpush.bf16.msra.mxu0 %v1462
      %1539 = vmatmul.bf16.gmra.mxu0 %v1319
      %v1540 = vpop.f32.mrf.mxu0
      %v1541 = vadd.f32 %v1528, %v1540
      %v1542 = vpop.f32.mrf.mxu0
      %1543 = vdwg.mxu0
      %1544 = vmatpush.bf16.msra.mxu0 %v1477
      %1545 = vmatpush.bf16.msra.mxu0 %v1476
      %1546 = vmatpush.bf16.msra.mxu0 %v1475
      %1547 = vmatpush.bf16.msra.mxu0 %v1474
      %1548 = vmatpush.bf16.msra.mxu0 %v1473
      %1549 = vmatpush.bf16.msra.mxu0 %v1472
      %1550 = vmatpush.bf16.msra.mxu0 %v1471
      %1551 = vmatpush.bf16.msra.mxu0 %v1470
      %1552 = vmatmul.bf16.gmra.mxu0 %v1320
      %v1553 = vpop.f32.mrf.mxu0
      %v1554 = vadd.f32 %v1541, %v1553
      %v1555 = vpop.f32.mrf.mxu0
      %1556 = vdwg.mxu0
      %1557 = vmatpush.bf16.msra.mxu0 %v1485
      %1558 = vmatpush.bf16.msra.mxu0 %v1484
      %1559 = vmatpush.bf16.msra.mxu0 %v1483
      %1560 = vmatpush.bf16.msra.mxu0 %v1482
      %1561 = vmatpush.bf16.msra.mxu0 %v1481
      %1562 = vmatpush.bf16.msra.mxu0 %v1480
      %1563 = vmatpush.bf16.msra.mxu0 %v1479
      %1564 = vmatpush.bf16.msra.mxu0 %v1478
      %1565 = vmatmul.bf16.gmra.mxu0 %v1321
      %v1566 = vpop.f32.mrf.mxu0
      %v1567 = vadd.f32 %v1554, %v1566
      %v1568 = vpop.f32.mrf.mxu0
      %1569 = vdwg.mxu0
      %v1570 = vld [vmem:[%s400] sm:$0xff]
      %v1571 = vld [vmem:[%s400 + $0x8] sm:$0xff]
      %v1574 = vunpack.c.l.b16 %v1570
      %v1575 = vunpack.c.h.b16 %v1570
      %v1576 = vunpack.c.l.b16 %v1571
      %v1577 = vunpack.c.h.b16 %v1571
      %v1578 = vpack.c.b16 %v1574, %v1574
      %v1579 = vpack.c.b16 %v1575, %v1575
      %v1580 = vpack.c.b16 %v1576, %v1576
      %v1581 = vpack.c.b16 %v1577, %v1577
      %1586 = vmatpush.bf16.msra.mxu0 %v1461
      %1587 = vmatpush.bf16.msra.mxu0 %v1460
      %1588 = vmatpush.bf16.msra.mxu0 %v1459
      %1589 = vmatpush.bf16.msra.mxu0 %v1458
      %1590 = vmatpush.bf16.msra.mxu0 %v1457
      %1591 = vmatpush.bf16.msra.mxu0 %v1456
      %1592 = vmatpush.bf16.msra.mxu0 %v1455
      %1593 = vmatpush.bf16.msra.mxu0 %v1454
      %1594 = vmatmul.bf16.gmra.mxu0 %v1578
      %v1595 = vpop.f32.mrf.mxu0
      %v1596 = vadd.f32 0.0, %v1595
      %v1597 = vpop.f32.mrf.mxu0
      %1598 = vdwg.mxu0
      %1599 = vmatpush.bf16.msra.mxu0 %v1469
      %1600 = vmatpush.bf16.msra.mxu0 %v1468
      %1601 = vmatpush.bf16.msra.mxu0 %v1467
      %1602 = vmatpush.bf16.msra.mxu0 %v1466
      %1603 = vmatpush.bf16.msra.mxu0 %v1465
      %1604 = vmatpush.bf16.msra.mxu0 %v1464
      %1605 = vmatpush.bf16.msra.mxu0 %v1463
      %1606 = vmatpush.bf16.msra.mxu0 %v1462
      %1607 = vmatmul.bf16.gmra.mxu0 %v1579
      %v1608 = vpop.f32.mrf.mxu0
      %v1609 = vadd.f32 %v1596, %v1608
      %v1610 = vpop.f32.mrf.mxu0
      %1611 = vdwg.mxu0
      %1612 = vmatpush.bf16.msra.mxu0 %v1477
      %1613 = vmatpush.bf16.msra.mxu0 %v1476
      %1614 = vmatpush.bf16.msra.mxu0 %v1475
      %1615 = vmatpush.bf16.msra.mxu0 %v1474
      %1616 = vmatpush.bf16.msra.mxu0 %v1473
      %1617 = vmatpush.bf16.msra.mxu0 %v1472
      %1618 = vmatpush.bf16.msra.mxu0 %v1471
      %1619 = vmatpush.bf16.msra.mxu0 %v1470
      %1620 = vmatmul.bf16.gmra.mxu0 %v1580
      %v1621 = vpop.f32.mrf.mxu0
      %v1622 = vadd.f32 %v1609, %v1621
      %v1623 = vpop.f32.mrf.mxu0
      %1624 = vdwg.mxu0
      %1625 = vmatpush.bf16.msra.mxu0 %v1485
      %1626 = vmatpush.bf16.msra.mxu0 %v1484
      %1627 = vmatpush.bf16.msra.mxu0 %v1483
      %1628 = vmatpush.bf16.msra.mxu0 %v1482
      %1629 = vmatpush.bf16.msra.mxu0 %v1481
      %1630 = vmatpush.bf16.msra.mxu0 %v1480
      %1631 = vmatpush.bf16.msra.mxu0 %v1479
      %1632 = vmatpush.bf16.msra.mxu0 %v1478
      %1633 = vmatmul.bf16.gmra.mxu0 %v1581
      %v1634 = vpop.f32.mrf.mxu0
      %v1635 = vadd.f32 %v1622, %v1634
      %v1636 = vpop.f32.mrf.mxu0
      %1637 = vdwg.mxu0
      %v1638 = vmul.f32 %v1117, %v1117
      %v1639 = vmul.f32 %v1118, %v1118
      %v1640 = vmul.f32 %v1119, %v1119
      %v1641 = vmul.f32 %v1120, %v1120
      %v1642 = vmul.f32 %v1121, %v1121
      %v1643 = vmul.f32 %v1122, %v1122
      %v1644 = vmul.f32 %v1123, %v1123
      %v1645 = vmul.f32 %v1124, %v1124
      %v1646 = vmul.f32 %v1125, %v1125
      %v1647 = vmul.f32 %v1126, %v1126
      %v1648 = vmul.f32 %v1127, %v1127
      %v1649 = vmul.f32 %v1128, %v1128
      %v1650 = vmul.f32 %v1129, %v1129
      %v1651 = vmul.f32 %v1130, %v1130
      %v1652 = vmul.f32 %v1131, %v1131
      %v1653 = vmul.f32 %v1132, %v1132
      %v1654 = vmul.f32 %v1133, %v1133
      %v1655 = vmul.f32 %v1134, %v1134
      %v1656 = vmul.f32 %v1135, %v1135
      %v1657 = vmul.f32 %v1136, %v1136
      %v1658 = vmul.f32 %v1137, %v1137
      %v1659 = vmul.f32 %v1138, %v1138
      %v1660 = vmul.f32 %v1139, %v1139
      %v1661 = vmul.f32 %v1140, %v1140
      %v1662 = vmul.f32 %v1141, %v1141
      %v1663 = vmul.f32 %v1142, %v1142
      %v1664 = vmul.f32 %v1143, %v1143
      %v1665 = vmul.f32 %v1144, %v1144
      %v1666 = vmul.f32 %v1145, %v1145
      %v1667 = vmul.f32 %v1146, %v1146
      %v1668 = vmul.f32 %v1147, %v1147
      %v1669 = vmul.f32 %v1148, %v1148
      %v1670 = vmul.f32 %v1149, %v1149
      %v1671 = vmul.f32 %v1150, %v1150
      %v1672 = vmul.f32 %v1151, %v1151
      %v1673 = vmul.f32 %v1152, %v1152
      %v1674 = vmul.f32 %v1153, %v1153
      %v1675 = vmul.f32 %v1154, %v1154
      %v1676 = vmul.f32 %v1155, %v1155
      %v1677 = vmul.f32 %v1156, %v1156
      %v1678 = vmul.f32 %v1157, %v1157
      %v1679 = vmul.f32 %v1158, %v1158
      %v1680 = vmul.f32 %v1159, %v1159
      %v1681 = vmul.f32 %v1160, %v1160
      %v1682 = vmul.f32 %v1161, %v1161
      %v1683 = vmul.f32 %v1162, %v1162
      %v1684 = vmul.f32 %v1163, %v1163
      %v1685 = vmul.f32 %v1164, %v1164
      %v1686 = vmul.f32 %v1165, %v1165
      %v1687 = vmul.f32 %v1166, %v1166
      %v1688 = vmul.f32 %v1167, %v1167
      %v1689 = vmul.f32 %v1168, %v1168
      %v1690 = vmul.f32 %v1169, %v1169
      %v1691 = vmul.f32 %v1170, %v1170
      %v1692 = vmul.f32 %v1171, %v1171
      %v1693 = vmul.f32 %v1172, %v1172
      %v1694 = vmul.f32 %v1173, %v1173
      %v1695 = vmul.f32 %v1174, %v1174
      %v1696 = vmul.f32 %v1175, %v1175
      %v1697 = vmul.f32 %v1176, %v1176
      %v1698 = vmul.f32 %v1177, %v1177
      %v1699 = vmul.f32 %v1178, %v1178
      %v1700 = vmul.f32 %v1179, %v1179
      %v1701 = vmul.f32 %v1180, %v1180
      %vm1702 = vcmask 7168
      %v1703 = vsel %vm1702, %v1638, 0.0
      %v1704 = vsel %vm1702, %v1639, 0.0
      %v1705 = vadd.f32 %v1703, %v1704
      %v1706 = vsel %vm1702, %v1640, 0.0
      %v1707 = vadd.f32 %v1705, %v1706
      %v1708 = vsel %vm1702, %v1641, 0.0
      %v1709 = vadd.f32 %v1707, %v1708
      %v1710 = vsel %vm1702, %v1642, 0.0
      %v1711 = vadd.f32 %v1709, %v1710
      %v1712 = vsel %vm1702, %v1643, 0.0
      %v1713 = vadd.f32 %v1711, %v1712
      %v1714 = vsel %vm1702, %v1644, 0.0
      %v1715 = vadd.f32 %v1713, %v1714
      %v1716 = vsel %vm1702, %v1645, 0.0
      %v1717 = vadd.f32 %v1715, %v1716
      %v1718 = vsel %vm1702, %v1646, 0.0
      %v1719 = vadd.f32 %v1717, %v1718
      %v1720 = vsel %vm1702, %v1647, 0.0
      %v1721 = vadd.f32 %v1719, %v1720
      %v1722 = vsel %vm1702, %v1648, 0.0
      %v1723 = vadd.f32 %v1721, %v1722
      %v1724 = vsel %vm1702, %v1649, 0.0
      %v1725 = vadd.f32 %v1723, %v1724
      %v1726 = vsel %vm1702, %v1650, 0.0
      %v1727 = vadd.f32 %v1725, %v1726
      %v1728 = vsel %vm1702, %v1651, 0.0
      %v1729 = vadd.f32 %v1727, %v1728
      %v1730 = vsel %vm1702, %v1652, 0.0
      %v1731 = vadd.f32 %v1729, %v1730
      %v1732 = vsel %vm1702, %v1653, 0.0
      %v1733 = vadd.f32 %v1731, %v1732
      %v1734 = vsel %vm1702, %v1654, 0.0
      %v1735 = vadd.f32 %v1733, %v1734
      %v1736 = vsel %vm1702, %v1655, 0.0
      %v1737 = vadd.f32 %v1735, %v1736
      %v1738 = vsel %vm1702, %v1656, 0.0
      %v1739 = vadd.f32 %v1737, %v1738
      %v1740 = vsel %vm1702, %v1657, 0.0
      %v1741 = vadd.f32 %v1739, %v1740
      %v1742 = vsel %vm1702, %v1658, 0.0
      %v1743 = vadd.f32 %v1741, %v1742
      %v1744 = vsel %vm1702, %v1659, 0.0
      %v1745 = vadd.f32 %v1743, %v1744
      %v1746 = vsel %vm1702, %v1660, 0.0
      %v1747 = vadd.f32 %v1745, %v1746
      %v1748 = vsel %vm1702, %v1661, 0.0
      %v1749 = vadd.f32 %v1747, %v1748
      %v1750 = vsel %vm1702, %v1662, 0.0
      %v1751 = vadd.f32 %v1749, %v1750
      %v1752 = vsel %vm1702, %v1663, 0.0
      %v1753 = vadd.f32 %v1751, %v1752
      %v1754 = vsel %vm1702, %v1664, 0.0
      %v1755 = vadd.f32 %v1753, %v1754
      %v1756 = vsel %vm1702, %v1665, 0.0
      %v1757 = vadd.f32 %v1755, %v1756
      %v1758 = vsel %vm1702, %v1666, 0.0
      %v1759 = vadd.f32 %v1757, %v1758
      %v1760 = vsel %vm1702, %v1667, 0.0
      %v1761 = vadd.f32 %v1759, %v1760
      %v1762 = vsel %vm1702, %v1668, 0.0
      %v1763 = vadd.f32 %v1761, %v1762
      %v1764 = vsel %vm1702, %v1669, 0.0
      %v1765 = vadd.f32 %v1763, %v1764
      %v1766 = vsel %vm1702, %v1670, 0.0
      %v1767 = vadd.f32 %v1765, %v1766
      %v1768 = vsel %vm1702, %v1671, 0.0
      %v1769 = vadd.f32 %v1767, %v1768
      %v1770 = vsel %vm1702, %v1672, 0.0
      %v1771 = vadd.f32 %v1769, %v1770
      %v1772 = vsel %vm1702, %v1673, 0.0
      %v1773 = vadd.f32 %v1771, %v1772
      %v1774 = vsel %vm1702, %v1674, 0.0
      %v1775 = vadd.f32 %v1773, %v1774
      %v1776 = vsel %vm1702, %v1675, 0.0
      %v1777 = vadd.f32 %v1775, %v1776
      %v1778 = vsel %vm1702, %v1676, 0.0
      %v1779 = vadd.f32 %v1777, %v1778
      %v1780 = vsel %vm1702, %v1677, 0.0
      %v1781 = vadd.f32 %v1779, %v1780
      %v1782 = vsel %vm1702, %v1678, 0.0
      %v1783 = vadd.f32 %v1781, %v1782
      %v1784 = vsel %vm1702, %v1679, 0.0
      %v1785 = vadd.f32 %v1783, %v1784
      %v1786 = vsel %vm1702, %v1680, 0.0
      %v1787 = vadd.f32 %v1785, %v1786
      %v1788 = vsel %vm1702, %v1681, 0.0
      %v1789 = vadd.f32 %v1787, %v1788
      %v1790 = vsel %vm1702, %v1682, 0.0
      %v1791 = vadd.f32 %v1789, %v1790
      %v1792 = vsel %vm1702, %v1683, 0.0
      %v1793 = vadd.f32 %v1791, %v1792
      %v1794 = vsel %vm1702, %v1684, 0.0
      %v1795 = vadd.f32 %v1793, %v1794
      %v1796 = vsel %vm1702, %v1685, 0.0
      %v1797 = vadd.f32 %v1795, %v1796
      %v1798 = vsel %vm1702, %v1686, 0.0
      %v1799 = vadd.f32 %v1797, %v1798
      %v1800 = vsel %vm1702, %v1687, 0.0
      %v1801 = vadd.f32 %v1799, %v1800
      %v1802 = vsel %vm1702, %v1688, 0.0
      %v1803 = vadd.f32 %v1801, %v1802
      %v1804 = vsel %vm1702, %v1689, 0.0
      %v1805 = vadd.f32 %v1803, %v1804
      %v1806 = vsel %vm1702, %v1690, 0.0
      %v1807 = vadd.f32 %v1805, %v1806
      %v1808 = vsel %vm1702, %v1691, 0.0
      %v1809 = vadd.f32 %v1807, %v1808
      %v1810 = vsel %vm1702, %v1692, 0.0
      %v1811 = vadd.f32 %v1809, %v1810
      %v1812 = vsel %vm1702, %v1693, 0.0
      %v1813 = vadd.f32 %v1811, %v1812
      %v1814 = vsel %vm1702, %v1694, 0.0
      %v1815 = vadd.f32 %v1813, %v1814
      %v1816 = vsel %vm1702, %v1695, 0.0
      %v1817 = vadd.f32 %v1815, %v1816
      %v1818 = vsel %vm1702, %v1696, 0.0
      %v1819 = vadd.f32 %v1817, %v1818
      %v1820 = vsel %vm1702, %v1697, 0.0
      %v1821 = vadd.f32 %v1819, %v1820
      %v1822 = vsel %vm1702, %v1698, 0.0
      %v1823 = vadd.f32 %v1821, %v1822
      %v1824 = vsel %vm1702, %v1699, 0.0
      %v1825 = vadd.f32 %v1823, %v1824
      %v1826 = vsel %vm1702, %v1700, 0.0
      %v1827 = vadd.f32 %v1825, %v1826
      %v1828 = vsel %vm1702, %v1701, 0.0
      %v1829 = vadd.f32 %v1827, %v1828
      %v1830 = vrot.slane %v1829, 4
      %v1831 = vadd.f32 %v1829, %v1830
      %v1832 = vrot.slane %v1831, 2
      %v1833 = vadd.f32 %v1831, %v1832
      %v1834 = vrot.slane %v1833, 1
      %v1835 = vadd.f32 %v1833, %v1834
      %p1836 = scmp.eq.s32.totalorder %s27, 0
      // Predicated region
      $region41: #{closed_call.45} parent=39 // pred_check
        %p1837 = pneg %p1836
      $region42: #{closed_call.45} parent=39 // pred_check_branch
        %1839 = sbr.rel (%p1837) target = $region44
      $region43: #{closed_call.45} parent=39 // pred_region
        %vm1840 = vcmask 5120
        %1841 = vst.msk [vmem:[%s414] sm:$0x3f] %vm1840, 0.0
        %vm1842 = vcmask 0
        %1843 = vst.msk [vmem:[%s417] sm:$0x1] %vm1842, 0.0
        %1844 = vst.msk [vmem:[%s421] sm:$0xff] %vm1702, 0.0
      $region44: #{closed_call.45} parent=39 // pred_fallthru
        _
      %v1845 = vld [vmem:[%s414] sm:$0x3f]
      %v1846 = vadd.f32 %v1845, %v1567
      %vm1847 = vcmask 5120
      %1848 = vst.msk [vmem:[%s414] sm:$0x3f] %vm1847, %v1846
      %v1849 = vld [vmem:[%s417] sm:$0x1]
      %v1850 = vadd.f32 %v1849, %v1835
      %vm1851 = vcmask 0
      %1852 = vst.msk [vmem:[%s417] sm:$0x1] %vm1851, %v1850
      %v1853 = vld [vmem:[%s421] sm:$0xff]
      %v1854 = vadd.f32 %v1853, %v1635
      %1855 = vst.msk [vmem:[%s421] sm:$0xff] %vm1702, %v1854
      %s1856 = sadd.s32 %s26, %s27
      %s1857 = smul.u32 64, %s1856
      %p1858 = scmp.lt.s32.totalorder %s1857, 127
      %s1859 = scalar_select %p1858, %s1857, 127
      %s1860 = smul.addr %s1859, 4
      %s1861 = scalar_lea.vmem %s5, %s1860
      %p1862 = scmp.lt.s32.totalorder %s26, 1
      %s1863 = scalar_select %p1862, %s26, 1
      %s1864 = smul.addr %s1863, 8
      %s1865 = scalar_lea.vmem %s6, %s1864
      %p1866 = scmp.lt.s32.totalorder %s26, 1
      %s1867 = scalar_select %p1866, %s26, 1
      %s1868 = scalar_lea.vmem %s7, %s1867
      %p1869 = scmp.lt.s32.totalorder %s26, 1
      %s1870 = scalar_select %p1869, %s26, 1
      %s1871 = smul.addr %s1870, 8
      %s1872 = scalar_lea.vmem %s8, %s1871
      // Predicated region
      $region45: #{closed_call.45} parent=39 // pred_check
        %p1873 = pneg %p180
      $region46: #{closed_call.45} parent=39 // pred_check_branch
        %1875 = sbr.rel (%p1873) target = $region48
      $region47: #{closed_call.45} parent=39 // pred_region
        %s1876 = sadd.s32 %s26, %s27
        %s1877 = smul.u32 64, %s1876
      $region48: #{closed_call.45} parent=39 // pred_fallthru
        _
      // Predicated region
      $region49: #{closed_call.45} parent=39 // pred_check
        %p1878 = pneg %p206
      $region50: #{closed_call.45} parent=39 // pred_check_branch
        %1880 = sbr.rel (%p1878) target = $region52
      $region51: #{closed_call.45} parent=39 // pred_region
        _
      $region52: #{closed_call.45} parent=39 // pred_fallthru
        _
      // Predicated region
      $region53: #{closed_call.45} parent=39 // pred_check
        %p1881 = pneg %p232
      $region54: #{closed_call.45} parent=39 // pred_check_branch
        %1883 = sbr.rel (%p1881) target = $region56
      $region55: #{closed_call.45} parent=39 // pred_region
        _
      $region56: #{closed_call.45} parent=39 // pred_fallthru
        _
      // Predicated region
      $region57: #{closed_call.45} parent=39 // pred_check
        %p1884 = pneg %p258
      $region58: #{closed_call.45} parent=39 // pred_check_branch
        %1886 = sbr.rel (%p1884) target = $region60
      $region59: #{closed_call.45} parent=39 // pred_region
        _
      $region60: #{closed_call.45} parent=39 // pred_fallthru
        _
    $region40: #{closed_call.45} parent=5 // pred_fallthru
      _
    %p1887 = scmp.le.s32.totalorder 2, %s17
    // Predicated region
    $region61: #{closed_call.45} parent=5 // pred_check
      %p1888 = pneg %p1887
    $region62: #{closed_call.45} parent=5 // pred_check_branch
      %1890 = sbr.rel (%p1888) target = $region64
    $region63: #{closed_call.45} parent=5 // pred_region
      %s1891 = ssub.s32 %s17, 2
      // Predicated region
      $region65: #{closed_call.45} parent=63 // pred_check
        %p1892 = pneg %p186
      $region66: #{closed_call.45} parent=63 // pred_check_branch
        %1894 = sbr.rel (%p1892) target = $region68
      $region67: #{closed_call.45} parent=63 // pred_region
        %s1895 = sadd.s32 %s28, %s29
        %s1896 = smul.u32 64, %s1895
        %p1897 = scmp.lt.s32.totalorder %s1896, 127
        %s1898 = scalar_select %p1897, %s1896, 127
        %s1899 = smul.addr %s1898, 4
        %s1900 = scalar_lea.vmem %s5, %s1899
      $region68: #{closed_call.45} parent=63 // pred_fallthru
        _
      // Predicated region
      $region69: #{closed_call.45} parent=63 // pred_check
        %p1901 = pneg %p212
      $region70: #{closed_call.45} parent=63 // pred_check_branch
        %1903 = sbr.rel (%p1901) target = $region72
      $region71: #{closed_call.45} parent=63 // pred_region
        %p1904 = scmp.lt.s32.totalorder %s28, 1
        %s1905 = scalar_select %p1904, %s28, 1
        %s1906 = smul.addr %s1905, 8
        %s1907 = scalar_lea.vmem %s6, %s1906
      $region72: #{closed_call.45} parent=63 // pred_fallthru
        _
      // Predicated region
      $region73: #{closed_call.45} parent=63 // pred_check
        %p1908 = pneg %p238
      $region74: #{closed_call.45} parent=63 // pred_check_branch
        %1910 = sbr.rel (%p1908) target = $region76
      $region75: #{closed_call.45} parent=63 // pred_region
        %p1911 = scmp.lt.s32.totalorder %s28, 1
        %s1912 = scalar_select %p1911, %s28, 1
        %s1913 = scalar_lea.vmem %s7, %s1912
      $region76: #{closed_call.45} parent=63 // pred_fallthru
        _
      // Predicated region
      $region77: #{closed_call.45} parent=63 // pred_check
        %p1914 = pneg %p264
      $region78: #{closed_call.45} parent=63 // pred_check_branch
        %1916 = sbr.rel (%p1914) target = $region80
      $region79: #{closed_call.45} parent=63 // pred_region
        %p1917 = scmp.lt.s32.totalorder %s28, 1
        %s1918 = scalar_select %p1917, %s28, 1
        %s1919 = smul.addr %s1918, 8
        %s1920 = scalar_lea.vmem %s8, %s1919
      $region80: #{closed_call.45} parent=63 // pred_fallthru
        _
    $region64: #{closed_call.45} parent=5 // pred_fallthru
      _
  $region6: #{closed_call.45} parent=0 // loop_footer
    %s21 = sadd.s32 1, %s17
  $region7: #{closed_call.45} parent=0 // loop_footer_branch
    %16 = sbr.rel target = $region3
  $region8: #{closed_call.45} parent=0 // loop_exit
    _

// kernel: closed_call.46
$region0: #{closed_call.46}
  #allocation0 [shape = 'u32[]', space=smem, size = 0x4, offset = 0x4, fixed_abs, tag = 'smem constant byte address 0x4 - core index']
  #allocation1 [shape = 'u32[72,128]{1,0:T(1,128)}', space=vmem, size = 0x9000, scoped, tag = 'internal scratch']
  %s0 = inlined_call_operand.vmem [shape: bf16[6,1024], index: 0, kind: input, shape index: {}]
  %s1 = inlined_call_operand.vmem [shape: f32[8,1024], index: 1, kind: input, shape index: {}]
  %s2 = inlined_call_operand.vmem [shape: f32[6,8], index: 2, kind: input, shape index: {}]
  %s3 = inlined_call_operand.vmem [shape: bf16[8,1024], index: 3, kind: output, shape index: {}]
  %s4 = sld [smem:[#allocation0]]
  $region45: #{closed_call.46} parent=0
    _
  %s6 = ssub.s32 1, %s4
  %s7 = scalar_select 0, %s6, %s4
  loop: start=0, step=1, limit=4
  $region2: #{closed_call.46} parent=0 // loop_pre_header
    _
  $region3: #{closed_call.46} parent=0 // loop_header
    %s9 = sphi 0, %s13
    %p10 = scmp.ge.s32.totalorder %s9, 4
    %s19 = sphi 0, %s21
    %s22 = sphi 0, %s19
    %s23 = sphi 0, %s22
    %s39 = sphi 0, %s23
    %s45 = sphi 0, %s47
    %s48 = sphi 0, %s45
    %s49 = sphi 0, %s48
    %s65 = sphi 0, %s49
    %s69 = sphi 0, %s69
    %s71 = sphi 0, %s69
    %s72 = sphi 0, %s71
    %s86 = sphi 0, %s72
    %s92 = sphi 0, %s94
    %s95 = sphi 0, %s92
    %s96 = sphi 0, %s95
    %s112 = sphi 0, %s96
  $region4: #{closed_call.46} parent=0 // loop_header_branch
    %12 = sbr.rel (%p10) target = $region8
  $region5: #{closed_call.46} parent=0 // loop_body
    %s14 = ssub.s32 %s9, 1
    %s15 = ssub.s32 %s9, 2
    %s16 = sadd.s32 %s9, 1
    %s17 = ssub.s32 %s9, %s16
    %p18 = scmp.eq.s32.totalorder %s17, 0
    %s20 = sadd.s32 %s19, 1
    %s21 = scalar_select %p18, %s19, %s20
    %p24 = pneg %p18
    %p25 = scmp.eq.s32.totalorder %s9, 1
    %p26 = por %p24, %p25
    %p27 = scmp.ne.s32.totalorder %s19, %s22
    %p28 = scmp.eq.s32.totalorder %s9, 0
    %p29 = por %p27, %p28
    %p30 = scmp.ne.s32.totalorder %s19, %s22
    %p31 = scmp.eq.s32.totalorder %s14, 1
    %p32 = por %p30, %p31
    %p33 = scmp.ne.s32.totalorder %s22, %s23
    %p34 = scmp.eq.s32.totalorder %s14, 0
    %p35 = por %p33, %p34
    %p36 = scmp.ne.s32.totalorder %s22, %s23
    %p37 = scmp.eq.s32.totalorder %s15, 1
    %p38 = por %p36, %p37
    %p40 = scmp.ne.s32.totalorder %s23, %s39
    %p41 = scmp.eq.s32.totalorder %s15, 0
    %p42 = por %p40, %p41
    %s43 = ssub.s32 %s9, %s16
    %p44 = scmp.eq.s32.totalorder %s43, 0
    %s46 = sadd.s32 %s45, 1
    %s47 = scalar_select %p44, %s45, %s46
    %p50 = pneg %p44
    %p51 = scmp.eq.s32.totalorder %s9, 1
    %p52 = por %p50, %p51
    %p53 = scmp.ne.s32.totalorder %s45, %s48
    %p54 = scmp.eq.s32.totalorder %s9, 0
    %p55 = por %p53, %p54
    %p56 = scmp.ne.s32.totalorder %s45, %s48
    %p57 = scmp.eq.s32.totalorder %s14, 1
    %p58 = por %p56, %p57
    %p59 = scmp.ne.s32.totalorder %s48, %s49
    %p60 = scmp.eq.s32.totalorder %s14, 0
    %p61 = por %p59, %p60
    %p62 = scmp.ne.s32.totalorder %s48, %s49
    %p63 = scmp.eq.s32.totalorder %s15, 1
    %p64 = por %p62, %p63
    %p66 = scmp.ne.s32.totalorder %s49, %s65
    %p67 = scmp.eq.s32.totalorder %s15, 0
    %p68 = por %p66, %p67
    %s70 = sadd.s32 %s69, 1
    %p73 = scmp.eq.s32.totalorder %s9, 1
    %p74 = scmp.ne.s32.totalorder %s69, %s71
    %p75 = scmp.eq.s32.totalorder %s9, 0
    %p76 = por %p74, %p75
    %p77 = scmp.ne.s32.totalorder %s69, %s71
    %p78 = scmp.eq.s32.totalorder %s14, 1
    %p79 = por %p77, %p78
    %p80 = scmp.ne.s32.totalorder %s71, %s72
    %p81 = scmp.eq.s32.totalorder %s14, 0
    %p82 = por %p80, %p81
    %p83 = scmp.ne.s32.totalorder %s71, %s72
    %p84 = scmp.eq.s32.totalorder %s15, 1
    %p85 = por %p83, %p84
    %p87 = scmp.ne.s32.totalorder %s72, %s86
    %p88 = scmp.eq.s32.totalorder %s15, 0
    %p89 = por %p87, %p88
    %s90 = ssub.s32 %s9, %s16
    %p91 = scmp.eq.s32.totalorder %s90, 0
    %s93 = sadd.s32 %s92, 1
    %s94 = scalar_select %p91, %s92, %s93
    %p97 = pneg %p91
    %p98 = scmp.eq.s32.totalorder %s9, 1
    %p99 = por %p97, %p98
    %p100 = scmp.ne.s32.totalorder %s92, %s95
    %p101 = scmp.eq.s32.totalorder %s9, 0
    %p102 = por %p100, %p101
    %p103 = scmp.ne.s32.totalorder %s92, %s95
    %p104 = scmp.eq.s32.totalorder %s14, 1
    %p105 = por %p103, %p104
    %p106 = scmp.ne.s32.totalorder %s95, %s96
    %p107 = scmp.eq.s32.totalorder %s14, 0
    %p108 = por %p106, %p107
    %p109 = scmp.ne.s32.totalorder %s95, %s96
    %p110 = scmp.eq.s32.totalorder %s15, 1
    %p111 = por %p109, %p110
    %p113 = scmp.ne.s32.totalorder %s96, %s112
    %p114 = scmp.eq.s32.totalorder %s15, 0
    %p115 = por %p113, %p114
    %p116 = scmp.le.s32.totalorder 1, %s9
    %p117 = scmp.lt.s32.totalorder %s9, 3
    %p118 = pnand %p116, %p117
    %p119 = pneg %p118
    // Predicated region
    $region9: #{closed_call.46} parent=5 // pred_check
      _
    $region10: #{closed_call.46} parent=5 // pred_check_branch
      %121 = sbr.rel (%p118) target = $region12
    $region11: #{closed_call.46} parent=5 // pred_region
      %s122 = ssub.s32 %s9, 1
      // Predicated region
      $region13: #{closed_call.46} parent=11 // pred_check
        %p123 = pneg %p82
      $region14: #{closed_call.46} parent=11 // pred_check_branch
        %125 = sbr.rel (%p123) target = $region16
      $region15: #{closed_call.46} parent=11 // pred_region
        _
      $region16: #{closed_call.46} parent=11 // pred_fallthru
        _
    $region12: #{closed_call.46} parent=5 // pred_fallthru
      _
    %p126 = scmp.lt.s32.totalorder %s9, 2
    // Predicated region
    $region17: #{closed_call.46} parent=5 // pred_check
      %p127 = pneg %p126
    $region18: #{closed_call.46} parent=5 // pred_check_branch
      %129 = sbr.rel (%p127) target = $region20
    $region19: #{closed_call.46} parent=5 // pred_region
      // Predicated region
      $region21: #{closed_call.46} parent=19 // pred_check
        %p130 = pneg %p29
      $region22: #{closed_call.46} parent=19 // pred_check_branch
        %132 = sbr.rel (%p130) target = $region24
      $region23: #{closed_call.46} parent=19 // pred_region
        %s133 = smul.u32 4, %s9
        %p134 = scmp.lt.s32.totalorder %s133, 7
        %s135 = scalar_select %p134, %s133, 7
        %s136 = smul.addr %s135, 4
        %s137 = scalar_lea.vmem %s0, %s136
        %s138 = smul.u32 4, %s9
      $region24: #{closed_call.46} parent=19 // pred_fallthru
        _
      // Predicated region
      $region25: #{closed_call.46} parent=19 // pred_check
        %p139 = pneg %p55
      $region26: #{closed_call.46} parent=19 // pred_check_branch
        %141 = sbr.rel (%p139) target = $region28
      $region27: #{closed_call.46} parent=19 // pred_region
        %s142 = smul.u32 4, %s9
        %p143 = scmp.lt.s32.totalorder %s142, 7
        %s144 = scalar_select %p143, %s142, 7
        %s145 = smul.addr %s144, 8
        %s146 = scalar_lea.vmem %s1, %s145
        %s147 = smul.u32 4, %s9
      $region28: #{closed_call.46} parent=19 // pred_fallthru
        _
    $region20: #{closed_call.46} parent=5 // pred_fallthru
      _
    %p148 = scmp.le.s32.totalorder 1, %s9
    %p149 = scmp.lt.s32.totalorder %s9, 3
    %p150 = pnand %p148, %p149
    %p151 = pneg %p150
    // Predicated region
    $region29: #{closed_call.46} parent=5 // pred_check
      _
    $region30: #{closed_call.46} parent=5 // pred_check_branch
      %153 = sbr.rel (%p150) target = $region32
    $region31: #{closed_call.46} parent=5 // pred_region
      %s154 = ssub.s32 %s9, 1
      %s155 = smul.u32 4, %s14
      %p156 = scmp.lt.s32.totalorder %s155, 7
      %s157 = scalar_select %p156, %s155, 7
      %s158 = smul.addr %s157, 4
      %s159 = scalar_lea.vmem %s0, %s158
      %p160 = pneg %p35
      %p161 = pneg %p32
      %s162 = smul.u32 4, %s14
      %p163 = scmp.lt.s32.totalorder %s162, 7
      %s164 = scalar_select %p163, %s162, 7
      %s165 = smul.addr %s164, 8
      %s166 = scalar_lea.vmem %s1, %s165
      %p167 = pneg %p61
      %p168 = pneg %p58
      %p169 = pneg %p82
      %p170 = pneg %p79
      %p171 = pneg %p108
      %p172 = pneg %p105
      %s173 = smul.u32 4, %s14
      %p174 = scmp.lt.s32.totalorder %s173, 7
      %s175 = scalar_select %p174, %s173, 7
      %s176 = smul.addr %s175, 4
      %s177 = scalar_lea.vmem %s3, %s176
      %s178 = smul.u32 4, %s14
      %p179 = scmp.lt.s32.totalorder %s178, 7
      %s180 = scalar_select %p179, %s178, 7
      %s181 = smul.addr %s180, 4
      %s182 = scalar_lea.vmem %s0, %s181
      %s183 = smul.u32 4, %s14
      %s184 = smul.u32 4, %s14
      %p185 = scmp.lt.s32.totalorder %s184, 7
      %s186 = scalar_select %p185, %s184, 7
      %s187 = smul.addr %s186, 8
      %s188 = scalar_lea.vmem %s1, %s187
      %s189 = smul.u32 4, %s14
      %s190 = smul.u32 4, %s14
      %p191 = scmp.lt.s32.totalorder %s190, 7
      %s192 = scalar_select %p191, %s190, 7
      %s193 = smul.addr %s192, 4
      %s194 = scalar_lea.vmem %s3, %s193
      %s195 = smul.u32 4, %s14
      %v197 = vld [vmem:[%s2] sm:$0x3f]
      %v198 = vpack.c.bf16 %v197, %v197
      %v199 = vld [vmem:[%s182] sm:$0x77]
      %v200 = vld [vmem:[%s182 + $0x8] sm:$0x77]
      %201 = vxpose.xlu0.c.b16.start [1/8] %v198, 128
      %202 = vxpose.xlu0.c.b16.cont [2/8] 0, 128
      %203 = vxpose.xlu0.c.b16.cont [3/8] 0, 128
      %204 = vxpose.xlu0.c.b16.cont [4/8] 0, 128
      %205 = vxpose.xlu0.c.b16.cont [5/8] 0, 128
      %206 = vxpose.xlu0.c.b16.cont [6/8] 0, 128
      %207 = vxpose.xlu0.c.b16.cont [7/8] 0, 128
      %208 = vxpose.xlu0.c.b16.end [8/8] 0, 128
      %v209 = vpop.trf.xlu0
      %v210 = vpop.trf.xlu0
      %v211 = vpop.trf.xlu0
      %v212 = vpop.trf.xlu0
      %v213 = vpop.trf.xlu0
      %v214 = vpop.trf.xlu0
      %v215 = vpop.trf.xlu0
      %v216 = vpop.trf.xlu0
      %v219 = vunpack.c.l.b16 %v199
      %v220 = vunpack.c.h.b16 %v199
      %v221 = vunpack.c.l.b16 %v200
      %v222 = vunpack.c.h.b16 %v200
      %v223 = vpack.c.b16 %v219, %v219
      %v224 = vpack.c.b16 %v220, %v220
      %v225 = vpack.c.b16 %v221, %v221
      %v226 = vpack.c.b16 %v222, %v222
      %vm227 = vcmask 48128
      %v229 = vsel %vm227, %v209, 0
      %vm231 = vcmask 1042432
      %v233 = vsel %vm231, %v223, 0
      %v236 = vsel %vm231, %v224, 0
      %v239 = vsel %vm231, %v225, 0
      %v242 = vsel %vm231, %v226, 0
      %244 = vmatpush.bf16.msra.mxu0 0
      %245 = vmatpush.bf16.msra.mxu0 0
      %246 = vmatpush.bf16.msra.mxu0 0
      %247 = vmatpush.bf16.msra.mxu0 0
      %248 = vmatpush.bf16.msra.mxu0 0
      %249 = vmatpush.bf16.msra.mxu0 0
      %250 = vmatpush.bf16.msra.mxu0 0
      %251 = vmatpush.bf16.msra.mxu0 %v233
      %252 = vmatmul.bf16.gmra.mxu0 %v229
      %v253 = vpop.f32.mrf.mxu0
      %v254 = vadd.f32 0.0, %v253
      %v255 = vpop.f32.mrf.mxu0
      %256 = vdwg.mxu0
      %257 = vmatpush.bf16.msra.mxu0 0
      %258 = vmatpush.bf16.msra.mxu0 0
      %259 = vmatpush.bf16.msra.mxu0 0
      %260 = vmatpush.bf16.msra.mxu0 0
      %261 = vmatpush.bf16.msra.mxu0 0
      %262 = vmatpush.bf16.msra.mxu0 0
      %263 = vmatpush.bf16.msra.mxu0 0
      %264 = vmatpush.bf16.msra.mxu0 %v236
      %265 = vmatmul.bf16.gmra.mxu0 %v229
      %v266 = vpop.f32.mrf.mxu0
      %v267 = vadd.f32 0.0, %v266
      %v268 = vpop.f32.mrf.mxu0
      %269 = vdwg.mxu0
      %270 = vmatpush.bf16.msra.mxu0 0
      %271 = vmatpush.bf16.msra.mxu0 0
      %272 = vmatpush.bf16.msra.mxu0 0
      %273 = vmatpush.bf16.msra.mxu0 0
      %274 = vmatpush.bf16.msra.mxu0 0
      %275 = vmatpush.bf16.msra.mxu0 0
      %276 = vmatpush.bf16.msra.mxu0 0
      %277 = vmatpush.bf16.msra.mxu0 %v239
      %278 = vmatmul.bf16.gmra.mxu0 %v229
      %v279 = vpop.f32.mrf.mxu0
      %v280 = vadd.f32 0.0, %v279
      %v281 = vpop.f32.mrf.mxu0
      %282 = vdwg.mxu0
      %283 = vmatpush.bf16.msra.mxu0 0
      %284 = vmatpush.bf16.msra.mxu0 0
      %285 = vmatpush.bf16.msra.mxu0 0
      %286 = vmatpush.bf16.msra.mxu0 0
      %287 = vmatpush.bf16.msra.mxu0 0
      %288 = vmatpush.bf16.msra.mxu0 0
      %289 = vmatpush.bf16.msra.mxu0 0
      %290 = vmatpush.bf16.msra.mxu0 %v242
      %291 = vmatmul.bf16.gmra.mxu0 %v229
      %v292 = vpop.f32.mrf.mxu0
      %v293 = vadd.f32 0.0, %v292
      %v294 = vpop.f32.mrf.mxu0
      %295 = vdwg.mxu0
      %v296 = vld [vmem:[%s188] sm:$0xff]
      %v297 = vld [vmem:[%s188 + $0x8] sm:$0xff]
      %v298 = vld [vmem:[%s188 + $0x10] sm:$0xff]
      %v299 = vld [vmem:[%s188 + $0x18] sm:$0xff]
      %v300 = vsub.f32 %v296, %v254
      %v301 = vsub.f32 %v297, %v267
      %v302 = vsub.f32 %v298, %v280
      %v303 = vsub.f32 %v299, %v293
      %v304 = vpack.c.bf16 %v301, %v300
      %v305 = vpack.c.bf16 %v303, %v302
      %306 = vst [vmem:[%s194] sm:$0xff] %v304
      %307 = vst [vmem:[%s194 + $0x8] sm:$0xff] %v305
      %s308 = smul.u32 4, %s14
      %p309 = scmp.lt.s32.totalorder %s308, 7
      %s310 = scalar_select %p309, %s308, 7
      %s311 = smul.addr %s310, 4
      %s312 = scalar_lea.vmem %s3, %s311
      // Predicated region
      $region33: #{closed_call.46} parent=31 // pred_check
        %p313 = pneg %p105
      $region34: #{closed_call.46} parent=31 // pred_check_branch
        %315 = sbr.rel (%p313) target = $region36
      $region35: #{closed_call.46} parent=31 // pred_region
        %s316 = smul.u32 4, %s14
      $region36: #{closed_call.46} parent=31 // pred_fallthru
        _
    $region32: #{closed_call.46} parent=5 // pred_fallthru
      _
    %p317 = scmp.le.s32.totalorder 2, %s9
    // Predicated region
    $region37: #{closed_call.46} parent=5 // pred_check
      %p318 = pneg %p317
    $region38: #{closed_call.46} parent=5 // pred_check_branch
      %320 = sbr.rel (%p318) target = $region40
    $region39: #{closed_call.46} parent=5 // pred_region
      %s321 = ssub.s32 %s9, 2
      // Predicated region
      $region41: #{closed_call.46} parent=39 // pred_check
        %p322 = pneg %p111
      $region42: #{closed_call.46} parent=39 // pred_check_branch
        %324 = sbr.rel (%p322) target = $region44
      $region43: #{closed_call.46} parent=39 // pred_region
        %s325 = smul.u32 4, %s15
        %p326 = scmp.lt.s32.totalorder %s325, 7
        %s327 = scalar_select %p326, %s325, 7
        %s328 = smul.addr %s327, 4
        %s329 = scalar_lea.vmem %s3, %s328
      $region44: #{closed_call.46} parent=39 // pred_fallthru
        _
    $region40: #{closed_call.46} parent=5 // pred_fallthru
      _
  $region6: #{closed_call.46} parent=0 // loop_footer
    %s13 = sadd.s32 1, %s9
  $region7: #{closed_call.46} parent=0 // loop_footer_branch
    %8 = sbr.rel target = $region3
  $region8: #{closed_call.46} parent=0 // loop_exit
    _

</llo_original>
